<compile_context>
chip_gen: v7x
topology: tpu7x:2x2x1
jax: 0.10.0
libtpu: 0.0.40
codegen_flags: <defaults>
</compile_context>

<pallas_src>
import math
from functools import partial

import jax
import jax.numpy as jnp
from jax import lax
from jax.experimental import pallas as pl
from jax.experimental.pallas import tpu as pltpu

# ------------------------------- config (small) ------------------------------
B = 2                  # batch
HIDDEN = 24            # hidden_nums (divisible by heads=3)
FREEDOM = [4, 4, 4]    # freedom_degree -> S = 3 slots, F = 4 each, K = 12
NODE_NUMS = 8          # node_nums (M)
E = 16                 # number of edges
S = len(FREEDOM)
F = FREEDOM[0]
K = sum(FREEDOM)
HEADS = 3


# -----------------------------------------------------------------------------
# Single fused kernel: 2 inputs (row slab + weight slab), 1 packed output.
# -----------------------------------------------------------------------------
def _actor_kernel(rows_ref, w_ref, out_ref, *, batch, nodes, slots, freedom,
                  dim, heads):
    f32 = jnp.float32
    Bx, M, Sx, Fx, D = batch, nodes, slots, freedom, dim
    Kd = Sx * Fx
    hd = D // heads
    H = D                      # MMLP hidden width per slot
    SH = Sx * H
    SD = Sx * D
    R = M * Bx                 # rows, node-major: r = m*Bx + b

    # ---- unpack the lane-packed per-row slab (one VMEM load, static slices) --
    rows = rows_ref[...]
    o = 0
    x2 = rows[:, o:o + D]; o += D            # (R, D)   node-major inputs
    scat = rows[:, o:o + R]; o += R          # (R, R)   edge scatter_add matrix
    amask = rows[:, o:o + R]; o += R         # (R, R)   additive same-batch mask
    b1r = rows[:, o:o + SH]; o += SH         # per-row bias rows
    b2r = rows[:, o:o + SD]; o += SD
    bd1r = rows[:, o:o + SD]; o += SD
    bd2r = rows[:, o:o + Kd]; o += Kd
    std = rows[:, o:o + Kd]; o += Kd         # sqrt(VAR) rows
    logdet = rows[:, o:o + 1]; o += 1        # sum(log VAR) rows (R, 1)
    mask_d = rows[:, o:o + M * D]; o += M * D     # block-diag mask, width D
    mask_sd = rows[:, o:o + M * SD]; o += M * SD  # block-diag mask, width SD
    eps = rows[:, o:o + Kd]; o += Kd         # N(0,1) noise

    # ---- weight-slab row offsets (static, all multiples of 8) ----------------
    w1_o = 0
    w2_o = w1_o + M * D
    wd1_o = w2_o + M * SH
    wd2_o = wd1_o + M * SD
    wq_o = wd2_o + M * SD
    wk_o = wq_o + SD
    wv_o = wk_o + SD
    wo_o = wv_o + SD

    def block_rows(v, mask):
        # (R, W) -> (R, M*W) with row r's features placed at its node's block.
        return jnp.concatenate([v] * M, axis=-1) * mask

    # ---- stage 1: S per-freedom-degree per-node MLPs, ONE dot per layer ------
    h1 = jnp.dot(block_rows(x2, mask_d), w_ref[w1_o:w1_o + M * D, :],
                 preferred_element_type=f32) + b1r
    h1 = jnp.maximum(h1, 0.0)
    xs = jnp.dot(block_rows(h1, mask_sd), w_ref[w2_o:w2_o + M * SH, :],
                 preferred_element_type=f32) + b2r
    # xs[r=(m,b), s*D + d] == MMLP_s(x)[b, m, d]   (torch: stack(x_, dim=2))

    # ---- stage 2: scatter_add over edges (matrix precomputed in wrapper) -----
    agg = jnp.dot(scat, xs, preferred_element_type=f32)          # (R, S*D)

    # ---- stage 3: multi-head attention over nodes, per (batch, slot) ---------
    # Projections fused across (slot, head): slot-block-diagonal weights,
    # 1/sqrt(hd) folded into Wq at param-pack time.
    q_all = jnp.dot(agg, w_ref[wq_o:wq_o + SD, :], preferred_element_type=f32)
    k_all = jnp.dot(agg, w_ref[wk_o:wk_o + SD, :], preferred_element_type=f32)
    v_all = jnp.dot(agg, w_ref[wv_o:wv_o + SD, :], preferred_element_type=f32)
    ctx_parts = []
    for s in range(Sx):
        for h in range(heads):
            lo = s * D + h * hd
            q = q_all[:, lo:lo + hd]
            k = k_all[:, lo:lo + hd]
            v = v_all[:, lo:lo + hd]
            sc = lax.dot_general(q, k, (((1,), (1,)), ((), ())),
                                 preferred_element_type=f32)      # (R, R)
            sc = sc + amask                                        # same-batch mask
            sc = sc - jnp.max(sc, axis=-1, keepdims=True)
            p = jnp.exp(sc)
            p = p * pl.reciprocal(jnp.sum(p, axis=-1, keepdims=True), approx=True)
            ctx_parts.append(jnp.dot(p, v, preferred_element_type=f32))
    ctx_all = jnp.concatenate(ctx_parts, axis=-1)                  # (R, S*D)
    h_att = jnp.dot(ctx_all, w_ref[wo_o:wo_o + SD, :],
                    preferred_element_type=f32) + agg
    # TODO(synk): MMTs internals (norm / FFN / dropout) are not in the provided
    # snippet; modelled as multi-head self-attention over nodes + residual (eval).

    # ---- stage 4: decide_mu (per-node 2-layer MLP), ONE dot per layer --------
    d1 = jnp.dot(block_rows(h_att, mask_sd), w_ref[wd1_o:wd1_o + M * SD, :],
                 preferred_element_type=f32) + bd1r
    d1 = jnp.maximum(d1, 0.0)
    mu_full = jnp.dot(block_rows(d1, mask_sd), w_ref[wd2_o:wd2_o + M * SD, :],
                      preferred_element_type=f32)                  # (R, SD), first Kd valid
    mu = mu_full[:, :Kd] + bd2r
    mu = jnp.where(jnp.isnan(mu), 0.0, mu)                         # torch.where(isnan)

    # ---- stage 5: MultivariateNormal(mu, diag(VAR)) + slot activations -------
    log2pi = math.log(2.0 * math.pi)
    sample = mu + std * eps                                        # dist.sample()
    quad = jnp.sum(eps * eps, axis=-1, keepdims=True)              # (x-mu)^2/var == eps^2
    logp = -0.5 * (Kd * log2pi + quad) - 0.5 * logdet              # (R, 1)
    ent = 0.5 * Kd * (1.0 + log2pi) + 0.5 * logdet                 # (R, 1)

    # slot-wise activations on sample.view(B, M, S, F)
    t0 = jnp.tanh(sample[:, 0 * Fx:1 * Fx])                        # softmax(tanh(.))
    e0 = jnp.exp(t0)                                               # tanh bounded: no max-sub
    a0 = e0 * pl.reciprocal(jnp.sum(e0, axis=-1, keepdims=True), approx=True)
    a1 = jax.nn.sigmoid(sample[:, 1 * Fx:2 * Fx])
    a2 = jnp.tanh(sample[:, 2 * Fx:3 * Fx])

    # single packed store: [act(K) | logp(1) | ent(1)]
    out_ref[...] = jnp.concatenate([a0, a1, a2, logp, ent], axis=-1)   # (R, K+2)


# -----------------------------------------------------------------------------
# Wrapper: layout plumbing / precomputation in XLA, all compute in the kernel.
# -----------------------------------------------------------------------------
def actor_forward(packed, x, edge_index, sample_key):
    """x: (B, node_nums, hidden) -> (sample_action, log_probs, entropy)."""
    Bx, M, D = x.shape
    R = M * Bx
    x_rows = jnp.transpose(x, (1, 0, 2)).reshape(R, D)             # node-major rows

    # scatter_add matrix + same-batch additive attention mask (wrapper-side)
    dst = edge_index[0].astype(jnp.int32)
    src = edge_index[1].astype(jnp.int32)
    node_of_row = jnp.arange(R, dtype=jnp.int32) // Bx
    batch_of_row = jnp.arange(R, dtype=jnp.int32) % Bx
    dst_oh = (node_of_row[:, None] == dst[None, :]).astype(jnp.float32)   # (R, E)
    src_oh = (node_of_row[:, None] == src[None, :]).astype(jnp.float32)   # (R, E)
    same_b = batch_of_row[:, None] == batch_of_row[None, :]               # (R, R)
    scat = (dst_oh @ src_oh.T) * same_b.astype(jnp.float32)
    amask = jnp.where(same_b, 0.0, -1e30).astype(jnp.float32)

    eps = jax.random.normal(sample_key, (R, K), jnp.float32)              # dist noise
    rows = jnp.concatenate([x_rows, scat, amask, packed["const_rows"], eps],
                           axis=-1)                                        # (R, 1077)

    vmem = pl.BlockSpec(memory_space=pltpu.MemorySpace.VMEM)
    kernel = partial(_actor_kernel, batch=Bx, nodes=M, slots=S, freedom=F,
                     dim=D, heads=HEADS)
    out = pl.pallas_call(
        kernel,
        out_shape=jax.ShapeDtypeStruct((R, K + 2), jnp.float32),
        in_specs=[vmem, vmem],
        out_specs=vmem,
    )(rows, packed["w_slab"])

    out3 = out.reshape(M, Bx, K + 2)
    act = jnp.transpose(out3[:, :, :K], (1, 0, 2)).reshape(Bx, M, S, F)
    logp = jnp.transpose(out3[:, :, K], (1, 0))
    ent = jnp.transpose(out3[:, :, K + 1], (1, 0))
    return act, logp, ent


# -----------------------------------------------------------------------------
# Deterministic synthetic parameters + pre-packing into the two kernel slabs.
# -----------------------------------------------------------------------------
def make_params(key):
    M, D, H = NODE_NUMS, HIDDEN, HIDDEN
    SH, SD = S * H, S * D
    keys = jax.random.split(key, 12)

    def nrm(k, shape, fan_in):
        return jax.random.normal(k, shape, jnp.float32) * (1.0 / math.sqrt(fan_in))

    # S per-slot per-node MMLPs fused per node: layer-1 slot-concat,
    # layer-2 slot-block-diagonal
    W1 = nrm(keys[0], (M, D, SH), D)
    b1 = nrm(keys[1], (M, SH), SH) * 0.1
    W2 = jnp.zeros((M, SH, SD), jnp.float32)
    w2_slots = nrm(keys[2], (S, M, H, D), H)
    for s in range(S):
        W2 = W2.at[:, s * H:(s + 1) * H, s * D:(s + 1) * D].set(w2_slots[s])
    b2 = nrm(keys[3], (M, SD), SD) * 0.1

    # MMTs attention weights; head h lives in columns/rows [h*hd:(h+1)*hd]
    Wq = nrm(keys[4], (D, D), D)
    Wk = nrm(keys[5], (D, D), D)
    Wv = nrm(keys[6], (D, D), D)
    Wo = nrm(keys[7], (D, D), D)

    # decide_mu: per-node MLP (S*D -> S*D -> K)
    Wd1 = nrm(keys[8], (M, SD, SD), SD)
    bd1 = nrm(keys[9], (M, SD), SD) * 0.1
    Wd2 = nrm(keys[10], (M, SD, K), SD)
    bd2 = nrm(keys[11], (M, K), K) * 0.1

    VAR = jnp.ones((M, K), jnp.float32) * 0.5                      # self.VAR
    return dict(W1=W1, b1=b1, W2=W2, b2=b2, Wq=Wq, Wk=Wk, Wv=Wv, Wo=Wo,
                Wd1=Wd1, bd1=bd1, Wd2=Wd2, bd2=bd2, VAR=VAR)


def pack_params(params, batch):
    """Pre-pack weights (block-diag on the contraction dim) and per-row
    constants into the two lane-dense slabs consumed by the fused kernel."""
    M, D, H = NODE_NUMS, HIDDEN, HIDDEN
    SH, SD = S * H, S * D
    hd = D // HEADS
    assert SH == SD, "shared 72-lane weight slab assumes S*H == S*D"
    R = M * batch

    # per-node weights stacked along the contraction dim
    W1_bd = params["W1"].reshape(M * D, SH)                        # (192, 72)
    W2_bd = params["W2"].reshape(M * SH, SD)                       # (576, 72)
    Wd1_bd = params["Wd1"].reshape(M * SD, SD)                     # (576, 72)
    Wd2_bd = jnp.pad(params["Wd2"].reshape(M * SD, K),
                     ((0, 0), (0, SD - K)))                        # (576, 72)

    def slot_blockdiag(w):                                         # (D,D)->(SD,SD)
        out = jnp.zeros((SD, SD), jnp.float32)
        for s in range(S):
            out = out.at[s * D:(s + 1) * D, s * D:(s + 1) * D].set(w)
        return out

    scale = 1.0 / math.sqrt(hd)
    Wq_bd = slot_blockdiag(params["Wq"] * scale)                   # fold 1/sqrt(hd)
    Wk_bd = slot_blockdiag(params["Wk"])
    Wv_bd = slot_blockdiag(params["Wv"])
    Wo_bd = slot_blockdiag(params["Wo"])

    w_slab = jnp.concatenate(
        [W1_bd, W2_bd, Wd1_bd, Wd2_bd, Wq_bd, Wk_bd, Wv_bd, Wo_bd], axis=0)

    # per-row constants (node-major rows r = m*B + b)
    rep = lambda a: jnp.repeat(a, batch, axis=0)
    std_rows = rep(jnp.sqrt(params["VAR"]))
    logdet_rows = rep(jnp.sum(jnp.log(params["VAR"]), axis=-1, keepdims=True))

    # block-diagonal expansion masks (static layout constants)
    row_node = jnp.arange(R) // batch
    lane_node_d = jnp.arange(M * D) // D
    lane_node_sd = jnp.arange(M * SD) // SD
    mask_d = (row_node[:, None] == lane_node_d[None, :]).astype(jnp.float32)
    mask_sd = (row_node[:, None] == lane_node_sd[None, :]).astype(jnp.float32)

    const_rows = jnp.concatenate(
        [rep(params["b1"]), rep(params["b2"]), rep(params["bd1"]),
         rep(params["bd2"]), std_rows, logdet_rows, mask_d, mask_sd], axis=-1)
    return dict(w_slab=w_slab, const_rows=const_rows)


# -----------------------------------------------------------------------------
if __name__ == "__main__":
    root = jax.random.PRNGKey(0)
    k_param, k_x, k_edge, k_sample = jax.random.split(root, 4)

    params = make_params(k_param)
    packed = pack_params(params, B)
    x = jax.random.normal(k_x, (B, NODE_NUMS, HIDDEN), jnp.float32)
    edge_index = jax.random.randint(k_edge, (2, E), 0, NODE_NUMS, dtype=jnp.int32)

    fwd = jax.jit(actor_forward)
    sample_action, action_logprobs, action_entropy = fwd(packed, x, edge_index, k_sample)
    jax.block_until_ready((sample_action, action_logprobs, action_entropy))

    assert sample_action.shape == (B, NODE_NUMS, S, F)
    assert action_logprobs.shape == (B, NODE_NUMS)
    assert action_entropy.shape == (B, NODE_NUMS)
    print("KERNEL_OK")
</pallas_src>

<mosaic_0001>
module attributes {stable_mosaic.version = 11 : i64} {
  func.func @_actor_kernel(%arg0: memref<16x1077xf32, #tpu.memory_space<vmem>>, %arg1: memref<2208x72xf32, #tpu.memory_space<vmem>>, %arg2: memref<16x14xf32, #tpu.memory_space<vmem>>) attributes {dimension_semantics = [], scalar_prefetch = 0 : i64, scratch_operands = 0 : i64, tpu.core_type = #tpu.core_type<tc>} {
    %c0 = arith.constant 0 : index
    %c0_0 = arith.constant 0 : index
    %0 = vector.load %arg0[%c0, %c0_0] : memref<16x1077xf32, #tpu.memory_space<vmem>>, vector<16x1077xf32>
    %1 = vector.extract_strided_slice %0 {offsets = [0, 0], sizes = [16, 24], strides = [1, 1]} : vector<16x1077xf32> to vector<16x24xf32>
    %2 = vector.extract_strided_slice %0 {offsets = [0, 24], sizes = [16, 16], strides = [1, 1]} : vector<16x1077xf32> to vector<16x16xf32>
    %3 = vector.extract_strided_slice %0 {offsets = [0, 40], sizes = [16, 16], strides = [1, 1]} : vector<16x1077xf32> to vector<16x16xf32>
    %4 = vector.extract_strided_slice %0 {offsets = [0, 56], sizes = [16, 72], strides = [1, 1]} : vector<16x1077xf32> to vector<16x72xf32>
    %5 = vector.extract_strided_slice %0 {offsets = [0, 128], sizes = [16, 72], strides = [1, 1]} : vector<16x1077xf32> to vector<16x72xf32>
    %6 = vector.extract_strided_slice %0 {offsets = [0, 200], sizes = [16, 72], strides = [1, 1]} : vector<16x1077xf32> to vector<16x72xf32>
    %7 = vector.extract_strided_slice %0 {offsets = [0, 272], sizes = [16, 12], strides = [1, 1]} : vector<16x1077xf32> to vector<16x12xf32>
    %8 = vector.extract_strided_slice %0 {offsets = [0, 284], sizes = [16, 12], strides = [1, 1]} : vector<16x1077xf32> to vector<16x12xf32>
    %9 = vector.extract_strided_slice %0 {offsets = [0, 296], sizes = [16, 1], strides = [1, 1]} : vector<16x1077xf32> to vector<16x1xf32>
    %10 = vector.extract_strided_slice %0 {offsets = [0, 297], sizes = [16, 192], strides = [1, 1]} : vector<16x1077xf32> to vector<16x192xf32>
    %11 = vector.extract_strided_slice %0 {offsets = [0, 489], sizes = [16, 576], strides = [1, 1]} : vector<16x1077xf32> to vector<16x576xf32>
    %12 = vector.extract_strided_slice %0 {offsets = [0, 1065], sizes = [16, 12], strides = [1, 1]} : vector<16x1077xf32> to vector<16x12xf32>
    %13 = tpu.concatenate %1, %1, %1, %1, %1, %1, %1, %1 in 1 : vector<16x24xf32>, vector<16x24xf32>, vector<16x24xf32>, vector<16x24xf32>, vector<16x24xf32>, vector<16x24xf32>, vector<16x24xf32>, vector<16x24xf32> -> vector<16x192xf32>
    %14 = arith.mulf %13, %10 : vector<16x192xf32>
    %c0_1 = arith.constant 0 : index
    %c0_2 = arith.constant 0 : index
    %15 = vector.load %arg1[%c0_1, %c0_2] : memref<2208x72xf32, #tpu.memory_space<vmem>>, vector<192x72xf32>
    %cst = arith.constant dense<0.000000e+00> : vector<16x72xf32>
    %16 = tpu.matmul %14, %15, %cst {dimension_numbers = #tpu.dot_dimension_numbers<[1], [0], [0], [1], [0, 0, 1, 1], [], []>} : vector<16x192xf32>, vector<192x72xf32>, vector<16x72xf32> -> vector<16x72xf32>
    %17 = arith.addf %16, %4 : vector<16x72xf32>
    %cst_3 = arith.constant 0.000000e+00 : f32
    %18 = vector.broadcast %cst_3 : f32 to vector<16x72xf32>
    %19 = arith.maximumf %17, %18 : vector<16x72xf32>
    %20 = tpu.concatenate %19, %19, %19, %19, %19, %19, %19, %19 in 1 : vector<16x72xf32>, vector<16x72xf32>, vector<16x72xf32>, vector<16x72xf32>, vector<16x72xf32>, vector<16x72xf32>, vector<16x72xf32>, vector<16x72xf32> -> vector<16x576xf32>
    %21 = arith.mulf %20, %11 : vector<16x576xf32>
    %c192 = arith.constant 192 : index
    %c0_4 = arith.constant 0 : index
    %22 = vector.load %arg1[%c192, %c0_4] : memref<2208x72xf32, #tpu.memory_space<vmem>>, vector<576x72xf32>
    %cst_5 = arith.constant dense<0.000000e+00> : vector<16x72xf32>
    %23 = tpu.matmul %21, %22, %cst_5 {dimension_numbers = #tpu.dot_dimension_numbers<[1], [0], [0], [1], [0, 0, 1, 1], [], []>} : vector<16x576xf32>, vector<576x72xf32>, vector<16x72xf32> -> vector<16x72xf32>
    %24 = arith.addf %23, %5 : vector<16x72xf32>
    %cst_6 = arith.constant dense<0.000000e+00> : vector<16x72xf32>
    %25 = tpu.matmul %2, %24, %cst_6 {dimension_numbers = #tpu.dot_dimension_numbers<[1], [0], [0], [1], [0, 0, 1, 1], [], []>} : vector<16x16xf32>, vector<16x72xf32>, vector<16x72xf32> -> vector<16x72xf32>
    %c1920 = arith.constant 1920 : index
    %c0_7 = arith.constant 0 : index
    %26 = vector.load %arg1[%c1920, %c0_7] : memref<2208x72xf32, #tpu.memory_space<vmem>>, vector<72x72xf32>
    %cst_8 = arith.constant dense<0.000000e+00> : vector<16x72xf32>
    %27 = tpu.matmul %25, %26, %cst_8 {dimension_numbers = #tpu.dot_dimension_numbers<[1], [0], [0], [1], [0, 0, 1, 1], [], []>} : vector<16x72xf32>, vector<72x72xf32>, vector<16x72xf32> -> vector<16x72xf32>
    %c1992 = arith.constant 1992 : index
    %c0_9 = arith.constant 0 : index
    %28 = vector.load %arg1[%c1992, %c0_9] : memref<2208x72xf32, #tpu.memory_space<vmem>>, vector<72x72xf32>
    %cst_10 = arith.constant dense<0.000000e+00> : vector<16x72xf32>
    %29 = tpu.matmul %25, %28, %cst_10 {dimension_numbers = #tpu.dot_dimension_numbers<[1], [0], [0], [1], [0, 0, 1, 1], [], []>} : vector<16x72xf32>, vector<72x72xf32>, vector<16x72xf32> -> vector<16x72xf32>
    %c2064 = arith.constant 2064 : index
    %c0_11 = arith.constant 0 : index
    %30 = vector.load %arg1[%c2064, %c0_11] : memref<2208x72xf32, #tpu.memory_space<vmem>>, vector<72x72xf32>
    %cst_12 = arith.constant dense<0.000000e+00> : vector<16x72xf32>
    %31 = tpu.matmul %25, %30, %cst_12 {dimension_numbers = #tpu.dot_dimension_numbers<[1], [0], [0], [1], [0, 0, 1, 1], [], []>} : vector<16x72xf32>, vector<72x72xf32>, vector<16x72xf32> -> vector<16x72xf32>
    %32 = vector.extract_strided_slice %27 {offsets = [0, 0], sizes = [16, 8], strides = [1, 1]} : vector<16x72xf32> to vector<16x8xf32>
    %33 = vector.extract_strided_slice %29 {offsets = [0, 0], sizes = [16, 8], strides = [1, 1]} : vector<16x72xf32> to vector<16x8xf32>
    %34 = vector.extract_strided_slice %31 {offsets = [0, 0], sizes = [16, 8], strides = [1, 1]} : vector<16x72xf32> to vector<16x8xf32>
    %cst_13 = arith.constant dense<0.000000e+00> : vector<16x16xf32>
    %35 = tpu.matmul %32, %33, %cst_13 {dimension_numbers = #tpu.dot_dimension_numbers<[1], [1], [0], [0], [0, 0, 1, 0], [], []>} : vector<16x8xf32>, vector<16x8xf32>, vector<16x16xf32> -> vector<16x16xf32>
    %36 = arith.addf %35, %3 : vector<16x16xf32>
    %cst_14 = arith.constant dense<0xFF800000> : vector<16xf32>
    %37 = vector.multi_reduction <maximumf>, %36, %cst_14 [1] : vector<16x16xf32> to vector<16xf32>
    %38 = vector.shape_cast %37 : vector<16xf32> to vector<16x1xf32>
    %39 = vector.broadcast %38 : vector<16x1xf32> to vector<16x16xf32>
    %40 = arith.subf %36, %39 : vector<16x16xf32>
    %41 = math.exp %40 : vector<16x16xf32>
    %cst_15 = arith.constant dense<0.000000e+00> : vector<16xf32>
    %42 = vector.multi_reduction <add>, %41, %cst_15 [1] : vector<16x16xf32> to vector<16xf32>
    %43 = vector.shape_cast %42 : vector<16xf32> to vector<16x1xf32>
    %44 = tpu.reciprocal %43 {approx = true} : vector<16x1xf32> -> vector<16x1xf32>
    %45 = vector.broadcast %44 : vector<16x1xf32> to vector<16x16xf32>
    %46 = arith.mulf %41, %45 : vector<16x16xf32>
    %cst_16 = arith.constant dense<0.000000e+00> : vector<16x8xf32>
    %47 = tpu.matmul %46, %34, %cst_16 {dimension_numbers = #tpu.dot_dimension_numbers<[1], [0], [0], [1], [0, 0, 1, 1], [], []>} : vector<16x16xf32>, vector<16x8xf32>, vector<16x8xf32> -> vector<16x8xf32>
    %48 = vector.extract_strided_slice %27 {offsets = [0, 8], sizes = [16, 8], strides = [1, 1]} : vector<16x72xf32> to vector<16x8xf32>
    %49 = vector.extract_strided_slice %29 {offsets = [0, 8], sizes = [16, 8], strides = [1, 1]} : vector<16x72xf32> to vector<16x8xf32>
    %50 = vector.extract_strided_slice %31 {offsets = [0, 8], sizes = [16, 8], strides = [1, 1]} : vector<16x72xf32> to vector<16x8xf32>
    %cst_17 = arith.constant dense<0.000000e+00> : vector<16x16xf32>
    %51 = tpu.matmul %48, %49, %cst_17 {dimension_numbers = #tpu.dot_dimension_numbers<[1], [1], [0], [0], [0, 0, 1, 0], [], []>} : vector<16x8xf32>, vector<16x8xf32>, vector<16x16xf32> -> vector<16x16xf32>
    %52 = arith.addf %51, %3 : vector<16x16xf32>
    %cst_18 = arith.constant dense<0xFF800000> : vector<16xf32>
    %53 = vector.multi_reduction <maximumf>, %52, %cst_18 [1] : vector<16x16xf32> to vector<16xf32>
    %54 = vector.shape_cast %53 : vector<16xf32> to vector<16x1xf32>
    %55 = vector.broadcast %54 : vector<16x1xf32> to vector<16x16xf32>
    %56 = arith.subf %52, %55 : vector<16x16xf32>
    %57 = math.exp %56 : vector<16x16xf32>
    %cst_19 = arith.constant dense<0.000000e+00> : vector<16xf32>
    %58 = vector.multi_reduction <add>, %57, %cst_19 [1] : vector<16x16xf32> to vector<16xf32>
    %59 = vector.shape_cast %58 : vector<16xf32> to vector<16x1xf32>
    %60 = tpu.reciprocal %59 {approx = true} : vector<16x1xf32> -> vector<16x1xf32>
    %61 = vector.broadcast %60 : vector<16x1xf32> to vector<16x16xf32>
    %62 = arith.mulf %57, %61 : vector<16x16xf32>
    %cst_20 = arith.constant dense<0.000000e+00> : vector<16x8xf32>
    %63 = tpu.matmul %62, %50, %cst_20 {dimension_numbers = #tpu.dot_dimension_numbers<[1], [0], [0], [1], [0, 0, 1, 1], [], []>} : vector<16x16xf32>, vector<16x8xf32>, vector<16x8xf32> -> vector<16x8xf32>
    %64 = vector.extract_strided_slice %27 {offsets = [0, 16], sizes = [16, 8], strides = [1, 1]} : vector<16x72xf32> to vector<16x8xf32>
    %65 = vector.extract_strided_slice %29 {offsets = [0, 16], sizes = [16, 8], strides = [1, 1]} : vector<16x72xf32> to vector<16x8xf32>
    %66 = vector.extract_strided_slice %31 {offsets = [0, 16], sizes = [16, 8], strides = [1, 1]} : vector<16x72xf32> to vector<16x8xf32>
    %cst_21 = arith.constant dense<0.000000e+00> : vector<16x16xf32>
    %67 = tpu.matmul %64, %65, %cst_21 {dimension_numbers = #tpu.dot_dimension_numbers<[1], [1], [0], [0], [0, 0, 1, 0], [], []>} : vector<16x8xf32>, vector<16x8xf32>, vector<16x16xf32> -> vector<16x16xf32>
    %68 = arith.addf %67, %3 : vector<16x16xf32>
    %cst_22 = arith.constant dense<0xFF800000> : vector<16xf32>
    %69 = vector.multi_reduction <maximumf>, %68, %cst_22 [1] : vector<16x16xf32> to vector<16xf32>
    %70 = vector.shape_cast %69 : vector<16xf32> to vector<16x1xf32>
    %71 = vector.broadcast %70 : vector<16x1xf32> to vector<16x16xf32>
    %72 = arith.subf %68, %71 : vector<16x16xf32>
    %73 = math.exp %72 : vector<16x16xf32>
    %cst_23 = arith.constant dense<0.000000e+00> : vector<16xf32>
    %74 = vector.multi_reduction <add>, %73, %cst_23 [1] : vector<16x16xf32> to vector<16xf32>
    %75 = vector.shape_cast %74 : vector<16xf32> to vector<16x1xf32>
    %76 = tpu.reciprocal %75 {approx = true} : vector<16x1xf32> -> vector<16x1xf32>
    %77 = vector.broadcast %76 : vector<16x1xf32> to vector<16x16xf32>
    %78 = arith.mulf %73, %77 : vector<16x16xf32>
    %cst_24 = arith.constant dense<0.000000e+00> : vector<16x8xf32>
    %79 = tpu.matmul %78, %66, %cst_24 {dimension_numbers = #tpu.dot_dimension_numbers<[1], [0], [0], [1], [0, 0, 1, 1], [], []>} : vector<16x16xf32>, vector<16x8xf32>, vector<16x8xf32> -> vector<16x8xf32>
    %80 = vector.extract_strided_slice %27 {offsets = [0, 24], sizes = [16, 8], strides = [1, 1]} : vector<16x72xf32> to vector<16x8xf32>
    %81 = vector.extract_strided_slice %29 {offsets = [0, 24], sizes = [16, 8], strides = [1, 1]} : vector<16x72xf32> to vector<16x8xf32>
    %82 = vector.extract_strided_slice %31 {offsets = [0, 24], sizes = [16, 8], strides = [1, 1]} : vector<16x72xf32> to vector<16x8xf32>
    %cst_25 = arith.constant dense<0.000000e+00> : vector<16x16xf32>
    %83 = tpu.matmul %80, %81, %cst_25 {dimension_numbers = #tpu.dot_dimension_numbers<[1], [1], [0], [0], [0, 0, 1, 0], [], []>} : vector<16x8xf32>, vector<16x8xf32>, vector<16x16xf32> -> vector<16x16xf32>
    %84 = arith.addf %83, %3 : vector<16x16xf32>
    %cst_26 = arith.constant dense<0xFF800000> : vector<16xf32>
    %85 = vector.multi_reduction <maximumf>, %84, %cst_26 [1] : vector<16x16xf32> to vector<16xf32>
    %86 = vector.shape_cast %85 : vector<16xf32> to vector<16x1xf32>
    %87 = vector.broadcast %86 : vector<16x1xf32> to vector<16x16xf32>
    %88 = arith.subf %84, %87 : vector<16x16xf32>
    %89 = math.exp %88 : vector<16x16xf32>
    %cst_27 = arith.constant dense<0.000000e+00> : vector<16xf32>
    %90 = vector.multi_reduction <add>, %89, %cst_27 [1] : vector<16x16xf32> to vector<16xf32>
    %91 = vector.shape_cast %90 : vector<16xf32> to vector<16x1xf32>
    %92 = tpu.reciprocal %91 {approx = true} : vector<16x1xf32> -> vector<16x1xf32>
    %93 = vector.broadcast %92 : vector<16x1xf32> to vector<16x16xf32>
    %94 = arith.mulf %89, %93 : vector<16x16xf32>
    %cst_28 = arith.constant dense<0.000000e+00> : vector<16x8xf32>
    %95 = tpu.matmul %94, %82, %cst_28 {dimension_numbers = #tpu.dot_dimension_numbers<[1], [0], [0], [1], [0, 0, 1, 1], [], []>} : vector<16x16xf32>, vector<16x8xf32>, vector<16x8xf32> -> vector<16x8xf32>
    %96 = vector.extract_strided_slice %27 {offsets = [0, 32], sizes = [16, 8], strides = [1, 1]} : vector<16x72xf32> to vector<16x8xf32>
    %97 = vector.extract_strided_slice %29 {offsets = [0, 32], sizes = [16, 8], strides = [1, 1]} : vector<16x72xf32> to vector<16x8xf32>
    %98 = vector.extract_strided_slice %31 {offsets = [0, 32], sizes = [16, 8], strides = [1, 1]} : vector<16x72xf32> to vector<16x8xf32>
    %cst_29 = arith.constant dense<0.000000e+00> : vector<16x16xf32>
    %99 = tpu.matmul %96, %97, %cst_29 {dimension_numbers = #tpu.dot_dimension_numbers<[1], [1], [0], [0], [0, 0, 1, 0], [], []>} : vector<16x8xf32>, vector<16x8xf32>, vector<16x16xf32> -> vector<16x16xf32>
    %100 = arith.addf %99, %3 : vector<16x16xf32>
    %cst_30 = arith.constant dense<0xFF800000> : vector<16xf32>
    %101 = vector.multi_reduction <maximumf>, %100, %cst_30 [1] : vector<16x16xf32> to vector<16xf32>
    %102 = vector.shape_cast %101 : vector<16xf32> to vector<16x1xf32>
    %103 = vector.broadcast %102 : vector<16x1xf32> to vector<16x16xf32>
    %104 = arith.subf %100, %103 : vector<16x16xf32>
    %105 = math.exp %104 : vector<16x16xf32>
    %cst_31 = arith.constant dense<0.000000e+00> : vector<16xf32>
    %106 = vector.multi_reduction <add>, %105, %cst_31 [1] : vector<16x16xf32> to vector<16xf32>
    %107 = vector.shape_cast %106 : vector<16xf32> to vector<16x1xf32>
    %108 = tpu.reciprocal %107 {approx = true} : vector<16x1xf32> -> vector<16x1xf32>
    %109 = vector.broadcast %108 : vector<16x1xf32> to vector<16x16xf32>
    %110 = arith.mulf %105, %109 : vector<16x16xf32>
    %cst_32 = arith.constant dense<0.000000e+00> : vector<16x8xf32>
    %111 = tpu.matmul %110, %98, %cst_32 {dimension_numbers = #tpu.dot_dimension_numbers<[1], [0], [0], [1], [0, 0, 1, 1], [], []>} : vector<16x16xf32>, vector<16x8xf32>, vector<16x8xf32> -> vector<16x8xf32>
    %112 = vector.extract_strided_slice %27 {offsets = [0, 40], sizes = [16, 8], strides = [1, 1]} : vector<16x72xf32> to vector<16x8xf32>
    %113 = vector.extract_strided_slice %29 {offsets = [0, 40], sizes = [16, 8], strides = [1, 1]} : vector<16x72xf32> to vector<16x8xf32>
    %114 = vector.extract_strided_slice %31 {offsets = [0, 40], sizes = [16, 8], strides = [1, 1]} : vector<16x72xf32> to vector<16x8xf32>
    %cst_33 = arith.constant dense<0.000000e+00> : vector<16x16xf32>
    %115 = tpu.matmul %112, %113, %cst_33 {dimension_numbers = #tpu.dot_dimension_numbers<[1], [1], [0], [0], [0, 0, 1, 0], [], []>} : vector<16x8xf32>, vector<16x8xf32>, vector<16x16xf32> -> vector<16x16xf32>
    %116 = arith.addf %115, %3 : vector<16x16xf32>
    %cst_34 = arith.constant dense<0xFF800000> : vector<16xf32>
    %117 = vector.multi_reduction <maximumf>, %116, %cst_34 [1] : vector<16x16xf32> to vector<16xf32>
    %118 = vector.shape_cast %117 : vector<16xf32> to vector<16x1xf32>
    %119 = vector.broadcast %118 : vector<16x1xf32> to vector<16x16xf32>
    %120 = arith.subf %116, %119 : vector<16x16xf32>
    %121 = math.exp %120 : vector<16x16xf32>
    %cst_35 = arith.constant dense<0.000000e+00> : vector<16xf32>
    %122 = vector.multi_reduction <add>, %121, %cst_35 [1] : vector<16x16xf32> to vector<16xf32>
    %123 = vector.shape_cast %122 : vector<16xf32> to vector<16x1xf32>
    %124 = tpu.reciprocal %123 {approx = true} : vector<16x1xf32> -> vector<16x1xf32>
    %125 = vector.broadcast %124 : vector<16x1xf32> to vector<16x16xf32>
    %126 = arith.mulf %121, %125 : vector<16x16xf32>
    %cst_36 = arith.constant dense<0.000000e+00> : vector<16x8xf32>
    %127 = tpu.matmul %126, %114, %cst_36 {dimension_numbers = #tpu.dot_dimension_numbers<[1], [0], [0], [1], [0, 0, 1, 1], [], []>} : vector<16x16xf32>, vector<16x8xf32>, vector<16x8xf32> -> vector<16x8xf32>
    %128 = vector.extract_strided_slice %27 {offsets = [0, 48], sizes = [16, 8], strides = [1, 1]} : vector<16x72xf32> to vector<16x8xf32>
    %129 = vector.extract_strided_slice %29 {offsets = [0, 48], sizes = [16, 8], strides = [1, 1]} : vector<16x72xf32> to vector<16x8xf32>
    %130 = vector.extract_strided_slice %31 {offsets = [0, 48], sizes = [16, 8], strides = [1, 1]} : vector<16x72xf32> to vector<16x8xf32>
    %cst_37 = arith.constant dense<0.000000e+00> : vector<16x16xf32>
    %131 = tpu.matmul %128, %129, %cst_37 {dimension_numbers = #tpu.dot_dimension_numbers<[1], [1], [0], [0], [0, 0, 1, 0], [], []>} : vector<16x8xf32>, vector<16x8xf32>, vector<16x16xf32> -> vector<16x16xf32>
    %132 = arith.addf %131, %3 : vector<16x16xf32>
    %cst_38 = arith.constant dense<0xFF800000> : vector<16xf32>
    %133 = vector.multi_reduction <maximumf>, %132, %cst_38 [1] : vector<16x16xf32> to vector<16xf32>
    %134 = vector.shape_cast %133 : vector<16xf32> to vector<16x1xf32>
    %135 = vector.broadcast %134 : vector<16x1xf32> to vector<16x16xf32>
    %136 = arith.subf %132, %135 : vector<16x16xf32>
    %137 = math.exp %136 : vector<16x16xf32>
    %cst_39 = arith.constant dense<0.000000e+00> : vector<16xf32>
    %138 = vector.multi_reduction <add>, %137, %cst_39 [1] : vector<16x16xf32> to vector<16xf32>
    %139 = vector.shape_cast %138 : vector<16xf32> to vector<16x1xf32>
    %140 = tpu.reciprocal %139 {approx = true} : vector<16x1xf32> -> vector<16x1xf32>
    %141 = vector.broadcast %140 : vector<16x1xf32> to vector<16x16xf32>
    %142 = arith.mulf %137, %141 : vector<16x16xf32>
    %cst_40 = arith.constant dense<0.000000e+00> : vector<16x8xf32>
    %143 = tpu.matmul %142, %130, %cst_40 {dimension_numbers = #tpu.dot_dimension_numbers<[1], [0], [0], [1], [0, 0, 1, 1], [], []>} : vector<16x16xf32>, vector<16x8xf32>, vector<16x8xf32> -> vector<16x8xf32>
    %144 = vector.extract_strided_slice %27 {offsets = [0, 56], sizes = [16, 8], strides = [1, 1]} : vector<16x72xf32> to vector<16x8xf32>
    %145 = vector.extract_strided_slice %29 {offsets = [0, 56], sizes = [16, 8], strides = [1, 1]} : vector<16x72xf32> to vector<16x8xf32>
    %146 = vector.extract_strided_slice %31 {offsets = [0, 56], sizes = [16, 8], strides = [1, 1]} : vector<16x72xf32> to vector<16x8xf32>
    %cst_41 = arith.constant dense<0.000000e+00> : vector<16x16xf32>
    %147 = tpu.matmul %144, %145, %cst_41 {dimension_numbers = #tpu.dot_dimension_numbers<[1], [1], [0], [0], [0, 0, 1, 0], [], []>} : vector<16x8xf32>, vector<16x8xf32>, vector<16x16xf32> -> vector<16x16xf32>
    %148 = arith.addf %147, %3 : vector<16x16xf32>
    %cst_42 = arith.constant dense<0xFF800000> : vector<16xf32>
    %149 = vector.multi_reduction <maximumf>, %148, %cst_42 [1] : vector<16x16xf32> to vector<16xf32>
    %150 = vector.shape_cast %149 : vector<16xf32> to vector<16x1xf32>
    %151 = vector.broadcast %150 : vector<16x1xf32> to vector<16x16xf32>
    %152 = arith.subf %148, %151 : vector<16x16xf32>
    %153 = math.exp %152 : vector<16x16xf32>
    %cst_43 = arith.constant dense<0.000000e+00> : vector<16xf32>
    %154 = vector.multi_reduction <add>, %153, %cst_43 [1] : vector<16x16xf32> to vector<16xf32>
    %155 = vector.shape_cast %154 : vector<16xf32> to vector<16x1xf32>
    %156 = tpu.reciprocal %155 {approx = true} : vector<16x1xf32> -> vector<16x1xf32>
    %157 = vector.broadcast %156 : vector<16x1xf32> to vector<16x16xf32>
    %158 = arith.mulf %153, %157 : vector<16x16xf32>
    %cst_44 = arith.constant dense<0.000000e+00> : vector<16x8xf32>
    %159 = tpu.matmul %158, %146, %cst_44 {dimension_numbers = #tpu.dot_dimension_numbers<[1], [0], [0], [1], [0, 0, 1, 1], [], []>} : vector<16x16xf32>, vector<16x8xf32>, vector<16x8xf32> -> vector<16x8xf32>
    %160 = vector.extract_strided_slice %27 {offsets = [0, 64], sizes = [16, 8], strides = [1, 1]} : vector<16x72xf32> to vector<16x8xf32>
    %161 = vector.extract_strided_slice %29 {offsets = [0, 64], sizes = [16, 8], strides = [1, 1]} : vector<16x72xf32> to vector<16x8xf32>
    %162 = vector.extract_strided_slice %31 {offsets = [0, 64], sizes = [16, 8], strides = [1, 1]} : vector<16x72xf32> to vector<16x8xf32>
    %cst_45 = arith.constant dense<0.000000e+00> : vector<16x16xf32>
    %163 = tpu.matmul %160, %161, %cst_45 {dimension_numbers = #tpu.dot_dimension_numbers<[1], [1], [0], [0], [0, 0, 1, 0], [], []>} : vector<16x8xf32>, vector<16x8xf32>, vector<16x16xf32> -> vector<16x16xf32>
    %164 = arith.addf %163, %3 : vector<16x16xf32>
    %cst_46 = arith.constant dense<0xFF800000> : vector<16xf32>
    %165 = vector.multi_reduction <maximumf>, %164, %cst_46 [1] : vector<16x16xf32> to vector<16xf32>
    %166 = vector.shape_cast %165 : vector<16xf32> to vector<16x1xf32>
    %167 = vector.broadcast %166 : vector<16x1xf32> to vector<16x16xf32>
    %168 = arith.subf %164, %167 : vector<16x16xf32>
    %169 = math.exp %168 : vector<16x16xf32>
    %cst_47 = arith.constant dense<0.000000e+00> : vector<16xf32>
    %170 = vector.multi_reduction <add>, %169, %cst_47 [1] : vector<16x16xf32> to vector<16xf32>
    %171 = vector.shape_cast %170 : vector<16xf32> to vector<16x1xf32>
    %172 = tpu.reciprocal %171 {approx = true} : vector<16x1xf32> -> vector<16x1xf32>
    %173 = vector.broadcast %172 : vector<16x1xf32> to vector<16x16xf32>
    %174 = arith.mulf %169, %173 : vector<16x16xf32>
    %cst_48 = arith.constant dense<0.000000e+00> : vector<16x8xf32>
    %175 = tpu.matmul %174, %162, %cst_48 {dimension_numbers = #tpu.dot_dimension_numbers<[1], [0], [0], [1], [0, 0, 1, 1], [], []>} : vector<16x16xf32>, vector<16x8xf32>, vector<16x8xf32> -> vector<16x8xf32>
    %176 = tpu.concatenate %47, %63, %79, %95, %111, %127, %143, %159, %175 in 1 : vector<16x8xf32>, vector<16x8xf32>, vector<16x8xf32>, vector<16x8xf32>, vector<16x8xf32>, vector<16x8xf32>, vector<16x8xf32>, vector<16x8xf32>, vector<16x8xf32> -> vector<16x72xf32>
    %c2136 = arith.constant 2136 : index
    %c0_49 = arith.constant 0 : index
    %177 = vector.load %arg1[%c2136, %c0_49] : memref<2208x72xf32, #tpu.memory_space<vmem>>, vector<72x72xf32>
    %cst_50 = arith.constant dense<0.000000e+00> : vector<16x72xf32>
    %178 = tpu.matmul %176, %177, %cst_50 {dimension_numbers = #tpu.dot_dimension_numbers<[1], [0], [0], [1], [0, 0, 1, 1], [], []>} : vector<16x72xf32>, vector<72x72xf32>, vector<16x72xf32> -> vector<16x72xf32>
    %179 = arith.addf %178, %25 : vector<16x72xf32>
    %180 = tpu.concatenate %179, %179, %179, %179, %179, %179, %179, %179 in 1 : vector<16x72xf32>, vector<16x72xf32>, vector<16x72xf32>, vector<16x72xf32>, vector<16x72xf32>, vector<16x72xf32>, vector<16x72xf32>, vector<16x72xf32> -> vector<16x576xf32>
    %181 = arith.mulf %180, %11 : vector<16x576xf32>
    %c768 = arith.constant 768 : index
    %c0_51 = arith.constant 0 : index
    %182 = vector.load %arg1[%c768, %c0_51] : memref<2208x72xf32, #tpu.memory_space<vmem>>, vector<576x72xf32>
    %cst_52 = arith.constant dense<0.000000e+00> : vector<16x72xf32>
    %183 = tpu.matmul %181, %182, %cst_52 {dimension_numbers = #tpu.dot_dimension_numbers<[1], [0], [0], [1], [0, 0, 1, 1], [], []>} : vector<16x576xf32>, vector<576x72xf32>, vector<16x72xf32> -> vector<16x72xf32>
    %184 = arith.addf %183, %6 : vector<16x72xf32>
    %cst_53 = arith.constant 0.000000e+00 : f32
    %185 = vector.broadcast %cst_53 : f32 to vector<16x72xf32>
    %186 = arith.maximumf %184, %185 : vector<16x72xf32>
    %187 = tpu.concatenate %186, %186, %186, %186, %186, %186, %186, %186 in 1 : vector<16x72xf32>, vector<16x72xf32>, vector<16x72xf32>, vector<16x72xf32>, vector<16x72xf32>, vector<16x72xf32>, vector<16x72xf32>, vector<16x72xf32> -> vector<16x576xf32>
    %188 = arith.mulf %187, %11 : vector<16x576xf32>
    %c1344 = arith.constant 1344 : index
    %c0_54 = arith.constant 0 : index
    %189 = vector.load %arg1[%c1344, %c0_54] : memref<2208x72xf32, #tpu.memory_space<vmem>>, vector<576x72xf32>
    %cst_55 = arith.constant dense<0.000000e+00> : vector<16x72xf32>
    %190 = tpu.matmul %188, %189, %cst_55 {dimension_numbers = #tpu.dot_dimension_numbers<[1], [0], [0], [1], [0, 0, 1, 1], [], []>} : vector<16x576xf32>, vector<576x72xf32>, vector<16x72xf32> -> vector<16x72xf32>
    %191 = vector.extract_strided_slice %190 {offsets = [0, 0], sizes = [16, 12], strides = [1, 1]} : vector<16x72xf32> to vector<16x12xf32>
    %192 = arith.addf %191, %7 : vector<16x12xf32>
    %193 = arith.cmpf one, %192, %192 : vector<16x12xf32>
    %cst_56 = arith.constant 0.000000e+00 : f32
    %194 = vector.broadcast %cst_56 : f32 to vector<16x12xf32>
    %195 = arith.select %193, %194, %192 : vector<16x12xi1>, vector<16x12xf32>
    %196 = arith.mulf %8, %12 : vector<16x12xf32>
    %197 = arith.addf %195, %196 : vector<16x12xf32>
    %198 = arith.mulf %12, %12 : vector<16x12xf32>
    %cst_57 = arith.constant dense<0.000000e+00> : vector<16xf32>
    %199 = vector.multi_reduction <add>, %198, %cst_57 [1] : vector<16x12xf32> to vector<16xf32>
    %200 = vector.shape_cast %199 : vector<16xf32> to vector<16x1xf32>
    %cst_58 = arith.constant 22.0545254 : f32
    %201 = vector.broadcast %cst_58 : f32 to vector<16x1xf32>
    %202 = arith.addf %201, %200 : vector<16x1xf32>
    %cst_59 = arith.constant -5.000000e-01 : f32
    %203 = vector.broadcast %cst_59 : f32 to vector<16x1xf32>
    %204 = arith.mulf %203, %202 : vector<16x1xf32>
    %cst_60 = arith.constant 5.000000e-01 : f32
    %205 = vector.broadcast %cst_60 : f32 to vector<16x1xf32>
    %206 = arith.mulf %205, %9 : vector<16x1xf32>
    %207 = arith.subf %204, %206 : vector<16x1xf32>
    %cst_61 = arith.constant 5.000000e-01 : f32
    %208 = vector.broadcast %cst_61 : f32 to vector<16x1xf32>
    %209 = arith.mulf %208, %9 : vector<16x1xf32>
    %cst_62 = arith.constant 17.0272617 : f32
    %210 = vector.broadcast %cst_62 : f32 to vector<16x1xf32>
    %211 = arith.addf %210, %209 : vector<16x1xf32>
    %212 = vector.extract_strided_slice %197 {offsets = [0, 0], sizes = [16, 4], strides = [1, 1]} : vector<16x12xf32> to vector<16x4xf32>
    %213 = math.tanh %212 : vector<16x4xf32>
    %214 = math.exp %213 : vector<16x4xf32>
    %cst_63 = arith.constant dense<0.000000e+00> : vector<16xf32>
    %215 = vector.multi_reduction <add>, %214, %cst_63 [1] : vector<16x4xf32> to vector<16xf32>
    %216 = vector.shape_cast %215 : vector<16xf32> to vector<16x1xf32>
    %217 = tpu.reciprocal %216 {approx = true} : vector<16x1xf32> -> vector<16x1xf32>
    %218 = vector.broadcast %217 : vector<16x1xf32> to vector<16x4xf32>
    %219 = arith.mulf %214, %218 : vector<16x4xf32>
    %220 = vector.extract_strided_slice %197 {offsets = [0, 4], sizes = [16, 4], strides = [1, 1]} : vector<16x12xf32> to vector<16x4xf32>
    %221 = arith.negf %220 : vector<16x4xf32>
    %222 = math.exp %221 : vector<16x4xf32>
    %cst_64 = arith.constant 1.000000e+00 : f32
    %223 = vector.broadcast %cst_64 : f32 to vector<16x4xf32>
    %224 = arith.addf %223, %222 : vector<16x4xf32>
    %225 = arith.divf %223, %224 : vector<16x4xf32>
    %226 = vector.extract_strided_slice %197 {offsets = [0, 8], sizes = [16, 4], strides = [1, 1]} : vector<16x12xf32> to vector<16x4xf32>
    %227 = math.tanh %226 : vector<16x4xf32>
    %228 = tpu.concatenate %219, %225, %227, %207, %211 in 1 : vector<16x4xf32>, vector<16x4xf32>, vector<16x4xf32>, vector<16x1xf32>, vector<16x1xf32> -> vector<16x14xf32>
    %c0_65 = arith.constant 0 : index
    %c0_66 = arith.constant 0 : index
    %229 = vector.load %arg2[%c0_65, %c0_66] : memref<16x14xf32, #tpu.memory_space<vmem>>, vector<16x14xf32>
    tpu.vector_store %arg2[%c0_65, %c0_66], %228 {strides = array<i32>} : memref<16x14xf32, #tpu.memory_space<vmem>>, vector<16x14xf32>,
    return
  }
}

</mosaic_0001>

<llo_original>
// kernel: actor_forward.1
$region0: #{actor_forward.1}
  #allocation0 [shape = 'u32[]', space=smem, size = 0x4, offset = 0x4, fixed_abs, tag = 'smem constant byte address 0x4 - core index']
  #allocation1 [shape = 'u32[144,128]{1,0:T(1,128)}', space=vmem, size = 0x12000, scoped, tag = 'internal scratch']
  %s0 = inlined_call_operand.vmem [shape: f32[16,1077], index: 0, kind: input, shape index: {}]
  %s1 = inlined_call_operand.vmem [shape: f32[2208,72], index: 1, kind: input, shape index: {}]
  %s2 = inlined_call_operand.vmem [shape: f32[16,14], index: 2, kind: output, shape index: {}]
  %s3 = sld [smem:[#allocation0]]
  $region18: #{actor_forward.1} parent=0
    _
  %s5 = ssub.s32 1, %s3
  %s6 = scalar_select 0, %s5, %s3
  // Predicated region
  $region2: #{actor_forward.1} parent=0 // pred_check
    _
  $region3: #{actor_forward.1} parent=0 // pred_check_branch
    %8 = sbr.rel (0) target = $region5
  $region4: #{actor_forward.1} parent=0 // pred_region
    _
  $region5: #{actor_forward.1} parent=0 // pred_fallthru
    _
  // Predicated region
  $region6: #{actor_forward.1} parent=0 // pred_check
    _
  $region7: #{actor_forward.1} parent=0 // pred_check_branch
    %10 = sbr.rel (0) target = $region9
  $region8: #{actor_forward.1} parent=0 // pred_region
    _
  $region9: #{actor_forward.1} parent=0 // pred_fallthru
    _
  %v11 = vld [vmem:[%s0] sm:$0xff]
  %v12 = vld [vmem:[%s0 + $0x8] sm:$0xff]
  %v13 = vld [vmem:[%s0 + $0x10] sm:$0xff]
  %v14 = vld [vmem:[%s0 + $0x18] sm:$0xff]
  %v15 = vld [vmem:[%s0 + $0x20] sm:$0xff]
  %v16 = vld [vmem:[%s0 + $0x28] sm:$0xff]
  %v17 = vld [vmem:[%s0 + $0x30] sm:$0xff]
  %v18 = vld [vmem:[%s0 + $0x38] sm:$0xff]
  %v19 = vld [vmem:[%s0 + $0x40] sm:$0xff]
  %v20 = vld [vmem:[%s0 + $0x48] sm:$0xff]
  %v21 = vld [vmem:[%s0 + $0x50] sm:$0xff]
  %v22 = vld [vmem:[%s0 + $0x58] sm:$0xff]
  %v23 = vld [vmem:[%s0 + $0x60] sm:$0xff]
  %v24 = vld [vmem:[%s0 + $0x68] sm:$0xff]
  %v25 = vld [vmem:[%s0 + $0x70] sm:$0xff]
  %v26 = vld [vmem:[%s0 + $0x78] sm:$0xff]
  %v27 = vld [vmem:[%s0 + $0x80] sm:$0xff]
  %v28 = vld [vmem:[%s0 + $0x88] sm:$0xff]
  %31 = vrot.lane.b32.xlu0 %v11, 24
  %v32 = vpop.permute.xlu0 %31
  %33 = vrot.lane.b32.xlu0 %v20, 24
  %v34 = vpop.permute.xlu0 %33
  %37 = vrot.lane.b32.xlu0 %v11, 48
  %v38 = vpop.permute.xlu0 %37
  %39 = vrot.lane.b32.xlu0 %v20, 48
  %v40 = vpop.permute.xlu0 %39
  %43 = vrot.lane.b32.xlu0 %v11, 72
  %v44 = vpop.permute.xlu0 %43
  %45 = vrot.lane.b32.xlu0 %v20, 72
  %v46 = vpop.permute.xlu0 %45
  %49 = vrot.lane.b32.xlu0 %v11, 96
  %v50 = vpop.permute.xlu0 %49
  %51 = vrot.lane.b32.xlu0 %v20, 96
  %v52 = vpop.permute.xlu0 %51
  %55 = vrot.lane.b32.xlu0 %v11, 120
  %v56 = vpop.permute.xlu0 %55
  %57 = vrot.lane.b32.xlu0 %v20, 120
  %v58 = vpop.permute.xlu0 %57
  %61 = vrot.lane.b32.xlu0 %v11, 16
  %v62 = vpop.permute.xlu0 %61
  %63 = vrot.lane.b32.xlu0 %v20, 16
  %v64 = vpop.permute.xlu0 %63
  %67 = vrot.lane.b32.xlu0 %v11, 40
  %v68 = vpop.permute.xlu0 %67
  %69 = vrot.lane.b32.xlu0 %v20, 40
  %v70 = vpop.permute.xlu0 %69
  %vm73 = vcmask 195584
  %v74 = vsel %vm73, %v11, %v32
  %v75 = vsel %vm73, %v20, %v34
  %vm76 = vcmask 392192
  %v77 = vsel %vm76, %v74, %v38
  %v78 = vsel %vm76, %v75, %v40
  %vm79 = vcmask 588800
  %v80 = vsel %vm79, %v77, %v44
  %v81 = vsel %vm79, %v78, %v46
  %vm82 = vcmask 785408
  %v83 = vsel %vm82, %v80, %v50
  %v84 = vsel %vm82, %v81, %v52
  %vm85 = vcmask 982016
  %v86 = vsel %vm85, %v83, %v56
  %v87 = vsel %vm85, %v84, %v58
  %vm88 = vcmask 130048
  %v89 = vsel %vm88, %v56, %v62
  %v90 = vsel %vm88, %v58, %v64
  %vm91 = vcmask 326656
  %v92 = vsel %vm91, %v89, %v68
  %v93 = vsel %vm91, %v90, %v70
  %98 = vrot.lane.b32.xlu0 %v13, 87
  %v99 = vpop.permute.xlu0 %98
  %100 = vrot.lane.b32.xlu0 %v14, 87
  %v101 = vpop.permute.xlu0 %100
  %102 = vrot.lane.b32.xlu0 %v22, 87
  %v103 = vpop.permute.xlu0 %102
  %104 = vrot.lane.b32.xlu0 %v23, 87
  %v105 = vpop.permute.xlu0 %104
  %vm106 = vcmask 711680
  %v107 = vsel %vm106, %v99, %v101
  %v108 = vsel %vm106, %v103, %v105
  %v113 = vmul.f32 %v86, %v107
  %v114 = vmul.f32 %v92, %v101
  %v115 = vmul.f32 %v87, %v108
  %v116 = vmul.f32 %v93, %v105
  %v117 = vld [vmem:[%s1] sm:$0xff]
  %v118 = vld [vmem:[%s1 + $0x8] sm:$0xff]
  %v119 = vld [vmem:[%s1 + $0x10] sm:$0xff]
  %v120 = vld [vmem:[%s1 + $0x18] sm:$0xff]
  %v121 = vld [vmem:[%s1 + $0x20] sm:$0xff]
  %v122 = vld [vmem:[%s1 + $0x28] sm:$0xff]
  %v123 = vld [vmem:[%s1 + $0x30] sm:$0xff]
  %v124 = vld [vmem:[%s1 + $0x38] sm:$0xff]
  %v125 = vld [vmem:[%s1 + $0x40] sm:$0xff]
  %v126 = vld [vmem:[%s1 + $0x48] sm:$0xff]
  %v127 = vld [vmem:[%s1 + $0x50] sm:$0xff]
  %v128 = vld [vmem:[%s1 + $0x58] sm:$0xff]
  %v129 = vld [vmem:[%s1 + $0x60] sm:$0xff]
  %v130 = vld [vmem:[%s1 + $0x68] sm:$0xff]
  %v131 = vld [vmem:[%s1 + $0x70] sm:$0xff]
  %v132 = vld [vmem:[%s1 + $0x78] sm:$0xff]
  %v133 = vld [vmem:[%s1 + $0x80] sm:$0xff]
  %v134 = vld [vmem:[%s1 + $0x88] sm:$0xff]
  %v135 = vld [vmem:[%s1 + $0x90] sm:$0xff]
  %v136 = vld [vmem:[%s1 + $0x98] sm:$0xff]
  %v137 = vld [vmem:[%s1 + $0xa0] sm:$0xff]
  %v138 = vld [vmem:[%s1 + $0xa8] sm:$0xff]
  %v139 = vld [vmem:[%s1 + $0xb0] sm:$0xff]
  %v140 = vld [vmem:[%s1 + $0xb8] sm:$0xff]
  %vm141 = vcmask 523264
  %v143 = vsel %vm141, %v114, 0
  %v146 = vsel %vm141, %v116, 0
  %148 = vmatprep.subr.mxu0 0.0
  %149 = vmatpush1.msra.mxu0 %v117
  %150 = vmatprep.subr.mxu0 0.0
  %151 = vmatpush1.msra.mxu0 %v118
  %152 = vmatprep.subr.mxu0 0.0
  %153 = vmatpush1.msra.mxu0 %v119
  %154 = vmatprep.subr.mxu0 0.0
  %155 = vmatpush1.msra.mxu0 %v120
  %156 = vmatprep.subr.mxu0 0.0
  %157 = vmatpush1.msra.mxu0 %v121
  %158 = vmatprep.subr.mxu0 0.0
  %159 = vmatpush1.msra.mxu0 %v122
  %160 = vmatprep.subr.mxu0 0.0
  %161 = vmatpush1.msra.mxu0 %v123
  %162 = vmatprep.subr.mxu0 0.0
  %163 = vmatpush1.msra.mxu0 %v124
  %164 = vmatprep.subr.mxu0 0.0
  %165 = vmatpush1.msra.mxu0 %v125
  %166 = vmatprep.subr.mxu0 0.0
  %167 = vmatpush1.msra.mxu0 %v126
  %168 = vmatprep.subr.mxu0 0.0
  %169 = vmatpush1.msra.mxu0 %v127
  %170 = vmatprep.subr.mxu0 0.0
  %171 = vmatpush1.msra.mxu0 %v128
  %172 = vmatprep.subr.mxu0 0.0
  %173 = vmatpush1.msra.mxu0 %v129
  %174 = vmatprep.subr.mxu0 0.0
  %175 = vmatpush1.msra.mxu0 %v130
  %176 = vmatprep.subr.mxu0 0.0
  %177 = vmatpush1.msra.mxu0 %v131
  %178 = vmatprep.subr.mxu0 0.0
  %179 = vmatpush1.msra.mxu0 %v132
  %180 = vmatprep.subr.mxu0 0.0
  %181 = vmatpush1.msra.mxu0 %v133
  %182 = vmatprep.subr.mxu0 0.0
  %183 = vmatpush1.msra.mxu0 %v134
  %184 = vmatprep.subr.mxu0 0.0
  %185 = vmatpush1.msra.mxu0 %v135
  %186 = vmatprep.subr.mxu0 0.0
  %187 = vmatpush1.msra.mxu0 %v136
  %188 = vmatprep.subr.mxu0 0.0
  %189 = vmatpush1.msra.mxu0 %v137
  %190 = vmatprep.subr.mxu0 0.0
  %191 = vmatpush1.msra.mxu0 %v138
  %192 = vmatprep.subr.mxu0 0.0
  %193 = vmatpush1.msra.mxu0 %v139
  %194 = vmatprep.subr.mxu0 0.0
  %195 = vmatpush1.msra.mxu0 %v140
  %196 = vmatprep.subr.mxu0 0.0
  %197 = vmatpush1.msra.mxu0 0.0
  %198 = vmatprep.subr.mxu0 0.0
  %199 = vmatpush1.msra.mxu0 0.0
  %200 = vmatprep.subr.mxu0 0.0
  %201 = vmatpush1.msra.mxu0 0.0
  %202 = vmatprep.subr.mxu0 0.0
  %203 = vmatpush1.msra.mxu0 0.0
  %204 = vmatprep.subr.mxu0 0.0
  %205 = vmatpush1.msra.mxu0 0.0
  %206 = vmatprep.subr.mxu0 0.0
  %207 = vmatpush1.msra.mxu0 0.0
  %208 = vmatprep.subr.mxu0 0.0
  %209 = vmatpush1.msra.mxu0 0.0
  %210 = vmatprep.subr.mxu0 0.0
  %211 = vmatpush1.msra.mxu0 0.0
  %212 = vmatprep.mubr.f32.mxu0 %v143
  %213 = vmatmul.mubr.f32.gmra.mrb[0].mxu0 %v113
  %v214 = vpop.f32.mrb[0].mxu0
  %v215 = vadd.f32 %v44, %v214
  %v216 = vpop.f32.mrb[0].mxu0
  %217 = vmatprep.mubr.f32.mxu0 %v146
  %218 = vmatmul.mubr.f32.gmra.mrb[0].mxu0 %v115
  %v219 = vpop.f32.mrb[0].mxu0
  %v220 = vadd.f32 %v46, %v219
  %v221 = vpop.f32.mrb[0].mxu0
  %222 = vdwg.mxu0
  %v223 = vmax.f32 %v215, 0.0
  %v224 = vmax.f32 %v220, 0.0
  %227 = vrot.lane.b32.xlu0 %v223, 72
  %v228 = vpop.permute.xlu0 %227
  %229 = vrot.lane.b32.xlu0 %v224, 72
  %v230 = vpop.permute.xlu0 %229
  %233 = vrot.lane.b32.xlu0 %v223, 16
  %v234 = vpop.permute.xlu0 %233
  %235 = vrot.lane.b32.xlu0 %v224, 16
  %v236 = vpop.permute.xlu0 %235
  %239 = vrot.lane.b32.xlu0 %v223, 88
  %v240 = vpop.permute.xlu0 %239
  %241 = vrot.lane.b32.xlu0 %v224, 88
  %v242 = vpop.permute.xlu0 %241
  %245 = vrot.lane.b32.xlu0 %v223, 32
  %v246 = vpop.permute.xlu0 %245
  %247 = vrot.lane.b32.xlu0 %v224, 32
  %v248 = vpop.permute.xlu0 %247
  %251 = vrot.lane.b32.xlu0 %v223, 104
  %v252 = vpop.permute.xlu0 %251
  %253 = vrot.lane.b32.xlu0 %v224, 104
  %v254 = vpop.permute.xlu0 %253
  %257 = vrot.lane.b32.xlu0 %v223, 48
  %v258 = vpop.permute.xlu0 %257
  %259 = vrot.lane.b32.xlu0 %v224, 48
  %v260 = vpop.permute.xlu0 %259
  %263 = vrot.lane.b32.xlu0 %v223, 120
  %v264 = vpop.permute.xlu0 %263
  %265 = vrot.lane.b32.xlu0 %v224, 120
  %v266 = vpop.permute.xlu0 %265
  %v269 = vsel %vm79, %v223, %v228
  %v270 = vsel %vm79, %v224, %v230
  %v271 = vsel %vm88, %v228, %v234
  %v272 = vsel %vm88, %v230, %v236
  %vm273 = vcmask 719872
  %v274 = vsel %vm273, %v271, %v240
  %v275 = vsel %vm273, %v272, %v242
  %vm276 = vcmask 261120
  %v277 = vsel %vm276, %v240, %v246
  %v278 = vsel %vm276, %v242, %v248
  %vm279 = vcmask 850944
  %v280 = vsel %vm279, %v277, %v252
  %v281 = vsel %vm279, %v278, %v254
  %v282 = vsel %vm76, %v252, %v258
  %v283 = vsel %vm76, %v254, %v260
  %v284 = vsel %vm85, %v282, %v264
  %v285 = vsel %vm85, %v283, %v266
  %296 = vrot.lane.b32.xlu0 %v14, 23
  %v297 = vpop.permute.xlu0 %296
  %298 = vrot.lane.b32.xlu0 %v15, 23
  %v299 = vpop.permute.xlu0 %298
  %300 = vrot.lane.b32.xlu0 %v16, 23
  %v301 = vpop.permute.xlu0 %300
  %302 = vrot.lane.b32.xlu0 %v17, 23
  %v303 = vpop.permute.xlu0 %302
  %304 = vrot.lane.b32.xlu0 %v18, 23
  %v305 = vpop.permute.xlu0 %304
  %306 = vrot.lane.b32.xlu0 %v19, 23
  %v307 = vpop.permute.xlu0 %306
  %308 = vrot.lane.b32.xlu0 %v23, 23
  %v309 = vpop.permute.xlu0 %308
  %310 = vrot.lane.b32.xlu0 %v24, 23
  %v311 = vpop.permute.xlu0 %310
  %312 = vrot.lane.b32.xlu0 %v25, 23
  %v313 = vpop.permute.xlu0 %312
  %314 = vrot.lane.b32.xlu0 %v26, 23
  %v315 = vpop.permute.xlu0 %314
  %316 = vrot.lane.b32.xlu0 %v27, 23
  %v317 = vpop.permute.xlu0 %316
  %318 = vrot.lane.b32.xlu0 %v28, 23
  %v319 = vpop.permute.xlu0 %318
  %vm320 = vcmask 187392
  %v321 = vsel %vm320, %v297, %v299
  %v322 = vsel %vm320, %v299, %v301
  %v323 = vsel %vm320, %v301, %v303
  %v324 = vsel %vm320, %v303, %v305
  %v325 = vsel %vm320, %v305, %v307
  %v326 = vsel %vm320, %v309, %v311
  %v327 = vsel %vm320, %v311, %v313
  %v328 = vsel %vm320, %v313, %v315
  %v329 = vsel %vm320, %v315, %v317
  %v330 = vsel %vm320, %v317, %v319
  %v341 = vmul.f32 %v269, %v321
  %v342 = vmul.f32 %v274, %v322
  %v343 = vmul.f32 %v280, %v323
  %v344 = vmul.f32 %v284, %v324
  %v345 = vmul.f32 %v264, %v325
  %v346 = vmul.f32 %v270, %v326
  %v347 = vmul.f32 %v275, %v327
  %v348 = vmul.f32 %v281, %v328
  %v349 = vmul.f32 %v285, %v329
  %v350 = vmul.f32 %v266, %v330
  %v351 = vld [vmem:[%s1 + $0xc0] sm:$0xff]
  %v352 = vld [vmem:[%s1 + $0xc8] sm:$0xff]
  %v353 = vld [vmem:[%s1 + $0xd0] sm:$0xff]
  %v354 = vld [vmem:[%s1 + $0xd8] sm:$0xff]
  %v355 = vld [vmem:[%s1 + $0xe0] sm:$0xff]
  %v356 = vld [vmem:[%s1 + $0xe8] sm:$0xff]
  %v357 = vld [vmem:[%s1 + $0xf0] sm:$0xff]
  %v358 = vld [vmem:[%s1 + $0xf8] sm:$0xff]
  %v359 = vld [vmem:[%s1 + $0x100] sm:$0xff]
  %v360 = vld [vmem:[%s1 + $0x108] sm:$0xff]
  %v361 = vld [vmem:[%s1 + $0x110] sm:$0xff]
  %v362 = vld [vmem:[%s1 + $0x118] sm:$0xff]
  %v363 = vld [vmem:[%s1 + $0x120] sm:$0xff]
  %v364 = vld [vmem:[%s1 + $0x128] sm:$0xff]
  %v365 = vld [vmem:[%s1 + $0x130] sm:$0xff]
  %v366 = vld [vmem:[%s1 + $0x138] sm:$0xff]
  %v367 = vld [vmem:[%s1 + $0x140] sm:$0xff]
  %v368 = vld [vmem:[%s1 + $0x148] sm:$0xff]
  %v369 = vld [vmem:[%s1 + $0x150] sm:$0xff]
  %v370 = vld [vmem:[%s1 + $0x158] sm:$0xff]
  %v371 = vld [vmem:[%s1 + $0x160] sm:$0xff]
  %v372 = vld [vmem:[%s1 + $0x168] sm:$0xff]
  %v373 = vld [vmem:[%s1 + $0x170] sm:$0xff]
  %v374 = vld [vmem:[%s1 + $0x178] sm:$0xff]
  %v375 = vld [vmem:[%s1 + $0x180] sm:$0xff]
  %v376 = vld [vmem:[%s1 + $0x188] sm:$0xff]
  %v377 = vld [vmem:[%s1 + $0x190] sm:$0xff]
  %v378 = vld [vmem:[%s1 + $0x198] sm:$0xff]
  %v379 = vld [vmem:[%s1 + $0x1a0] sm:$0xff]
  %v380 = vld [vmem:[%s1 + $0x1a8] sm:$0xff]
  %v381 = vld [vmem:[%s1 + $0x1b0] sm:$0xff]
  %v382 = vld [vmem:[%s1 + $0x1b8] sm:$0xff]
  %v383 = vld [vmem:[%s1 + $0x1c0] sm:$0xff]
  %v384 = vld [vmem:[%s1 + $0x1c8] sm:$0xff]
  %v385 = vld [vmem:[%s1 + $0x1d0] sm:$0xff]
  %v386 = vld [vmem:[%s1 + $0x1d8] sm:$0xff]
  %v387 = vld [vmem:[%s1 + $0x1e0] sm:$0xff]
  %v388 = vld [vmem:[%s1 + $0x1e8] sm:$0xff]
  %v389 = vld [vmem:[%s1 + $0x1f0] sm:$0xff]
  %v390 = vld [vmem:[%s1 + $0x1f8] sm:$0xff]
  %v391 = vld [vmem:[%s1 + $0x200] sm:$0xff]
  %v392 = vld [vmem:[%s1 + $0x208] sm:$0xff]
  %v393 = vld [vmem:[%s1 + $0x210] sm:$0xff]
  %v394 = vld [vmem:[%s1 + $0x218] sm:$0xff]
  %v395 = vld [vmem:[%s1 + $0x220] sm:$0xff]
  %v396 = vld [vmem:[%s1 + $0x228] sm:$0xff]
  %v397 = vld [vmem:[%s1 + $0x230] sm:$0xff]
  %v398 = vld [vmem:[%s1 + $0x238] sm:$0xff]
  %v399 = vld [vmem:[%s1 + $0x240] sm:$0xff]
  %v400 = vld [vmem:[%s1 + $0x248] sm:$0xff]
  %v401 = vld [vmem:[%s1 + $0x250] sm:$0xff]
  %v402 = vld [vmem:[%s1 + $0x258] sm:$0xff]
  %v403 = vld [vmem:[%s1 + $0x260] sm:$0xff]
  %v404 = vld [vmem:[%s1 + $0x268] sm:$0xff]
  %v405 = vld [vmem:[%s1 + $0x270] sm:$0xff]
  %v406 = vld [vmem:[%s1 + $0x278] sm:$0xff]
  %v407 = vld [vmem:[%s1 + $0x280] sm:$0xff]
  %v408 = vld [vmem:[%s1 + $0x288] sm:$0xff]
  %v409 = vld [vmem:[%s1 + $0x290] sm:$0xff]
  %v410 = vld [vmem:[%s1 + $0x298] sm:$0xff]
  %v411 = vld [vmem:[%s1 + $0x2a0] sm:$0xff]
  %v412 = vld [vmem:[%s1 + $0x2a8] sm:$0xff]
  %v413 = vld [vmem:[%s1 + $0x2b0] sm:$0xff]
  %v414 = vld [vmem:[%s1 + $0x2b8] sm:$0xff]
  %v415 = vld [vmem:[%s1 + $0x2c0] sm:$0xff]
  %v416 = vld [vmem:[%s1 + $0x2c8] sm:$0xff]
  %v417 = vld [vmem:[%s1 + $0x2d0] sm:$0xff]
  %v418 = vld [vmem:[%s1 + $0x2d8] sm:$0xff]
  %v419 = vld [vmem:[%s1 + $0x2e0] sm:$0xff]
  %v420 = vld [vmem:[%s1 + $0x2e8] sm:$0xff]
  %v421 = vld [vmem:[%s1 + $0x2f0] sm:$0xff]
  %v422 = vld [vmem:[%s1 + $0x2f8] sm:$0xff]
  %v424 = vsel %vm141, %v345, 0
  %v427 = vsel %vm141, %v350, 0
  %429 = vmatprep.subr.mxu0 0.0
  %430 = vmatpush1.msra.mxu0 %v351
  %431 = vmatprep.subr.mxu0 0.0
  %432 = vmatpush1.msra.mxu0 %v352
  %433 = vmatprep.subr.mxu0 0.0
  %434 = vmatpush1.msra.mxu0 %v353
  %435 = vmatprep.subr.mxu0 0.0
  %436 = vmatpush1.msra.mxu0 %v354
  %437 = vmatprep.subr.mxu0 0.0
  %438 = vmatpush1.msra.mxu0 %v355
  %439 = vmatprep.subr.mxu0 0.0
  %440 = vmatpush1.msra.mxu0 %v356
  %441 = vmatprep.subr.mxu0 0.0
  %442 = vmatpush1.msra.mxu0 %v357
  %443 = vmatprep.subr.mxu0 0.0
  %444 = vmatpush1.msra.mxu0 %v358
  %445 = vmatprep.subr.mxu0 0.0
  %446 = vmatpush1.msra.mxu0 %v359
  %447 = vmatprep.subr.mxu0 0.0
  %448 = vmatpush1.msra.mxu0 %v360
  %449 = vmatprep.subr.mxu0 0.0
  %450 = vmatpush1.msra.mxu0 %v361
  %451 = vmatprep.subr.mxu0 0.0
  %452 = vmatpush1.msra.mxu0 %v362
  %453 = vmatprep.subr.mxu0 0.0
  %454 = vmatpush1.msra.mxu0 %v363
  %455 = vmatprep.subr.mxu0 0.0
  %456 = vmatpush1.msra.mxu0 %v364
  %457 = vmatprep.subr.mxu0 0.0
  %458 = vmatpush1.msra.mxu0 %v365
  %459 = vmatprep.subr.mxu0 0.0
  %460 = vmatpush1.msra.mxu0 %v366
  %461 = vmatprep.subr.mxu0 0.0
  %462 = vmatpush1.msra.mxu0 %v367
  %463 = vmatprep.subr.mxu0 0.0
  %464 = vmatpush1.msra.mxu0 %v368
  %465 = vmatprep.subr.mxu0 0.0
  %466 = vmatpush1.msra.mxu0 %v369
  %467 = vmatprep.subr.mxu0 0.0
  %468 = vmatpush1.msra.mxu0 %v370
  %469 = vmatprep.subr.mxu0 0.0
  %470 = vmatpush1.msra.mxu0 %v371
  %471 = vmatprep.subr.mxu0 0.0
  %472 = vmatpush1.msra.mxu0 %v372
  %473 = vmatprep.subr.mxu0 0.0
  %474 = vmatpush1.msra.mxu0 %v373
  %475 = vmatprep.subr.mxu0 0.0
  %476 = vmatpush1.msra.mxu0 %v374
  %477 = vmatprep.subr.mxu0 0.0
  %478 = vmatpush1.msra.mxu0 %v375
  %479 = vmatprep.subr.mxu0 0.0
  %480 = vmatpush1.msra.mxu0 %v376
  %481 = vmatprep.subr.mxu0 0.0
  %482 = vmatpush1.msra.mxu0 %v377
  %483 = vmatprep.subr.mxu0 0.0
  %484 = vmatpush1.msra.mxu0 %v378
  %485 = vmatprep.subr.mxu0 0.0
  %486 = vmatpush1.msra.mxu0 %v379
  %487 = vmatprep.subr.mxu0 0.0
  %488 = vmatpush1.msra.mxu0 %v380
  %489 = vmatprep.subr.mxu0 0.0
  %490 = vmatpush1.msra.mxu0 %v381
  %491 = vmatprep.subr.mxu0 0.0
  %492 = vmatpush1.msra.mxu0 %v382
  %493 = vmatprep.mubr.f32.mxu0 %v342
  %494 = vmatmul.mubr.f32.gmra.mrb[0].mxu0 %v341
  %v495 = vpop.f32.mrb[0].mxu0
  %v496 = vadd.f32 %v12, %v495
  %v497 = vpop.f32.mrb[0].mxu0
  %498 = vmatprep.mubr.f32.mxu0 %v347
  %499 = vmatmul.mubr.f32.gmra.mrb[0].mxu0 %v346
  %v500 = vpop.f32.mrb[0].mxu0
  %v501 = vadd.f32 %v21, %v500
  %v502 = vpop.f32.mrb[0].mxu0
  %503 = vdwg.mxu0
  %504 = vmatprep.subr.mxu0 0.0
  %505 = vmatpush1.msra.mxu0 %v383
  %506 = vmatprep.subr.mxu0 0.0
  %507 = vmatpush1.msra.mxu0 %v384
  %508 = vmatprep.subr.mxu0 0.0
  %509 = vmatpush1.msra.mxu0 %v385
  %510 = vmatprep.subr.mxu0 0.0
  %511 = vmatpush1.msra.mxu0 %v386
  %512 = vmatprep.subr.mxu0 0.0
  %513 = vmatpush1.msra.mxu0 %v387
  %514 = vmatprep.subr.mxu0 0.0
  %515 = vmatpush1.msra.mxu0 %v388
  %516 = vmatprep.subr.mxu0 0.0
  %517 = vmatpush1.msra.mxu0 %v389
  %518 = vmatprep.subr.mxu0 0.0
  %519 = vmatpush1.msra.mxu0 %v390
  %520 = vmatprep.subr.mxu0 0.0
  %521 = vmatpush1.msra.mxu0 %v391
  %522 = vmatprep.subr.mxu0 0.0
  %523 = vmatpush1.msra.mxu0 %v392
  %524 = vmatprep.subr.mxu0 0.0
  %525 = vmatpush1.msra.mxu0 %v393
  %526 = vmatprep.subr.mxu0 0.0
  %527 = vmatpush1.msra.mxu0 %v394
  %528 = vmatprep.subr.mxu0 0.0
  %529 = vmatpush1.msra.mxu0 %v395
  %530 = vmatprep.subr.mxu0 0.0
  %531 = vmatpush1.msra.mxu0 %v396
  %532 = vmatprep.subr.mxu0 0.0
  %533 = vmatpush1.msra.mxu0 %v397
  %534 = vmatprep.subr.mxu0 0.0
  %535 = vmatpush1.msra.mxu0 %v398
  %536 = vmatprep.subr.mxu0 0.0
  %537 = vmatpush1.msra.mxu0 %v399
  %538 = vmatprep.subr.mxu0 0.0
  %539 = vmatpush1.msra.mxu0 %v400
  %540 = vmatprep.subr.mxu0 0.0
  %541 = vmatpush1.msra.mxu0 %v401
  %542 = vmatprep.subr.mxu0 0.0
  %543 = vmatpush1.msra.mxu0 %v402
  %544 = vmatprep.subr.mxu0 0.0
  %545 = vmatpush1.msra.mxu0 %v403
  %546 = vmatprep.subr.mxu0 0.0
  %547 = vmatpush1.msra.mxu0 %v404
  %548 = vmatprep.subr.mxu0 0.0
  %549 = vmatpush1.msra.mxu0 %v405
  %550 = vmatprep.subr.mxu0 0.0
  %551 = vmatpush1.msra.mxu0 %v406
  %552 = vmatprep.subr.mxu0 0.0
  %553 = vmatpush1.msra.mxu0 %v407
  %554 = vmatprep.subr.mxu0 0.0
  %555 = vmatpush1.msra.mxu0 %v408
  %556 = vmatprep.subr.mxu0 0.0
  %557 = vmatpush1.msra.mxu0 %v409
  %558 = vmatprep.subr.mxu0 0.0
  %559 = vmatpush1.msra.mxu0 %v410
  %560 = vmatprep.subr.mxu0 0.0
  %561 = vmatpush1.msra.mxu0 %v411
  %562 = vmatprep.subr.mxu0 0.0
  %563 = vmatpush1.msra.mxu0 %v412
  %564 = vmatprep.subr.mxu0 0.0
  %565 = vmatpush1.msra.mxu0 %v413
  %566 = vmatprep.subr.mxu0 0.0
  %567 = vmatpush1.msra.mxu0 %v414
  %568 = vmatprep.mubr.f32.mxu0 %v344
  %569 = vmatmul.mubr.f32.gmra.mrb[0].mxu0 %v343
  %v570 = vpop.f32.mrb[0].mxu0
  %v571 = vadd.f32 %v496, %v570
  %v572 = vpop.f32.mrb[0].mxu0
  %573 = vmatprep.mubr.f32.mxu0 %v349
  %574 = vmatmul.mubr.f32.gmra.mrb[0].mxu0 %v348
  %v575 = vpop.f32.mrb[0].mxu0
  %v576 = vadd.f32 %v501, %v575
  %v577 = vpop.f32.mrb[0].mxu0
  %578 = vdwg.mxu0
  %579 = vmatprep.subr.mxu0 0.0
  %580 = vmatpush1.msra.mxu0 %v415
  %581 = vmatprep.subr.mxu0 0.0
  %582 = vmatpush1.msra.mxu0 %v416
  %583 = vmatprep.subr.mxu0 0.0
  %584 = vmatpush1.msra.mxu0 %v417
  %585 = vmatprep.subr.mxu0 0.0
  %586 = vmatpush1.msra.mxu0 %v418
  %587 = vmatprep.subr.mxu0 0.0
  %588 = vmatpush1.msra.mxu0 %v419
  %589 = vmatprep.subr.mxu0 0.0
  %590 = vmatpush1.msra.mxu0 %v420
  %591 = vmatprep.subr.mxu0 0.0
  %592 = vmatpush1.msra.mxu0 %v421
  %593 = vmatprep.subr.mxu0 0.0
  %594 = vmatpush1.msra.mxu0 %v422
  %595 = vmatprep.subr.mxu0 0.0
  %596 = vmatpush1.msra.mxu0 0.0
  %597 = vmatprep.subr.mxu0 0.0
  %598 = vmatpush1.msra.mxu0 0.0
  %599 = vmatprep.subr.mxu0 0.0
  %600 = vmatpush1.msra.mxu0 0.0
  %601 = vmatprep.subr.mxu0 0.0
  %602 = vmatpush1.msra.mxu0 0.0
  %603 = vmatprep.subr.mxu0 0.0
  %604 = vmatpush1.msra.mxu0 0.0
  %605 = vmatprep.subr.mxu0 0.0
  %606 = vmatpush1.msra.mxu0 0.0
  %607 = vmatprep.subr.mxu0 0.0
  %608 = vmatpush1.msra.mxu0 0.0
  %609 = vmatprep.subr.mxu0 0.0
  %610 = vmatpush1.msra.mxu0 0.0
  %611 = vmatprep.subr.mxu0 0.0
  %612 = vmatpush1.msra.mxu0 0.0
  %613 = vmatprep.subr.mxu0 0.0
  %614 = vmatpush1.msra.mxu0 0.0
  %615 = vmatprep.subr.mxu0 0.0
  %616 = vmatpush1.msra.mxu0 0.0
  %617 = vmatprep.subr.mxu0 0.0
  %618 = vmatpush1.msra.mxu0 0.0
  %619 = vmatprep.subr.mxu0 0.0
  %620 = vmatpush1.msra.mxu0 0.0
  %621 = vmatprep.subr.mxu0 0.0
  %622 = vmatpush1.msra.mxu0 0.0
  %623 = vmatprep.subr.mxu0 0.0
  %624 = vmatpush1.msra.mxu0 0.0
  %625 = vmatprep.subr.mxu0 0.0
  %626 = vmatpush1.msra.mxu0 0.0
  %627 = vmatprep.subr.mxu0 0.0
  %628 = vmatpush1.msra.mxu0 0.0
  %629 = vmatprep.subr.mxu0 0.0
  %630 = vmatpush1.msra.mxu0 0.0
  %631 = vmatprep.subr.mxu0 0.0
  %632 = vmatpush1.msra.mxu0 0.0
  %633 = vmatprep.subr.mxu0 0.0
  %634 = vmatpush1.msra.mxu0 0.0
  %635 = vmatprep.subr.mxu0 0.0
  %636 = vmatpush1.msra.mxu0 0.0
  %637 = vmatprep.subr.mxu0 0.0
  %638 = vmatpush1.msra.mxu0 0.0
  %639 = vmatprep.subr.mxu0 0.0
  %640 = vmatpush1.msra.mxu0 0.0
  %641 = vmatprep.subr.mxu0 0.0
  %642 = vmatpush1.msra.mxu0 0.0
  %643 = vmatprep.mubr.f32.mxu0 0.0
  %644 = vmatmul.mubr.f32.gmra.mrb[0].mxu0 %v424
  %v645 = vpop.f32.mrb[0].mxu0
  %v646 = vadd.f32 %v571, %v645
  %v647 = vpop.f32.mrb[0].mxu0
  %648 = vmatprep.mubr.f32.mxu0 0.0
  %649 = vmatmul.mubr.f32.gmra.mrb[0].mxu0 %v427
  %v650 = vpop.f32.mrb[0].mxu0
  %v651 = vadd.f32 %v576, %v650
  %v652 = vpop.f32.mrb[0].mxu0
  %653 = vdwg.mxu0
  %654 = vrot.lane.b32.xlu0 %v11, 104
  %v655 = vpop.permute.xlu0 %654
  %656 = vrot.lane.b32.xlu0 %v20, 104
  %v657 = vpop.permute.xlu0 %656
  %v658 = vsel %vm88, %v655, 0
  %v660 = vsel %vm88, %v657, 0
  %662 = vmatprep.subr.mxu0 0.0
  %663 = vmatpush1.msra.mxu0 %v646
  %664 = vmatprep.subr.mxu0 0.0
  %665 = vmatpush1.msra.mxu0 %v651
  %666 = vmatprep.subr.mxu0 0.0
  %667 = vmatpush1.msra.mxu0 0.0
  %668 = vmatprep.subr.mxu0 0.0
  %669 = vmatpush1.msra.mxu0 0.0
  %670 = vmatprep.subr.mxu0 0.0
  %671 = vmatpush1.msra.mxu0 0.0
  %672 = vmatprep.subr.mxu0 0.0
  %673 = vmatpush1.msra.mxu0 0.0
  %674 = vmatprep.subr.mxu0 0.0
  %675 = vmatpush1.msra.mxu0 0.0
  %676 = vmatprep.subr.mxu0 0.0
  %677 = vmatpush1.msra.mxu0 0.0
  %678 = vmatprep.subr.mxu0 0.0
  %679 = vmatpush1.msra.mxu0 0.0
  %680 = vmatprep.subr.mxu0 0.0
  %681 = vmatpush1.msra.mxu0 0.0
  %682 = vmatprep.subr.mxu0 0.0
  %683 = vmatpush1.msra.mxu0 0.0
  %684 = vmatprep.subr.mxu0 0.0
  %685 = vmatpush1.msra.mxu0 0.0
  %686 = vmatprep.subr.mxu0 0.0
  %687 = vmatpush1.msra.mxu0 0.0
  %688 = vmatprep.subr.mxu0 0.0
  %689 = vmatpush1.msra.mxu0 0.0
  %690 = vmatprep.subr.mxu0 0.0
  %691 = vmatpush1.msra.mxu0 0.0
  %692 = vmatprep.subr.mxu0 0.0
  %693 = vmatpush1.msra.mxu0 0.0
  %694 = vmatprep.subr.mxu0 0.0
  %695 = vmatpush1.msra.mxu0 0.0
  %696 = vmatprep.subr.mxu0 0.0
  %697 = vmatpush1.msra.mxu0 0.0
  %698 = vmatprep.subr.mxu0 0.0
  %699 = vmatpush1.msra.mxu0 0.0
  %700 = vmatprep.subr.mxu0 0.0
  %701 = vmatpush1.msra.mxu0 0.0
  %702 = vmatprep.subr.mxu0 0.0
  %703 = vmatpush1.msra.mxu0 0.0
  %704 = vmatprep.subr.mxu0 0.0
  %705 = vmatpush1.msra.mxu0 0.0
  %706 = vmatprep.subr.mxu0 0.0
  %707 = vmatpush1.msra.mxu0 0.0
  %708 = vmatprep.subr.mxu0 0.0
  %709 = vmatpush1.msra.mxu0 0.0
  %710 = vmatprep.subr.mxu0 0.0
  %711 = vmatpush1.msra.mxu0 0.0
  %712 = vmatprep.subr.mxu0 0.0
  %713 = vmatpush1.msra.mxu0 0.0
  %714 = vmatprep.subr.mxu0 0.0
  %715 = vmatpush1.msra.mxu0 0.0
  %716 = vmatprep.subr.mxu0 0.0
  %717 = vmatpush1.msra.mxu0 0.0
  %718 = vmatprep.subr.mxu0 0.0
  %719 = vmatpush1.msra.mxu0 0.0
  %720 = vmatprep.subr.mxu0 0.0
  %721 = vmatpush1.msra.mxu0 0.0
  %722 = vmatprep.subr.mxu0 0.0
  %723 = vmatpush1.msra.mxu0 0.0
  %724 = vmatprep.subr.mxu0 0.0
  %725 = vmatpush1.msra.mxu0 0.0
  %726 = vmatprep.mubr.f32.mxu0 0.0
  %727 = vmatmul.mubr.f32.gmra.mrb[0].mxu0 %v658
  %v728 = vpop.f32.mrb[0].mxu0
  %v729 = vadd.f32 0.0, %v728
  %v730 = vpop.f32.mrb[0].mxu0
  %731 = vmatprep.mubr.f32.mxu0 0.0
  %732 = vmatmul.mubr.f32.gmra.mrb[0].mxu0 %v660
  %v733 = vpop.f32.mrb[0].mxu0
  %v734 = vadd.f32 0.0, %v733
  %v735 = vpop.f32.mrb[0].mxu0
  %736 = vdwg.mxu0
  %v737 = vld [vmem:[%s1 + $0x780] sm:$0xff]
  %v738 = vld [vmem:[%s1 + $0x788] sm:$0xff]
  %v739 = vld [vmem:[%s1 + $0x790] sm:$0xff]
  %v740 = vld [vmem:[%s1 + $0x798] sm:$0xff]
  %v741 = vld [vmem:[%s1 + $0x7a0] sm:$0xff]
  %v742 = vld [vmem:[%s1 + $0x7a8] sm:$0xff]
  %v743 = vld [vmem:[%s1 + $0x7b0] sm:$0xff]
  %v744 = vld [vmem:[%s1 + $0x7b8] sm:$0xff]
  %v745 = vld [vmem:[%s1 + $0x7c0] sm:$0xff]
  %v747 = vsel %vm79, %v729, 0
  %v750 = vsel %vm79, %v734, 0
  %752 = vmatprep.subr.mxu0 0.0
  %753 = vmatpush1.msra.mxu0 %v737
  %754 = vmatprep.subr.mxu0 0.0
  %755 = vmatpush1.msra.mxu0 %v738
  %756 = vmatprep.subr.mxu0 0.0
  %757 = vmatpush1.msra.mxu0 %v739
  %758 = vmatprep.subr.mxu0 0.0
  %759 = vmatpush1.msra.mxu0 %v740
  %760 = vmatprep.subr.mxu0 0.0
  %761 = vmatpush1.msra.mxu0 %v741
  %762 = vmatprep.subr.mxu0 0.0
  %763 = vmatpush1.msra.mxu0 %v742
  %764 = vmatprep.subr.mxu0 0.0
  %765 = vmatpush1.msra.mxu0 %v743
  %766 = vmatprep.subr.mxu0 0.0
  %767 = vmatpush1.msra.mxu0 %v744
  %768 = vmatprep.subr.mxu0 0.0
  %769 = vmatpush1.msra.mxu0 %v745
  %770 = vmatprep.subr.mxu0 0.0
  %771 = vmatpush1.msra.mxu0 0.0
  %772 = vmatprep.subr.mxu0 0.0
  %773 = vmatpush1.msra.mxu0 0.0
  %774 = vmatprep.subr.mxu0 0.0
  %775 = vmatpush1.msra.mxu0 0.0
  %776 = vmatprep.subr.mxu0 0.0
  %777 = vmatpush1.msra.mxu0 0.0
  %778 = vmatprep.subr.mxu0 0.0
  %779 = vmatpush1.msra.mxu0 0.0
  %780 = vmatprep.subr.mxu0 0.0
  %781 = vmatpush1.msra.mxu0 0.0
  %782 = vmatprep.subr.mxu0 0.0
  %783 = vmatpush1.msra.mxu0 0.0
  %784 = vmatprep.subr.mxu0 0.0
  %785 = vmatpush1.msra.mxu0 0.0
  %786 = vmatprep.subr.mxu0 0.0
  %787 = vmatpush1.msra.mxu0 0.0
  %788 = vmatprep.subr.mxu0 0.0
  %789 = vmatpush1.msra.mxu0 0.0
  %790 = vmatprep.subr.mxu0 0.0
  %791 = vmatpush1.msra.mxu0 0.0
  %792 = vmatprep.subr.mxu0 0.0
  %793 = vmatpush1.msra.mxu0 0.0
  %794 = vmatprep.subr.mxu0 0.0
  %795 = vmatpush1.msra.mxu0 0.0
  %796 = vmatprep.subr.mxu0 0.0
  %797 = vmatpush1.msra.mxu0 0.0
  %798 = vmatprep.subr.mxu0 0.0
  %799 = vmatpush1.msra.mxu0 0.0
  %800 = vmatprep.subr.mxu0 0.0
  %801 = vmatpush1.msra.mxu0 0.0
  %802 = vmatprep.subr.mxu0 0.0
  %803 = vmatpush1.msra.mxu0 0.0
  %804 = vmatprep.subr.mxu0 0.0
  %805 = vmatpush1.msra.mxu0 0.0
  %806 = vmatprep.subr.mxu0 0.0
  %807 = vmatpush1.msra.mxu0 0.0
  %808 = vmatprep.subr.mxu0 0.0
  %809 = vmatpush1.msra.mxu0 0.0
  %810 = vmatprep.subr.mxu0 0.0
  %811 = vmatpush1.msra.mxu0 0.0
  %812 = vmatprep.subr.mxu0 0.0
  %813 = vmatpush1.msra.mxu0 0.0
  %814 = vmatprep.subr.mxu0 0.0
  %815 = vmatpush1.msra.mxu0 0.0
  %816 = vmatprep.mubr.f32.mxu0 0.0
  %817 = vmatmul.mubr.f32.gmra.mrb[0].mxu0 %v747
  %v818 = vpop.f32.mrb[0].mxu0
  %v819 = vadd.f32 0.0, %v818
  %v820 = vpop.f32.mrb[0].mxu0
  %821 = vmatprep.mubr.f32.mxu0 0.0
  %822 = vmatmul.mubr.f32.gmra.mrb[0].mxu0 %v750
  %v823 = vpop.f32.mrb[0].mxu0
  %v824 = vadd.f32 0.0, %v823
  %v825 = vpop.f32.mrb[0].mxu0
  %826 = vdwg.mxu0
  %v827 = vld [vmem:[%s1 + $0x7c8] sm:$0xff]
  %v828 = vld [vmem:[%s1 + $0x7d0] sm:$0xff]
  %v829 = vld [vmem:[%s1 + $0x7d8] sm:$0xff]
  %v830 = vld [vmem:[%s1 + $0x7e0] sm:$0xff]
  %v831 = vld [vmem:[%s1 + $0x7e8] sm:$0xff]
  %v832 = vld [vmem:[%s1 + $0x7f0] sm:$0xff]
  %v833 = vld [vmem:[%s1 + $0x7f8] sm:$0xff]
  %v834 = vld [vmem:[%s1 + $0x800] sm:$0xff]
  %v835 = vld [vmem:[%s1 + $0x808] sm:$0xff]
  %836 = vmatprep.subr.mxu0 0.0
  %837 = vmatpush1.msra.mxu0 %v827
  %838 = vmatprep.subr.mxu0 0.0
  %839 = vmatpush1.msra.mxu0 %v828
  %840 = vmatprep.subr.mxu0 0.0
  %841 = vmatpush1.msra.mxu0 %v829
  %842 = vmatprep.subr.mxu0 0.0
  %843 = vmatpush1.msra.mxu0 %v830
  %844 = vmatprep.subr.mxu0 0.0
  %845 = vmatpush1.msra.mxu0 %v831
  %846 = vmatprep.subr.mxu0 0.0
  %847 = vmatpush1.msra.mxu0 %v832
  %848 = vmatprep.subr.mxu0 0.0
  %849 = vmatpush1.msra.mxu0 %v833
  %850 = vmatprep.subr.mxu0 0.0
  %851 = vmatpush1.msra.mxu0 %v834
  %852 = vmatprep.subr.mxu0 0.0
  %853 = vmatpush1.msra.mxu0 %v835
  %854 = vmatprep.subr.mxu0 0.0
  %855 = vmatpush1.msra.mxu0 0.0
  %856 = vmatprep.subr.mxu0 0.0
  %857 = vmatpush1.msra.mxu0 0.0
  %858 = vmatprep.subr.mxu0 0.0
  %859 = vmatpush1.msra.mxu0 0.0
  %860 = vmatprep.subr.mxu0 0.0
  %861 = vmatpush1.msra.mxu0 0.0
  %862 = vmatprep.subr.mxu0 0.0
  %863 = vmatpush1.msra.mxu0 0.0
  %864 = vmatprep.subr.mxu0 0.0
  %865 = vmatpush1.msra.mxu0 0.0
  %866 = vmatprep.subr.mxu0 0.0
  %867 = vmatpush1.msra.mxu0 0.0
  %868 = vmatprep.subr.mxu0 0.0
  %869 = vmatpush1.msra.mxu0 0.0
  %870 = vmatprep.subr.mxu0 0.0
  %871 = vmatpush1.msra.mxu0 0.0
  %872 = vmatprep.subr.mxu0 0.0
  %873 = vmatpush1.msra.mxu0 0.0
  %874 = vmatprep.subr.mxu0 0.0
  %875 = vmatpush1.msra.mxu0 0.0
  %876 = vmatprep.subr.mxu0 0.0
  %877 = vmatpush1.msra.mxu0 0.0
  %878 = vmatprep.subr.mxu0 0.0
  %879 = vmatpush1.msra.mxu0 0.0
  %880 = vmatprep.subr.mxu0 0.0
  %881 = vmatpush1.msra.mxu0 0.0
  %882 = vmatprep.subr.mxu0 0.0
  %883 = vmatpush1.msra.mxu0 0.0
  %884 = vmatprep.subr.mxu0 0.0
  %885 = vmatpush1.msra.mxu0 0.0
  %886 = vmatprep.subr.mxu0 0.0
  %887 = vmatpush1.msra.mxu0 0.0
  %888 = vmatprep.subr.mxu0 0.0
  %889 = vmatpush1.msra.mxu0 0.0
  %890 = vmatprep.subr.mxu0 0.0
  %891 = vmatpush1.msra.mxu0 0.0
  %892 = vmatprep.subr.mxu0 0.0
  %893 = vmatpush1.msra.mxu0 0.0
  %894 = vmatprep.subr.mxu0 0.0
  %895 = vmatpush1.msra.mxu0 0.0
  %896 = vmatprep.subr.mxu0 0.0
  %897 = vmatpush1.msra.mxu0 0.0
  %898 = vmatprep.subr.mxu0 0.0
  %899 = vmatpush1.msra.mxu0 0.0
  %900 = vmatprep.mubr.f32.mxu0 0.0
  %901 = vmatmul.mubr.f32.gmra.mrb[0].mxu0 %v747
  %v902 = vpop.f32.mrb[0].mxu0
  %v903 = vadd.f32 0.0, %v902
  %v904 = vpop.f32.mrb[0].mxu0
  %905 = vmatprep.mubr.f32.mxu0 0.0
  %906 = vmatmul.mubr.f32.gmra.mrb[0].mxu0 %v750
  %v907 = vpop.f32.mrb[0].mxu0
  %v908 = vadd.f32 0.0, %v907
  %v909 = vpop.f32.mrb[0].mxu0
  %910 = vdwg.mxu0
  %v911 = vld [vmem:[%s1 + $0x810] sm:$0xff]
  %v912 = vld [vmem:[%s1 + $0x818] sm:$0xff]
  %v913 = vld [vmem:[%s1 + $0x820] sm:$0xff]
  %v914 = vld [vmem:[%s1 + $0x828] sm:$0xff]
  %v915 = vld [vmem:[%s1 + $0x830] sm:$0xff]
  %v916 = vld [vmem:[%s1 + $0x838] sm:$0xff]
  %v917 = vld [vmem:[%s1 + $0x840] sm:$0xff]
  %v918 = vld [vmem:[%s1 + $0x848] sm:$0xff]
  %v919 = vld [vmem:[%s1 + $0x850] sm:$0xff]
  %920 = vmatprep.subr.mxu0 0.0
  %921 = vmatpush1.msra.mxu0 %v911
  %922 = vmatprep.subr.mxu0 0.0
  %923 = vmatpush1.msra.mxu0 %v912
  %924 = vmatprep.subr.mxu0 0.0
  %925 = vmatpush1.msra.mxu0 %v913
  %926 = vmatprep.subr.mxu0 0.0
  %927 = vmatpush1.msra.mxu0 %v914
  %928 = vmatprep.subr.mxu0 0.0
  %929 = vmatpush1.msra.mxu0 %v915
  %930 = vmatprep.subr.mxu0 0.0
  %931 = vmatpush1.msra.mxu0 %v916
  %932 = vmatprep.subr.mxu0 0.0
  %933 = vmatpush1.msra.mxu0 %v917
  %934 = vmatprep.subr.mxu0 0.0
  %935 = vmatpush1.msra.mxu0 %v918
  %936 = vmatprep.subr.mxu0 0.0
  %937 = vmatpush1.msra.mxu0 %v919
  %938 = vmatprep.subr.mxu0 0.0
  %939 = vmatpush1.msra.mxu0 0.0
  %940 = vmatprep.subr.mxu0 0.0
  %941 = vmatpush1.msra.mxu0 0.0
  %942 = vmatprep.subr.mxu0 0.0
  %943 = vmatpush1.msra.mxu0 0.0
  %944 = vmatprep.subr.mxu0 0.0
  %945 = vmatpush1.msra.mxu0 0.0
  %946 = vmatprep.subr.mxu0 0.0
  %947 = vmatpush1.msra.mxu0 0.0
  %948 = vmatprep.subr.mxu0 0.0
  %949 = vmatpush1.msra.mxu0 0.0
  %950 = vmatprep.subr.mxu0 0.0
  %951 = vmatpush1.msra.mxu0 0.0
  %952 = vmatprep.subr.mxu0 0.0
  %953 = vmatpush1.msra.mxu0 0.0
  %954 = vmatprep.subr.mxu0 0.0
  %955 = vmatpush1.msra.mxu0 0.0
  %956 = vmatprep.subr.mxu0 0.0
  %957 = vmatpush1.msra.mxu0 0.0
  %958 = vmatprep.subr.mxu0 0.0
  %959 = vmatpush1.msra.mxu0 0.0
  %960 = vmatprep.subr.mxu0 0.0
  %961 = vmatpush1.msra.mxu0 0.0
  %962 = vmatprep.subr.mxu0 0.0
  %963 = vmatpush1.msra.mxu0 0.0
  %964 = vmatprep.subr.mxu0 0.0
  %965 = vmatpush1.msra.mxu0 0.0
  %966 = vmatprep.subr.mxu0 0.0
  %967 = vmatpush1.msra.mxu0 0.0
  %968 = vmatprep.subr.mxu0 0.0
  %969 = vmatpush1.msra.mxu0 0.0
  %970 = vmatprep.subr.mxu0 0.0
  %971 = vmatpush1.msra.mxu0 0.0
  %972 = vmatprep.subr.mxu0 0.0
  %973 = vmatpush1.msra.mxu0 0.0
  %974 = vmatprep.subr.mxu0 0.0
  %975 = vmatpush1.msra.mxu0 0.0
  %976 = vmatprep.subr.mxu0 0.0
  %977 = vmatpush1.msra.mxu0 0.0
  %978 = vmatprep.subr.mxu0 0.0
  %979 = vmatpush1.msra.mxu0 0.0
  %980 = vmatprep.subr.mxu0 0.0
  %981 = vmatpush1.msra.mxu0 0.0
  %982 = vmatprep.subr.mxu0 0.0
  %983 = vmatpush1.msra.mxu0 0.0
  %984 = vmatprep.mubr.f32.mxu0 0.0
  %985 = vmatmul.mubr.f32.gmra.mrb[0].mxu0 %v747
  %v986 = vpop.f32.mrb[0].mxu0
  %v987 = vadd.f32 0.0, %v986
  %v988 = vpop.f32.mrb[0].mxu0
  %989 = vmatprep.mubr.f32.mxu0 0.0
  %990 = vmatmul.mubr.f32.gmra.mrb[0].mxu0 %v750
  %v991 = vpop.f32.mrb[0].mxu0
  %v992 = vadd.f32 0.0, %v991
  %v993 = vpop.f32.mrb[0].mxu0
  %994 = vdwg.mxu0
  %995 = vrot.lane.b32.xlu0 %v11, 88
  %v996 = vpop.permute.xlu0 %995
  %997 = vrot.lane.b32.xlu0 %v20, 88
  %v998 = vpop.permute.xlu0 %997
  %vm1001 = vcmask 64512
  %v1003 = vsel %vm1001, %v819, 0
  %v1006 = vsel %vm1001, %v824, 0
  %v1009 = vsel %vm1001, %v903, 0
  %v1012 = vsel %vm1001, %v908, 0
  %1014 = vmatprep.subr.mxu0 0.0
  %1015 = vmatpush1.xpose.msra.mxu0 %v1009
  %1016 = vmatprep.subr.mxu0 0.0
  %1017 = vmatpush1.xpose.msra.mxu0 %v1012
  %1018 = vmatprep.subr.mxu0 0.0
  %1019 = vmatpush1.xpose.msra.mxu0 0.0
  %1020 = vmatprep.subr.mxu0 0.0
  %1021 = vmatpush1.xpose.msra.mxu0 0.0
  %1022 = vmatprep.subr.mxu0 0.0
  %1023 = vmatpush1.xpose.msra.mxu0 0.0
  %1024 = vmatprep.subr.mxu0 0.0
  %1025 = vmatpush1.xpose.msra.mxu0 0.0
  %1026 = vmatprep.subr.mxu0 0.0
  %1027 = vmatpush1.xpose.msra.mxu0 0.0
  %1028 = vmatprep.subr.mxu0 0.0
  %1029 = vmatpush1.xpose.msra.mxu0 0.0
  %1030 = vmatprep.subr.mxu0 0.0
  %1031 = vmatpush1.xpose.msra.mxu0 0.0
  %1032 = vmatprep.subr.mxu0 0.0
  %1033 = vmatpush1.xpose.msra.mxu0 0.0
  %1034 = vmatprep.subr.mxu0 0.0
  %1035 = vmatpush1.xpose.msra.mxu0 0.0
  %1036 = vmatprep.subr.mxu0 0.0
  %1037 = vmatpush1.xpose.msra.mxu0 0.0
  %1038 = vmatprep.subr.mxu0 0.0
  %1039 = vmatpush1.xpose.msra.mxu0 0.0
  %1040 = vmatprep.subr.mxu0 0.0
  %1041 = vmatpush1.xpose.msra.mxu0 0.0
  %1042 = vmatprep.subr.mxu0 0.0
  %1043 = vmatpush1.xpose.msra.mxu0 0.0
  %1044 = vmatprep.subr.mxu0 0.0
  %1045 = vmatpush1.xpose.msra.mxu0 0.0
  %1046 = vmatprep.subr.mxu0 0.0
  %1047 = vmatpush1.xpose.msra.mxu0 0.0
  %1048 = vmatprep.subr.mxu0 0.0
  %1049 = vmatpush1.xpose.msra.mxu0 0.0
  %1050 = vmatprep.subr.mxu0 0.0
  %1051 = vmatpush1.xpose.msra.mxu0 0.0
  %1052 = vmatprep.subr.mxu0 0.0
  %1053 = vmatpush1.xpose.msra.mxu0 0.0
  %1054 = vmatprep.subr.mxu0 0.0
  %1055 = vmatpush1.xpose.msra.mxu0 0.0
  %1056 = vmatprep.subr.mxu0 0.0
  %1057 = vmatpush1.xpose.msra.mxu0 0.0
  %1058 = vmatprep.subr.mxu0 0.0
  %1059 = vmatpush1.xpose.msra.mxu0 0.0
  %1060 = vmatprep.subr.mxu0 0.0
  %1061 = vmatpush1.xpose.msra.mxu0 0.0
  %1062 = vmatprep.subr.mxu0 0.0
  %1063 = vmatpush1.xpose.msra.mxu0 0.0
  %1064 = vmatprep.subr.mxu0 0.0
  %1065 = vmatpush1.xpose.msra.mxu0 0.0
  %1066 = vmatprep.subr.mxu0 0.0
  %1067 = vmatpush1.xpose.msra.mxu0 0.0
  %1068 = vmatprep.subr.mxu0 0.0
  %1069 = vmatpush1.xpose.msra.mxu0 0.0
  %1070 = vmatprep.subr.mxu0 0.0
  %1071 = vmatpush1.xpose.msra.mxu0 0.0
  %1072 = vmatprep.subr.mxu0 0.0
  %1073 = vmatpush1.xpose.msra.mxu0 0.0
  %1074 = vmatprep.subr.mxu0 0.0
  %1075 = vmatpush1.xpose.msra.mxu0 0.0
  %1076 = vmatprep.subr.mxu0 0.0
  %1077 = vmatpush1.xpose.msra.mxu0 0.0
  %1078 = vmatprep.mubr.f32.mxu0 0.0
  %1079 = vmatmul.mubr.f32.gmra.mrb[0].mxu0 %v1003
  %v1080 = vpop.f32.mrb[0].mxu0
  %v1081 = vadd.f32 %v996, %v1080
  %v1082 = vpop.f32.mrb[0].mxu0
  %1083 = vmatprep.mubr.f32.mxu0 0.0
  %1084 = vmatmul.mubr.f32.gmra.mrb[0].mxu0 %v1006
  %v1085 = vpop.f32.mrb[0].mxu0
  %v1086 = vadd.f32 %v998, %v1085
  %v1087 = vpop.f32.mrb[0].mxu0
  %1088 = vdwg.mxu0
  %v1089 = vsel %vm88, %v1081, -inf
  %1090 = vmax.xlane.f32.xlu0 %v1089
  %v1091 = vpop.xlane.xlu0 %1090
  %v1092 = vsel %vm88, %v1086, -inf
  %1093 = vmax.xlane.f32.xlu0 %v1092
  %v1094 = vpop.xlane.xlu0 %1093
  %v1095 = vsub.f32 %v1081, %v1091
  %v1096 = vsub.f32 %v1086, %v1094
  %v1097 = vmul.f32 %v1095, 1.442695
  %v1098 = vpow.pop %v1097
  %v1099 = vmul.f32 %v1096, 1.442695
  %v1100 = vpow.pop %v1099
  %v1101 = vsel %vm88, %v1098, 0.0
  %1102 = vadd.xlane.f32.xlu0 %v1101
  %v1103 = vpop.xlane.xlu0 %1102
  %v1104 = vsel %vm88, %v1100, 0.0
  %1105 = vadd.xlane.f32.xlu0 %v1104
  %v1106 = vpop.xlane.xlu0 %1105
  %v1107 = vrcp.pop %v1103
  %v1108 = vrcp.pop %v1106
  %v1109 = vmul.f32 %v1098, %v1107
  %v1110 = vmul.f32 %v1100, %v1108
  %v1112 = vsel %vm88, %v1109, 0
  %v1115 = vsel %vm88, %v1110, 0
  %1117 = vmatprep.subr.mxu0 0.0
  %1118 = vmatpush1.msra.mxu0 %v987
  %1119 = vmatprep.subr.mxu0 0.0
  %1120 = vmatpush1.msra.mxu0 %v992
  %1121 = vmatprep.subr.mxu0 0.0
  %1122 = vmatpush1.msra.mxu0 0.0
  %1123 = vmatprep.subr.mxu0 0.0
  %1124 = vmatpush1.msra.mxu0 0.0
  %1125 = vmatprep.subr.mxu0 0.0
  %1126 = vmatpush1.msra.mxu0 0.0
  %1127 = vmatprep.subr.mxu0 0.0
  %1128 = vmatpush1.msra.mxu0 0.0
  %1129 = vmatprep.subr.mxu0 0.0
  %1130 = vmatpush1.msra.mxu0 0.0
  %1131 = vmatprep.subr.mxu0 0.0
  %1132 = vmatpush1.msra.mxu0 0.0
  %1133 = vmatprep.subr.mxu0 0.0
  %1134 = vmatpush1.msra.mxu0 0.0
  %1135 = vmatprep.subr.mxu0 0.0
  %1136 = vmatpush1.msra.mxu0 0.0
  %1137 = vmatprep.subr.mxu0 0.0
  %1138 = vmatpush1.msra.mxu0 0.0
  %1139 = vmatprep.subr.mxu0 0.0
  %1140 = vmatpush1.msra.mxu0 0.0
  %1141 = vmatprep.subr.mxu0 0.0
  %1142 = vmatpush1.msra.mxu0 0.0
  %1143 = vmatprep.subr.mxu0 0.0
  %1144 = vmatpush1.msra.mxu0 0.0
  %1145 = vmatprep.subr.mxu0 0.0
  %1146 = vmatpush1.msra.mxu0 0.0
  %1147 = vmatprep.subr.mxu0 0.0
  %1148 = vmatpush1.msra.mxu0 0.0
  %1149 = vmatprep.subr.mxu0 0.0
  %1150 = vmatpush1.msra.mxu0 0.0
  %1151 = vmatprep.subr.mxu0 0.0
  %1152 = vmatpush1.msra.mxu0 0.0
  %1153 = vmatprep.subr.mxu0 0.0
  %1154 = vmatpush1.msra.mxu0 0.0
  %1155 = vmatprep.subr.mxu0 0.0
  %1156 = vmatpush1.msra.mxu0 0.0
  %1157 = vmatprep.subr.mxu0 0.0
  %1158 = vmatpush1.msra.mxu0 0.0
  %1159 = vmatprep.subr.mxu0 0.0
  %1160 = vmatpush1.msra.mxu0 0.0
  %1161 = vmatprep.subr.mxu0 0.0
  %1162 = vmatpush1.msra.mxu0 0.0
  %1163 = vmatprep.subr.mxu0 0.0
  %1164 = vmatpush1.msra.mxu0 0.0
  %1165 = vmatprep.subr.mxu0 0.0
  %1166 = vmatpush1.msra.mxu0 0.0
  %1167 = vmatprep.subr.mxu0 0.0
  %1168 = vmatpush1.msra.mxu0 0.0
  %1169 = vmatprep.subr.mxu0 0.0
  %1170 = vmatpush1.msra.mxu0 0.0
  %1171 = vmatprep.subr.mxu0 0.0
  %1172 = vmatpush1.msra.mxu0 0.0
  %1173 = vmatprep.subr.mxu0 0.0
  %1174 = vmatpush1.msra.mxu0 0.0
  %1175 = vmatprep.subr.mxu0 0.0
  %1176 = vmatpush1.msra.mxu0 0.0
  %1177 = vmatprep.subr.mxu0 0.0
  %1178 = vmatpush1.msra.mxu0 0.0
  %1179 = vmatprep.subr.mxu0 0.0
  %1180 = vmatpush1.msra.mxu0 0.0
  %1181 = vmatprep.mubr.f32.mxu0 0.0
  %1182 = vmatmul.mubr.f32.gmra.mrb[0].mxu0 %v1112
  %v1183 = vpop.f32.mrb[0].mxu0
  %v1184 = vadd.f32 0.0, %v1183
  %v1185 = vpop.f32.mrb[0].mxu0
  %1186 = vmatprep.mubr.f32.mxu0 0.0
  %1187 = vmatmul.mubr.f32.gmra.mrb[0].mxu0 %v1115
  %v1188 = vpop.f32.mrb[0].mxu0
  %v1189 = vadd.f32 0.0, %v1188
  %v1190 = vpop.f32.mrb[0].mxu0
  %1191 = vdwg.mxu0
  %1192 = vrot.lane.b32.xlu0 %v819, 120
  %v1193 = vpop.permute.xlu0 %1192
  %1194 = vrot.lane.b32.xlu0 %v824, 120
  %v1195 = vpop.permute.xlu0 %1194
  %1196 = vrot.lane.b32.xlu0 %v903, 120
  %v1197 = vpop.permute.xlu0 %1196
  %1198 = vrot.lane.b32.xlu0 %v908, 120
  %v1199 = vpop.permute.xlu0 %1198
  %v1200 = vsel %vm1001, %v1193, 0
  %v1202 = vsel %vm1001, %v1195, 0
  %v1204 = vsel %vm1001, %v1197, 0
  %v1206 = vsel %vm1001, %v1199, 0
  %1208 = vmatprep.subr.mxu0 0.0
  %1209 = vmatpush1.xpose.msra.mxu0 %v1204
  %1210 = vmatprep.subr.mxu0 0.0
  %1211 = vmatpush1.xpose.msra.mxu0 %v1206
  %1212 = vmatprep.subr.mxu0 0.0
  %1213 = vmatpush1.xpose.msra.mxu0 0.0
  %1214 = vmatprep.subr.mxu0 0.0
  %1215 = vmatpush1.xpose.msra.mxu0 0.0
  %1216 = vmatprep.subr.mxu0 0.0
  %1217 = vmatpush1.xpose.msra.mxu0 0.0
  %1218 = vmatprep.subr.mxu0 0.0
  %1219 = vmatpush1.xpose.msra.mxu0 0.0
  %1220 = vmatprep.subr.mxu0 0.0
  %1221 = vmatpush1.xpose.msra.mxu0 0.0
  %1222 = vmatprep.subr.mxu0 0.0
  %1223 = vmatpush1.xpose.msra.mxu0 0.0
  %1224 = vmatprep.subr.mxu0 0.0
  %1225 = vmatpush1.xpose.msra.mxu0 0.0
  %1226 = vmatprep.subr.mxu0 0.0
  %1227 = vmatpush1.xpose.msra.mxu0 0.0
  %1228 = vmatprep.subr.mxu0 0.0
  %1229 = vmatpush1.xpose.msra.mxu0 0.0
  %1230 = vmatprep.subr.mxu0 0.0
  %1231 = vmatpush1.xpose.msra.mxu0 0.0
  %1232 = vmatprep.subr.mxu0 0.0
  %1233 = vmatpush1.xpose.msra.mxu0 0.0
  %1234 = vmatprep.subr.mxu0 0.0
  %1235 = vmatpush1.xpose.msra.mxu0 0.0
  %1236 = vmatprep.subr.mxu0 0.0
  %1237 = vmatpush1.xpose.msra.mxu0 0.0
  %1238 = vmatprep.subr.mxu0 0.0
  %1239 = vmatpush1.xpose.msra.mxu0 0.0
  %1240 = vmatprep.subr.mxu0 0.0
  %1241 = vmatpush1.xpose.msra.mxu0 0.0
  %1242 = vmatprep.subr.mxu0 0.0
  %1243 = vmatpush1.xpose.msra.mxu0 0.0
  %1244 = vmatprep.subr.mxu0 0.0
  %1245 = vmatpush1.xpose.msra.mxu0 0.0
  %1246 = vmatprep.subr.mxu0 0.0
  %1247 = vmatpush1.xpose.msra.mxu0 0.0
  %1248 = vmatprep.subr.mxu0 0.0
  %1249 = vmatpush1.xpose.msra.mxu0 0.0
  %1250 = vmatprep.subr.mxu0 0.0
  %1251 = vmatpush1.xpose.msra.mxu0 0.0
  %1252 = vmatprep.subr.mxu0 0.0
  %1253 = vmatpush1.xpose.msra.mxu0 0.0
  %1254 = vmatprep.subr.mxu0 0.0
  %1255 = vmatpush1.xpose.msra.mxu0 0.0
  %1256 = vmatprep.subr.mxu0 0.0
  %1257 = vmatpush1.xpose.msra.mxu0 0.0
  %1258 = vmatprep.subr.mxu0 0.0
  %1259 = vmatpush1.xpose.msra.mxu0 0.0
  %1260 = vmatprep.subr.mxu0 0.0
  %1261 = vmatpush1.xpose.msra.mxu0 0.0
  %1262 = vmatprep.subr.mxu0 0.0
  %1263 = vmatpush1.xpose.msra.mxu0 0.0
  %1264 = vmatprep.subr.mxu0 0.0
  %1265 = vmatpush1.xpose.msra.mxu0 0.0
  %1266 = vmatprep.subr.mxu0 0.0
  %1267 = vmatpush1.xpose.msra.mxu0 0.0
  %1268 = vmatprep.subr.mxu0 0.0
  %1269 = vmatpush1.xpose.msra.mxu0 0.0
  %1270 = vmatprep.subr.mxu0 0.0
  %1271 = vmatpush1.xpose.msra.mxu0 0.0
  %1272 = vmatprep.mubr.f32.mxu0 0.0
  %1273 = vmatmul.mubr.f32.gmra.mrb[0].mxu0 %v1200
  %v1274 = vpop.f32.mrb[0].mxu0
  %v1275 = vadd.f32 %v996, %v1274
  %v1276 = vpop.f32.mrb[0].mxu0
  %1277 = vmatprep.mubr.f32.mxu0 0.0
  %1278 = vmatmul.mubr.f32.gmra.mrb[0].mxu0 %v1202
  %v1279 = vpop.f32.mrb[0].mxu0
  %v1280 = vadd.f32 %v998, %v1279
  %v1281 = vpop.f32.mrb[0].mxu0
  %1282 = vdwg.mxu0
  %v1283 = vsel %vm88, %v1275, -inf
  %1284 = vmax.xlane.f32.xlu0 %v1283
  %v1285 = vpop.xlane.xlu0 %1284
  %v1286 = vsel %vm88, %v1280, -inf
  %1287 = vmax.xlane.f32.xlu0 %v1286
  %v1288 = vpop.xlane.xlu0 %1287
  %v1289 = vsub.f32 %v1275, %v1285
  %v1290 = vsub.f32 %v1280, %v1288
  %v1291 = vmul.f32 %v1289, 1.442695
  %v1292 = vpow.pop %v1291
  %v1293 = vmul.f32 %v1290, 1.442695
  %v1294 = vpow.pop %v1293
  %v1295 = vsel %vm88, %v1292, 0.0
  %1296 = vadd.xlane.f32.xlu0 %v1295
  %v1297 = vpop.xlane.xlu0 %1296
  %v1298 = vsel %vm88, %v1294, 0.0
  %1299 = vadd.xlane.f32.xlu0 %v1298
  %v1300 = vpop.xlane.xlu0 %1299
  %v1301 = vrcp.pop %v1297
  %v1302 = vrcp.pop %v1300
  %v1303 = vmul.f32 %v1292, %v1301
  %v1304 = vmul.f32 %v1294, %v1302
  %1307 = vrot.lane.b32.xlu0 %v987, 120
  %v1308 = vpop.permute.xlu0 %1307
  %1309 = vrot.lane.b32.xlu0 %v992, 120
  %v1310 = vpop.permute.xlu0 %1309
  %v1314 = vsel %vm88, %v1303, 0
  %v1317 = vsel %vm88, %v1304, 0
  %1319 = vmatprep.subr.mxu0 0.0
  %1320 = vmatpush1.msra.mxu0 %v1308
  %1321 = vmatprep.subr.mxu0 0.0
  %1322 = vmatpush1.msra.mxu0 %v1310
  %1323 = vmatprep.subr.mxu0 0.0
  %1324 = vmatpush1.msra.mxu0 0.0
  %1325 = vmatprep.subr.mxu0 0.0
  %1326 = vmatpush1.msra.mxu0 0.0
  %1327 = vmatprep.subr.mxu0 0.0
  %1328 = vmatpush1.msra.mxu0 0.0
  %1329 = vmatprep.subr.mxu0 0.0
  %1330 = vmatpush1.msra.mxu0 0.0
  %1331 = vmatprep.subr.mxu0 0.0
  %1332 = vmatpush1.msra.mxu0 0.0
  %1333 = vmatprep.subr.mxu0 0.0
  %1334 = vmatpush1.msra.mxu0 0.0
  %1335 = vmatprep.subr.mxu0 0.0
  %1336 = vmatpush1.msra.mxu0 0.0
  %1337 = vmatprep.subr.mxu0 0.0
  %1338 = vmatpush1.msra.mxu0 0.0
  %1339 = vmatprep.subr.mxu0 0.0
  %1340 = vmatpush1.msra.mxu0 0.0
  %1341 = vmatprep.subr.mxu0 0.0
  %1342 = vmatpush1.msra.mxu0 0.0
  %1343 = vmatprep.subr.mxu0 0.0
  %1344 = vmatpush1.msra.mxu0 0.0
  %1345 = vmatprep.subr.mxu0 0.0
  %1346 = vmatpush1.msra.mxu0 0.0
  %1347 = vmatprep.subr.mxu0 0.0
  %1348 = vmatpush1.msra.mxu0 0.0
  %1349 = vmatprep.subr.mxu0 0.0
  %1350 = vmatpush1.msra.mxu0 0.0
  %1351 = vmatprep.subr.mxu0 0.0
  %1352 = vmatpush1.msra.mxu0 0.0
  %1353 = vmatprep.subr.mxu0 0.0
  %1354 = vmatpush1.msra.mxu0 0.0
  %1355 = vmatprep.subr.mxu0 0.0
  %1356 = vmatpush1.msra.mxu0 0.0
  %1357 = vmatprep.subr.mxu0 0.0
  %1358 = vmatpush1.msra.mxu0 0.0
  %1359 = vmatprep.subr.mxu0 0.0
  %1360 = vmatpush1.msra.mxu0 0.0
  %1361 = vmatprep.subr.mxu0 0.0
  %1362 = vmatpush1.msra.mxu0 0.0
  %1363 = vmatprep.subr.mxu0 0.0
  %1364 = vmatpush1.msra.mxu0 0.0
  %1365 = vmatprep.subr.mxu0 0.0
  %1366 = vmatpush1.msra.mxu0 0.0
  %1367 = vmatprep.subr.mxu0 0.0
  %1368 = vmatpush1.msra.mxu0 0.0
  %1369 = vmatprep.subr.mxu0 0.0
  %1370 = vmatpush1.msra.mxu0 0.0
  %1371 = vmatprep.subr.mxu0 0.0
  %1372 = vmatpush1.msra.mxu0 0.0
  %1373 = vmatprep.subr.mxu0 0.0
  %1374 = vmatpush1.msra.mxu0 0.0
  %1375 = vmatprep.subr.mxu0 0.0
  %1376 = vmatpush1.msra.mxu0 0.0
  %1377 = vmatprep.subr.mxu0 0.0
  %1378 = vmatpush1.msra.mxu0 0.0
  %1379 = vmatprep.subr.mxu0 0.0
  %1380 = vmatpush1.msra.mxu0 0.0
  %1381 = vmatprep.subr.mxu0 0.0
  %1382 = vmatpush1.msra.mxu0 0.0
  %1383 = vmatprep.mubr.f32.mxu0 0.0
  %1384 = vmatmul.mubr.f32.gmra.mrb[0].mxu0 %v1314
  %v1385 = vpop.f32.mrb[0].mxu0
  %v1386 = vadd.f32 0.0, %v1385
  %v1387 = vpop.f32.mrb[0].mxu0
  %1388 = vmatprep.mubr.f32.mxu0 0.0
  %1389 = vmatmul.mubr.f32.gmra.mrb[0].mxu0 %v1317
  %v1390 = vpop.f32.mrb[0].mxu0
  %v1391 = vadd.f32 0.0, %v1390
  %v1392 = vpop.f32.mrb[0].mxu0
  %1393 = vdwg.mxu0
  %1394 = vrot.lane.b32.xlu0 %v819, 112
  %v1395 = vpop.permute.xlu0 %1394
  %1396 = vrot.lane.b32.xlu0 %v824, 112
  %v1397 = vpop.permute.xlu0 %1396
  %1398 = vrot.lane.b32.xlu0 %v903, 112
  %v1399 = vpop.permute.xlu0 %1398
  %1400 = vrot.lane.b32.xlu0 %v908, 112
  %v1401 = vpop.permute.xlu0 %1400
  %v1402 = vsel %vm1001, %v1395, 0
  %v1404 = vsel %vm1001, %v1397, 0
  %v1406 = vsel %vm1001, %v1399, 0
  %v1408 = vsel %vm1001, %v1401, 0
  %1410 = vmatprep.subr.mxu0 0.0
  %1411 = vmatpush1.xpose.msra.mxu0 %v1406
  %1412 = vmatprep.subr.mxu0 0.0
  %1413 = vmatpush1.xpose.msra.mxu0 %v1408
  %1414 = vmatprep.subr.mxu0 0.0
  %1415 = vmatpush1.xpose.msra.mxu0 0.0
  %1416 = vmatprep.subr.mxu0 0.0
  %1417 = vmatpush1.xpose.msra.mxu0 0.0
  %1418 = vmatprep.subr.mxu0 0.0
  %1419 = vmatpush1.xpose.msra.mxu0 0.0
  %1420 = vmatprep.subr.mxu0 0.0
  %1421 = vmatpush1.xpose.msra.mxu0 0.0
  %1422 = vmatprep.subr.mxu0 0.0
  %1423 = vmatpush1.xpose.msra.mxu0 0.0
  %1424 = vmatprep.subr.mxu0 0.0
  %1425 = vmatpush1.xpose.msra.mxu0 0.0
  %1426 = vmatprep.subr.mxu0 0.0
  %1427 = vmatpush1.xpose.msra.mxu0 0.0
  %1428 = vmatprep.subr.mxu0 0.0
  %1429 = vmatpush1.xpose.msra.mxu0 0.0
  %1430 = vmatprep.subr.mxu0 0.0
  %1431 = vmatpush1.xpose.msra.mxu0 0.0
  %1432 = vmatprep.subr.mxu0 0.0
  %1433 = vmatpush1.xpose.msra.mxu0 0.0
  %1434 = vmatprep.subr.mxu0 0.0
  %1435 = vmatpush1.xpose.msra.mxu0 0.0
  %1436 = vmatprep.subr.mxu0 0.0
  %1437 = vmatpush1.xpose.msra.mxu0 0.0
  %1438 = vmatprep.subr.mxu0 0.0
  %1439 = vmatpush1.xpose.msra.mxu0 0.0
  %1440 = vmatprep.subr.mxu0 0.0
  %1441 = vmatpush1.xpose.msra.mxu0 0.0
  %1442 = vmatprep.subr.mxu0 0.0
  %1443 = vmatpush1.xpose.msra.mxu0 0.0
  %1444 = vmatprep.subr.mxu0 0.0
  %1445 = vmatpush1.xpose.msra.mxu0 0.0
  %1446 = vmatprep.subr.mxu0 0.0
  %1447 = vmatpush1.xpose.msra.mxu0 0.0
  %1448 = vmatprep.subr.mxu0 0.0
  %1449 = vmatpush1.xpose.msra.mxu0 0.0
  %1450 = vmatprep.subr.mxu0 0.0
  %1451 = vmatpush1.xpose.msra.mxu0 0.0
  %1452 = vmatprep.subr.mxu0 0.0
  %1453 = vmatpush1.xpose.msra.mxu0 0.0
  %1454 = vmatprep.subr.mxu0 0.0
  %1455 = vmatpush1.xpose.msra.mxu0 0.0
  %1456 = vmatprep.subr.mxu0 0.0
  %1457 = vmatpush1.xpose.msra.mxu0 0.0
  %1458 = vmatprep.subr.mxu0 0.0
  %1459 = vmatpush1.xpose.msra.mxu0 0.0
  %1460 = vmatprep.subr.mxu0 0.0
  %1461 = vmatpush1.xpose.msra.mxu0 0.0
  %1462 = vmatprep.subr.mxu0 0.0
  %1463 = vmatpush1.xpose.msra.mxu0 0.0
  %1464 = vmatprep.subr.mxu0 0.0
  %1465 = vmatpush1.xpose.msra.mxu0 0.0
  %1466 = vmatprep.subr.mxu0 0.0
  %1467 = vmatpush1.xpose.msra.mxu0 0.0
  %1468 = vmatprep.subr.mxu0 0.0
  %1469 = vmatpush1.xpose.msra.mxu0 0.0
  %1470 = vmatprep.subr.mxu0 0.0
  %1471 = vmatpush1.xpose.msra.mxu0 0.0
  %1472 = vmatprep.subr.mxu0 0.0
  %1473 = vmatpush1.xpose.msra.mxu0 0.0
  %1474 = vmatprep.mubr.f32.mxu0 0.0
  %1475 = vmatmul.mubr.f32.gmra.mrb[0].mxu0 %v1402
  %v1476 = vpop.f32.mrb[0].mxu0
  %v1477 = vadd.f32 %v996, %v1476
  %v1478 = vpop.f32.mrb[0].mxu0
  %1479 = vmatprep.mubr.f32.mxu0 0.0
  %1480 = vmatmul.mubr.f32.gmra.mrb[0].mxu0 %v1404
  %v1481 = vpop.f32.mrb[0].mxu0
  %v1482 = vadd.f32 %v998, %v1481
  %v1483 = vpop.f32.mrb[0].mxu0
  %1484 = vdwg.mxu0
  %v1485 = vsel %vm88, %v1477, -inf
  %1486 = vmax.xlane.f32.xlu0 %v1485
  %v1487 = vpop.xlane.xlu0 %1486
  %v1488 = vsel %vm88, %v1482, -inf
  %1489 = vmax.xlane.f32.xlu0 %v1488
  %v1490 = vpop.xlane.xlu0 %1489
  %v1491 = vsub.f32 %v1477, %v1487
  %v1492 = vsub.f32 %v1482, %v1490
  %v1493 = vmul.f32 %v1491, 1.442695
  %v1494 = vpow.pop %v1493
  %v1495 = vmul.f32 %v1492, 1.442695
  %v1496 = vpow.pop %v1495
  %v1497 = vsel %vm88, %v1494, 0.0
  %1498 = vadd.xlane.f32.xlu0 %v1497
  %v1499 = vpop.xlane.xlu0 %1498
  %v1500 = vsel %vm88, %v1496, 0.0
  %1501 = vadd.xlane.f32.xlu0 %v1500
  %v1502 = vpop.xlane.xlu0 %1501
  %v1503 = vrcp.pop %v1499
  %v1504 = vrcp.pop %v1502
  %v1505 = vmul.f32 %v1494, %v1503
  %v1506 = vmul.f32 %v1496, %v1504
  %1507 = vrot.lane.b32.xlu0 %v987, 112
  %v1508 = vpop.permute.xlu0 %1507
  %1509 = vrot.lane.b32.xlu0 %v992, 112
  %v1510 = vpop.permute.xlu0 %1509
  %v1514 = vsel %vm88, %v1505, 0
  %v1517 = vsel %vm88, %v1506, 0
  %1519 = vmatprep.subr.mxu0 0.0
  %1520 = vmatpush1.msra.mxu0 %v1508
  %1521 = vmatprep.subr.mxu0 0.0
  %1522 = vmatpush1.msra.mxu0 %v1510
  %1523 = vmatprep.subr.mxu0 0.0
  %1524 = vmatpush1.msra.mxu0 0.0
  %1525 = vmatprep.subr.mxu0 0.0
  %1526 = vmatpush1.msra.mxu0 0.0
  %1527 = vmatprep.subr.mxu0 0.0
  %1528 = vmatpush1.msra.mxu0 0.0
  %1529 = vmatprep.subr.mxu0 0.0
  %1530 = vmatpush1.msra.mxu0 0.0
  %1531 = vmatprep.subr.mxu0 0.0
  %1532 = vmatpush1.msra.mxu0 0.0
  %1533 = vmatprep.subr.mxu0 0.0
  %1534 = vmatpush1.msra.mxu0 0.0
  %1535 = vmatprep.subr.mxu0 0.0
  %1536 = vmatpush1.msra.mxu0 0.0
  %1537 = vmatprep.subr.mxu0 0.0
  %1538 = vmatpush1.msra.mxu0 0.0
  %1539 = vmatprep.subr.mxu0 0.0
  %1540 = vmatpush1.msra.mxu0 0.0
  %1541 = vmatprep.subr.mxu0 0.0
  %1542 = vmatpush1.msra.mxu0 0.0
  %1543 = vmatprep.subr.mxu0 0.0
  %1544 = vmatpush1.msra.mxu0 0.0
  %1545 = vmatprep.subr.mxu0 0.0
  %1546 = vmatpush1.msra.mxu0 0.0
  %1547 = vmatprep.subr.mxu0 0.0
  %1548 = vmatpush1.msra.mxu0 0.0
  %1549 = vmatprep.subr.mxu0 0.0
  %1550 = vmatpush1.msra.mxu0 0.0
  %1551 = vmatprep.subr.mxu0 0.0
  %1552 = vmatpush1.msra.mxu0 0.0
  %1553 = vmatprep.subr.mxu0 0.0
  %1554 = vmatpush1.msra.mxu0 0.0
  %1555 = vmatprep.subr.mxu0 0.0
  %1556 = vmatpush1.msra.mxu0 0.0
  %1557 = vmatprep.subr.mxu0 0.0
  %1558 = vmatpush1.msra.mxu0 0.0
  %1559 = vmatprep.subr.mxu0 0.0
  %1560 = vmatpush1.msra.mxu0 0.0
  %1561 = vmatprep.subr.mxu0 0.0
  %1562 = vmatpush1.msra.mxu0 0.0
  %1563 = vmatprep.subr.mxu0 0.0
  %1564 = vmatpush1.msra.mxu0 0.0
  %1565 = vmatprep.subr.mxu0 0.0
  %1566 = vmatpush1.msra.mxu0 0.0
  %1567 = vmatprep.subr.mxu0 0.0
  %1568 = vmatpush1.msra.mxu0 0.0
  %1569 = vmatprep.subr.mxu0 0.0
  %1570 = vmatpush1.msra.mxu0 0.0
  %1571 = vmatprep.subr.mxu0 0.0
  %1572 = vmatpush1.msra.mxu0 0.0
  %1573 = vmatprep.subr.mxu0 0.0
  %1574 = vmatpush1.msra.mxu0 0.0
  %1575 = vmatprep.subr.mxu0 0.0
  %1576 = vmatpush1.msra.mxu0 0.0
  %1577 = vmatprep.subr.mxu0 0.0
  %1578 = vmatpush1.msra.mxu0 0.0
  %1579 = vmatprep.subr.mxu0 0.0
  %1580 = vmatpush1.msra.mxu0 0.0
  %1581 = vmatprep.subr.mxu0 0.0
  %1582 = vmatpush1.msra.mxu0 0.0
  %1583 = vmatprep.mubr.f32.mxu0 0.0
  %1584 = vmatmul.mubr.f32.gmra.mrb[0].mxu0 %v1514
  %v1585 = vpop.f32.mrb[0].mxu0
  %v1586 = vadd.f32 0.0, %v1585
  %v1587 = vpop.f32.mrb[0].mxu0
  %1588 = vmatprep.mubr.f32.mxu0 0.0
  %1589 = vmatmul.mubr.f32.gmra.mrb[0].mxu0 %v1517
  %v1590 = vpop.f32.mrb[0].mxu0
  %v1591 = vadd.f32 0.0, %v1590
  %v1592 = vpop.f32.mrb[0].mxu0
  %1593 = vdwg.mxu0
  %1594 = vrot.lane.b32.xlu0 %v819, 104
  %v1595 = vpop.permute.xlu0 %1594
  %1596 = vrot.lane.b32.xlu0 %v824, 104
  %v1597 = vpop.permute.xlu0 %1596
  %1598 = vrot.lane.b32.xlu0 %v903, 104
  %v1599 = vpop.permute.xlu0 %1598
  %1600 = vrot.lane.b32.xlu0 %v908, 104
  %v1601 = vpop.permute.xlu0 %1600
  %v1602 = vsel %vm1001, %v1595, 0
  %v1604 = vsel %vm1001, %v1597, 0
  %v1606 = vsel %vm1001, %v1599, 0
  %v1608 = vsel %vm1001, %v1601, 0
  %1610 = vmatprep.subr.mxu0 0.0
  %1611 = vmatpush1.xpose.msra.mxu0 %v1606
  %1612 = vmatprep.subr.mxu0 0.0
  %1613 = vmatpush1.xpose.msra.mxu0 %v1608
  %1614 = vmatprep.subr.mxu0 0.0
  %1615 = vmatpush1.xpose.msra.mxu0 0.0
  %1616 = vmatprep.subr.mxu0 0.0
  %1617 = vmatpush1.xpose.msra.mxu0 0.0
  %1618 = vmatprep.subr.mxu0 0.0
  %1619 = vmatpush1.xpose.msra.mxu0 0.0
  %1620 = vmatprep.subr.mxu0 0.0
  %1621 = vmatpush1.xpose.msra.mxu0 0.0
  %1622 = vmatprep.subr.mxu0 0.0
  %1623 = vmatpush1.xpose.msra.mxu0 0.0
  %1624 = vmatprep.subr.mxu0 0.0
  %1625 = vmatpush1.xpose.msra.mxu0 0.0
  %1626 = vmatprep.subr.mxu0 0.0
  %1627 = vmatpush1.xpose.msra.mxu0 0.0
  %1628 = vmatprep.subr.mxu0 0.0
  %1629 = vmatpush1.xpose.msra.mxu0 0.0
  %1630 = vmatprep.subr.mxu0 0.0
  %1631 = vmatpush1.xpose.msra.mxu0 0.0
  %1632 = vmatprep.subr.mxu0 0.0
  %1633 = vmatpush1.xpose.msra.mxu0 0.0
  %1634 = vmatprep.subr.mxu0 0.0
  %1635 = vmatpush1.xpose.msra.mxu0 0.0
  %1636 = vmatprep.subr.mxu0 0.0
  %1637 = vmatpush1.xpose.msra.mxu0 0.0
  %1638 = vmatprep.subr.mxu0 0.0
  %1639 = vmatpush1.xpose.msra.mxu0 0.0
  %1640 = vmatprep.subr.mxu0 0.0
  %1641 = vmatpush1.xpose.msra.mxu0 0.0
  %1642 = vmatprep.subr.mxu0 0.0
  %1643 = vmatpush1.xpose.msra.mxu0 0.0
  %1644 = vmatprep.subr.mxu0 0.0
  %1645 = vmatpush1.xpose.msra.mxu0 0.0
  %1646 = vmatprep.subr.mxu0 0.0
  %1647 = vmatpush1.xpose.msra.mxu0 0.0
  %1648 = vmatprep.subr.mxu0 0.0
  %1649 = vmatpush1.xpose.msra.mxu0 0.0
  %1650 = vmatprep.subr.mxu0 0.0
  %1651 = vmatpush1.xpose.msra.mxu0 0.0
  %1652 = vmatprep.subr.mxu0 0.0
  %1653 = vmatpush1.xpose.msra.mxu0 0.0
  %1654 = vmatprep.subr.mxu0 0.0
  %1655 = vmatpush1.xpose.msra.mxu0 0.0
  %1656 = vmatprep.subr.mxu0 0.0
  %1657 = vmatpush1.xpose.msra.mxu0 0.0
  %1658 = vmatprep.subr.mxu0 0.0
  %1659 = vmatpush1.xpose.msra.mxu0 0.0
  %1660 = vmatprep.subr.mxu0 0.0
  %1661 = vmatpush1.xpose.msra.mxu0 0.0
  %1662 = vmatprep.subr.mxu0 0.0
  %1663 = vmatpush1.xpose.msra.mxu0 0.0
  %1664 = vmatprep.subr.mxu0 0.0
  %1665 = vmatpush1.xpose.msra.mxu0 0.0
  %1666 = vmatprep.subr.mxu0 0.0
  %1667 = vmatpush1.xpose.msra.mxu0 0.0
  %1668 = vmatprep.subr.mxu0 0.0
  %1669 = vmatpush1.xpose.msra.mxu0 0.0
  %1670 = vmatprep.subr.mxu0 0.0
  %1671 = vmatpush1.xpose.msra.mxu0 0.0
  %1672 = vmatprep.subr.mxu0 0.0
  %1673 = vmatpush1.xpose.msra.mxu0 0.0
  %1674 = vmatprep.mubr.f32.mxu0 0.0
  %1675 = vmatmul.mubr.f32.gmra.mrb[0].mxu0 %v1602
  %v1676 = vpop.f32.mrb[0].mxu0
  %v1677 = vadd.f32 %v996, %v1676
  %v1678 = vpop.f32.mrb[0].mxu0
  %1679 = vmatprep.mubr.f32.mxu0 0.0
  %1680 = vmatmul.mubr.f32.gmra.mrb[0].mxu0 %v1604
  %v1681 = vpop.f32.mrb[0].mxu0
  %v1682 = vadd.f32 %v998, %v1681
  %v1683 = vpop.f32.mrb[0].mxu0
  %1684 = vdwg.mxu0
  %v1685 = vsel %vm88, %v1677, -inf
  %1686 = vmax.xlane.f32.xlu0 %v1685
  %v1687 = vpop.xlane.xlu0 %1686
  %v1688 = vsel %vm88, %v1682, -inf
  %1689 = vmax.xlane.f32.xlu0 %v1688
  %v1690 = vpop.xlane.xlu0 %1689
  %v1691 = vsub.f32 %v1677, %v1687
  %v1692 = vsub.f32 %v1682, %v1690
  %v1693 = vmul.f32 %v1691, 1.442695
  %v1694 = vpow.pop %v1693
  %v1695 = vmul.f32 %v1692, 1.442695
  %v1696 = vpow.pop %v1695
  %v1697 = vsel %vm88, %v1694, 0.0
  %1698 = vadd.xlane.f32.xlu0 %v1697
  %v1699 = vpop.xlane.xlu0 %1698
  %v1700 = vsel %vm88, %v1696, 0.0
  %1701 = vadd.xlane.f32.xlu0 %v1700
  %v1702 = vpop.xlane.xlu0 %1701
  %v1703 = vrcp.pop %v1699
  %v1704 = vrcp.pop %v1702
  %v1705 = vmul.f32 %v1694, %v1703
  %v1706 = vmul.f32 %v1696, %v1704
  %1707 = vrot.lane.b32.xlu0 %v987, 104
  %v1708 = vpop.permute.xlu0 %1707
  %1709 = vrot.lane.b32.xlu0 %v992, 104
  %v1710 = vpop.permute.xlu0 %1709
  %v1714 = vsel %vm88, %v1705, 0
  %v1717 = vsel %vm88, %v1706, 0
  %1719 = vmatprep.subr.mxu0 0.0
  %1720 = vmatpush1.msra.mxu0 %v1708
  %1721 = vmatprep.subr.mxu0 0.0
  %1722 = vmatpush1.msra.mxu0 %v1710
  %1723 = vmatprep.subr.mxu0 0.0
  %1724 = vmatpush1.msra.mxu0 0.0
  %1725 = vmatprep.subr.mxu0 0.0
  %1726 = vmatpush1.msra.mxu0 0.0
  %1727 = vmatprep.subr.mxu0 0.0
  %1728 = vmatpush1.msra.mxu0 0.0
  %1729 = vmatprep.subr.mxu0 0.0
  %1730 = vmatpush1.msra.mxu0 0.0
  %1731 = vmatprep.subr.mxu0 0.0
  %1732 = vmatpush1.msra.mxu0 0.0
  %1733 = vmatprep.subr.mxu0 0.0
  %1734 = vmatpush1.msra.mxu0 0.0
  %1735 = vmatprep.subr.mxu0 0.0
  %1736 = vmatpush1.msra.mxu0 0.0
  %1737 = vmatprep.subr.mxu0 0.0
  %1738 = vmatpush1.msra.mxu0 0.0
  %1739 = vmatprep.subr.mxu0 0.0
  %1740 = vmatpush1.msra.mxu0 0.0
  %1741 = vmatprep.subr.mxu0 0.0
  %1742 = vmatpush1.msra.mxu0 0.0
  %1743 = vmatprep.subr.mxu0 0.0
  %1744 = vmatpush1.msra.mxu0 0.0
  %1745 = vmatprep.subr.mxu0 0.0
  %1746 = vmatpush1.msra.mxu0 0.0
  %1747 = vmatprep.subr.mxu0 0.0
  %1748 = vmatpush1.msra.mxu0 0.0
  %1749 = vmatprep.subr.mxu0 0.0
  %1750 = vmatpush1.msra.mxu0 0.0
  %1751 = vmatprep.subr.mxu0 0.0
  %1752 = vmatpush1.msra.mxu0 0.0
  %1753 = vmatprep.subr.mxu0 0.0
  %1754 = vmatpush1.msra.mxu0 0.0
  %1755 = vmatprep.subr.mxu0 0.0
  %1756 = vmatpush1.msra.mxu0 0.0
  %1757 = vmatprep.subr.mxu0 0.0
  %1758 = vmatpush1.msra.mxu0 0.0
  %1759 = vmatprep.subr.mxu0 0.0
  %1760 = vmatpush1.msra.mxu0 0.0
  %1761 = vmatprep.subr.mxu0 0.0
  %1762 = vmatpush1.msra.mxu0 0.0
  %1763 = vmatprep.subr.mxu0 0.0
  %1764 = vmatpush1.msra.mxu0 0.0
  %1765 = vmatprep.subr.mxu0 0.0
  %1766 = vmatpush1.msra.mxu0 0.0
  %1767 = vmatprep.subr.mxu0 0.0
  %1768 = vmatpush1.msra.mxu0 0.0
  %1769 = vmatprep.subr.mxu0 0.0
  %1770 = vmatpush1.msra.mxu0 0.0
  %1771 = vmatprep.subr.mxu0 0.0
  %1772 = vmatpush1.msra.mxu0 0.0
  %1773 = vmatprep.subr.mxu0 0.0
  %1774 = vmatpush1.msra.mxu0 0.0
  %1775 = vmatprep.subr.mxu0 0.0
  %1776 = vmatpush1.msra.mxu0 0.0
  %1777 = vmatprep.subr.mxu0 0.0
  %1778 = vmatpush1.msra.mxu0 0.0
  %1779 = vmatprep.subr.mxu0 0.0
  %1780 = vmatpush1.msra.mxu0 0.0
  %1781 = vmatprep.subr.mxu0 0.0
  %1782 = vmatpush1.msra.mxu0 0.0
  %1783 = vmatprep.mubr.f32.mxu0 0.0
  %1784 = vmatmul.mubr.f32.gmra.mrb[0].mxu0 %v1714
  %v1785 = vpop.f32.mrb[0].mxu0
  %v1786 = vadd.f32 0.0, %v1785
  %v1787 = vpop.f32.mrb[0].mxu0
  %1788 = vmatprep.mubr.f32.mxu0 0.0
  %1789 = vmatmul.mubr.f32.gmra.mrb[0].mxu0 %v1717
  %v1790 = vpop.f32.mrb[0].mxu0
  %v1791 = vadd.f32 0.0, %v1790
  %v1792 = vpop.f32.mrb[0].mxu0
  %1793 = vdwg.mxu0
  %1794 = vrot.lane.b32.xlu0 %v819, 96
  %v1795 = vpop.permute.xlu0 %1794
  %1796 = vrot.lane.b32.xlu0 %v824, 96
  %v1797 = vpop.permute.xlu0 %1796
  %1798 = vrot.lane.b32.xlu0 %v903, 96
  %v1799 = vpop.permute.xlu0 %1798
  %1800 = vrot.lane.b32.xlu0 %v908, 96
  %v1801 = vpop.permute.xlu0 %1800
  %v1802 = vsel %vm1001, %v1795, 0
  %v1804 = vsel %vm1001, %v1797, 0
  %v1806 = vsel %vm1001, %v1799, 0
  %v1808 = vsel %vm1001, %v1801, 0
  %1810 = vmatprep.subr.mxu0 0.0
  %1811 = vmatpush1.xpose.msra.mxu0 %v1806
  %1812 = vmatprep.subr.mxu0 0.0
  %1813 = vmatpush1.xpose.msra.mxu0 %v1808
  %1814 = vmatprep.subr.mxu0 0.0
  %1815 = vmatpush1.xpose.msra.mxu0 0.0
  %1816 = vmatprep.subr.mxu0 0.0
  %1817 = vmatpush1.xpose.msra.mxu0 0.0
  %1818 = vmatprep.subr.mxu0 0.0
  %1819 = vmatpush1.xpose.msra.mxu0 0.0
  %1820 = vmatprep.subr.mxu0 0.0
  %1821 = vmatpush1.xpose.msra.mxu0 0.0
  %1822 = vmatprep.subr.mxu0 0.0
  %1823 = vmatpush1.xpose.msra.mxu0 0.0
  %1824 = vmatprep.subr.mxu0 0.0
  %1825 = vmatpush1.xpose.msra.mxu0 0.0
  %1826 = vmatprep.subr.mxu0 0.0
  %1827 = vmatpush1.xpose.msra.mxu0 0.0
  %1828 = vmatprep.subr.mxu0 0.0
  %1829 = vmatpush1.xpose.msra.mxu0 0.0
  %1830 = vmatprep.subr.mxu0 0.0
  %1831 = vmatpush1.xpose.msra.mxu0 0.0
  %1832 = vmatprep.subr.mxu0 0.0
  %1833 = vmatpush1.xpose.msra.mxu0 0.0
  %1834 = vmatprep.subr.mxu0 0.0
  %1835 = vmatpush1.xpose.msra.mxu0 0.0
  %1836 = vmatprep.subr.mxu0 0.0
  %1837 = vmatpush1.xpose.msra.mxu0 0.0
  %1838 = vmatprep.subr.mxu0 0.0
  %1839 = vmatpush1.xpose.msra.mxu0 0.0
  %1840 = vmatprep.subr.mxu0 0.0
  %1841 = vmatpush1.xpose.msra.mxu0 0.0
  %1842 = vmatprep.subr.mxu0 0.0
  %1843 = vmatpush1.xpose.msra.mxu0 0.0
  %1844 = vmatprep.subr.mxu0 0.0
  %1845 = vmatpush1.xpose.msra.mxu0 0.0
  %1846 = vmatprep.subr.mxu0 0.0
  %1847 = vmatpush1.xpose.msra.mxu0 0.0
  %1848 = vmatprep.subr.mxu0 0.0
  %1849 = vmatpush1.xpose.msra.mxu0 0.0
  %1850 = vmatprep.subr.mxu0 0.0
  %1851 = vmatpush1.xpose.msra.mxu0 0.0
  %1852 = vmatprep.subr.mxu0 0.0
  %1853 = vmatpush1.xpose.msra.mxu0 0.0
  %1854 = vmatprep.subr.mxu0 0.0
  %1855 = vmatpush1.xpose.msra.mxu0 0.0
  %1856 = vmatprep.subr.mxu0 0.0
  %1857 = vmatpush1.xpose.msra.mxu0 0.0
  %1858 = vmatprep.subr.mxu0 0.0
  %1859 = vmatpush1.xpose.msra.mxu0 0.0
  %1860 = vmatprep.subr.mxu0 0.0
  %1861 = vmatpush1.xpose.msra.mxu0 0.0
  %1862 = vmatprep.subr.mxu0 0.0
  %1863 = vmatpush1.xpose.msra.mxu0 0.0
  %1864 = vmatprep.subr.mxu0 0.0
  %1865 = vmatpush1.xpose.msra.mxu0 0.0
  %1866 = vmatprep.subr.mxu0 0.0
  %1867 = vmatpush1.xpose.msra.mxu0 0.0
  %1868 = vmatprep.subr.mxu0 0.0
  %1869 = vmatpush1.xpose.msra.mxu0 0.0
  %1870 = vmatprep.subr.mxu0 0.0
  %1871 = vmatpush1.xpose.msra.mxu0 0.0
  %1872 = vmatprep.subr.mxu0 0.0
  %1873 = vmatpush1.xpose.msra.mxu0 0.0
  %1874 = vmatprep.mubr.f32.mxu0 0.0
  %1875 = vmatmul.mubr.f32.gmra.mrb[0].mxu0 %v1802
  %v1876 = vpop.f32.mrb[0].mxu0
  %v1877 = vadd.f32 %v996, %v1876
  %v1878 = vpop.f32.mrb[0].mxu0
  %1879 = vmatprep.mubr.f32.mxu0 0.0
  %1880 = vmatmul.mubr.f32.gmra.mrb[0].mxu0 %v1804
  %v1881 = vpop.f32.mrb[0].mxu0
  %v1882 = vadd.f32 %v998, %v1881
  %v1883 = vpop.f32.mrb[0].mxu0
  %1884 = vdwg.mxu0
  %v1885 = vsel %vm88, %v1877, -inf
  %1886 = vmax.xlane.f32.xlu0 %v1885
  %v1887 = vpop.xlane.xlu0 %1886
  %v1888 = vsel %vm88, %v1882, -inf
  %1889 = vmax.xlane.f32.xlu0 %v1888
  %v1890 = vpop.xlane.xlu0 %1889
  %v1891 = vsub.f32 %v1877, %v1887
  %v1892 = vsub.f32 %v1882, %v1890
  %v1893 = vmul.f32 %v1891, 1.442695
  %v1894 = vpow.pop %v1893
  %v1895 = vmul.f32 %v1892, 1.442695
  %v1896 = vpow.pop %v1895
  %v1897 = vsel %vm88, %v1894, 0.0
  %1898 = vadd.xlane.f32.xlu0 %v1897
  %v1899 = vpop.xlane.xlu0 %1898
  %v1900 = vsel %vm88, %v1896, 0.0
  %1901 = vadd.xlane.f32.xlu0 %v1900
  %v1902 = vpop.xlane.xlu0 %1901
  %v1903 = vrcp.pop %v1899
  %v1904 = vrcp.pop %v1902
  %v1905 = vmul.f32 %v1894, %v1903
  %v1906 = vmul.f32 %v1896, %v1904
  %1907 = vrot.lane.b32.xlu0 %v987, 96
  %v1908 = vpop.permute.xlu0 %1907
  %1909 = vrot.lane.b32.xlu0 %v992, 96
  %v1910 = vpop.permute.xlu0 %1909
  %v1914 = vsel %vm88, %v1905, 0
  %v1917 = vsel %vm88, %v1906, 0
  %1919 = vmatprep.subr.mxu0 0.0
  %1920 = vmatpush1.msra.mxu0 %v1908
  %1921 = vmatprep.subr.mxu0 0.0
  %1922 = vmatpush1.msra.mxu0 %v1910
  %1923 = vmatprep.subr.mxu0 0.0
  %1924 = vmatpush1.msra.mxu0 0.0
  %1925 = vmatprep.subr.mxu0 0.0
  %1926 = vmatpush1.msra.mxu0 0.0
  %1927 = vmatprep.subr.mxu0 0.0
  %1928 = vmatpush1.msra.mxu0 0.0
  %1929 = vmatprep.subr.mxu0 0.0
  %1930 = vmatpush1.msra.mxu0 0.0
  %1931 = vmatprep.subr.mxu0 0.0
  %1932 = vmatpush1.msra.mxu0 0.0
  %1933 = vmatprep.subr.mxu0 0.0
  %1934 = vmatpush1.msra.mxu0 0.0
  %1935 = vmatprep.subr.mxu0 0.0
  %1936 = vmatpush1.msra.mxu0 0.0
  %1937 = vmatprep.subr.mxu0 0.0
  %1938 = vmatpush1.msra.mxu0 0.0
  %1939 = vmatprep.subr.mxu0 0.0
  %1940 = vmatpush1.msra.mxu0 0.0
  %1941 = vmatprep.subr.mxu0 0.0
  %1942 = vmatpush1.msra.mxu0 0.0
  %1943 = vmatprep.subr.mxu0 0.0
  %1944 = vmatpush1.msra.mxu0 0.0
  %1945 = vmatprep.subr.mxu0 0.0
  %1946 = vmatpush1.msra.mxu0 0.0
  %1947 = vmatprep.subr.mxu0 0.0
  %1948 = vmatpush1.msra.mxu0 0.0
  %1949 = vmatprep.subr.mxu0 0.0
  %1950 = vmatpush1.msra.mxu0 0.0
  %1951 = vmatprep.subr.mxu0 0.0
  %1952 = vmatpush1.msra.mxu0 0.0
  %1953 = vmatprep.subr.mxu0 0.0
  %1954 = vmatpush1.msra.mxu0 0.0
  %1955 = vmatprep.subr.mxu0 0.0
  %1956 = vmatpush1.msra.mxu0 0.0
  %1957 = vmatprep.subr.mxu0 0.0
  %1958 = vmatpush1.msra.mxu0 0.0
  %1959 = vmatprep.subr.mxu0 0.0
  %1960 = vmatpush1.msra.mxu0 0.0
  %1961 = vmatprep.subr.mxu0 0.0
  %1962 = vmatpush1.msra.mxu0 0.0
  %1963 = vmatprep.subr.mxu0 0.0
  %1964 = vmatpush1.msra.mxu0 0.0
  %1965 = vmatprep.subr.mxu0 0.0
  %1966 = vmatpush1.msra.mxu0 0.0
  %1967 = vmatprep.subr.mxu0 0.0
  %1968 = vmatpush1.msra.mxu0 0.0
  %1969 = vmatprep.subr.mxu0 0.0
  %1970 = vmatpush1.msra.mxu0 0.0
  %1971 = vmatprep.subr.mxu0 0.0
  %1972 = vmatpush1.msra.mxu0 0.0
  %1973 = vmatprep.subr.mxu0 0.0
  %1974 = vmatpush1.msra.mxu0 0.0
  %1975 = vmatprep.subr.mxu0 0.0
  %1976 = vmatpush1.msra.mxu0 0.0
  %1977 = vmatprep.subr.mxu0 0.0
  %1978 = vmatpush1.msra.mxu0 0.0
  %1979 = vmatprep.subr.mxu0 0.0
  %1980 = vmatpush1.msra.mxu0 0.0
  %1981 = vmatprep.subr.mxu0 0.0
  %1982 = vmatpush1.msra.mxu0 0.0
  %1983 = vmatprep.mubr.f32.mxu0 0.0
  %1984 = vmatmul.mubr.f32.gmra.mrb[0].mxu0 %v1914
  %v1985 = vpop.f32.mrb[0].mxu0
  %v1986 = vadd.f32 0.0, %v1985
  %v1987 = vpop.f32.mrb[0].mxu0
  %1988 = vmatprep.mubr.f32.mxu0 0.0
  %1989 = vmatmul.mubr.f32.gmra.mrb[0].mxu0 %v1917
  %v1990 = vpop.f32.mrb[0].mxu0
  %v1991 = vadd.f32 0.0, %v1990
  %v1992 = vpop.f32.mrb[0].mxu0
  %1993 = vdwg.mxu0
  %1994 = vrot.lane.b32.xlu0 %v819, 88
  %v1995 = vpop.permute.xlu0 %1994
  %1996 = vrot.lane.b32.xlu0 %v824, 88
  %v1997 = vpop.permute.xlu0 %1996
  %1998 = vrot.lane.b32.xlu0 %v903, 88
  %v1999 = vpop.permute.xlu0 %1998
  %2000 = vrot.lane.b32.xlu0 %v908, 88
  %v2001 = vpop.permute.xlu0 %2000
  %v2002 = vsel %vm1001, %v1995, 0
  %v2004 = vsel %vm1001, %v1997, 0
  %v2006 = vsel %vm1001, %v1999, 0
  %v2008 = vsel %vm1001, %v2001, 0
  %2010 = vmatprep.subr.mxu0 0.0
  %2011 = vmatpush1.xpose.msra.mxu0 %v2006
  %2012 = vmatprep.subr.mxu0 0.0
  %2013 = vmatpush1.xpose.msra.mxu0 %v2008
  %2014 = vmatprep.subr.mxu0 0.0
  %2015 = vmatpush1.xpose.msra.mxu0 0.0
  %2016 = vmatprep.subr.mxu0 0.0
  %2017 = vmatpush1.xpose.msra.mxu0 0.0
  %2018 = vmatprep.subr.mxu0 0.0
  %2019 = vmatpush1.xpose.msra.mxu0 0.0
  %2020 = vmatprep.subr.mxu0 0.0
  %2021 = vmatpush1.xpose.msra.mxu0 0.0
  %2022 = vmatprep.subr.mxu0 0.0
  %2023 = vmatpush1.xpose.msra.mxu0 0.0
  %2024 = vmatprep.subr.mxu0 0.0
  %2025 = vmatpush1.xpose.msra.mxu0 0.0
  %2026 = vmatprep.subr.mxu0 0.0
  %2027 = vmatpush1.xpose.msra.mxu0 0.0
  %2028 = vmatprep.subr.mxu0 0.0
  %2029 = vmatpush1.xpose.msra.mxu0 0.0
  %2030 = vmatprep.subr.mxu0 0.0
  %2031 = vmatpush1.xpose.msra.mxu0 0.0
  %2032 = vmatprep.subr.mxu0 0.0
  %2033 = vmatpush1.xpose.msra.mxu0 0.0
  %2034 = vmatprep.subr.mxu0 0.0
  %2035 = vmatpush1.xpose.msra.mxu0 0.0
  %2036 = vmatprep.subr.mxu0 0.0
  %2037 = vmatpush1.xpose.msra.mxu0 0.0
  %2038 = vmatprep.subr.mxu0 0.0
  %2039 = vmatpush1.xpose.msra.mxu0 0.0
  %2040 = vmatprep.subr.mxu0 0.0
  %2041 = vmatpush1.xpose.msra.mxu0 0.0
  %2042 = vmatprep.subr.mxu0 0.0
  %2043 = vmatpush1.xpose.msra.mxu0 0.0
  %2044 = vmatprep.subr.mxu0 0.0
  %2045 = vmatpush1.xpose.msra.mxu0 0.0
  %2046 = vmatprep.subr.mxu0 0.0
  %2047 = vmatpush1.xpose.msra.mxu0 0.0
  %2048 = vmatprep.subr.mxu0 0.0
  %2049 = vmatpush1.xpose.msra.mxu0 0.0
  %2050 = vmatprep.subr.mxu0 0.0
  %2051 = vmatpush1.xpose.msra.mxu0 0.0
  %2052 = vmatprep.subr.mxu0 0.0
  %2053 = vmatpush1.xpose.msra.mxu0 0.0
  %2054 = vmatprep.subr.mxu0 0.0
  %2055 = vmatpush1.xpose.msra.mxu0 0.0
  %2056 = vmatprep.subr.mxu0 0.0
  %2057 = vmatpush1.xpose.msra.mxu0 0.0
  %2058 = vmatprep.subr.mxu0 0.0
  %2059 = vmatpush1.xpose.msra.mxu0 0.0
  %2060 = vmatprep.subr.mxu0 0.0
  %2061 = vmatpush1.xpose.msra.mxu0 0.0
  %2062 = vmatprep.subr.mxu0 0.0
  %2063 = vmatpush1.xpose.msra.mxu0 0.0
  %2064 = vmatprep.subr.mxu0 0.0
  %2065 = vmatpush1.xpose.msra.mxu0 0.0
  %2066 = vmatprep.subr.mxu0 0.0
  %2067 = vmatpush1.xpose.msra.mxu0 0.0
  %2068 = vmatprep.subr.mxu0 0.0
  %2069 = vmatpush1.xpose.msra.mxu0 0.0
  %2070 = vmatprep.subr.mxu0 0.0
  %2071 = vmatpush1.xpose.msra.mxu0 0.0
  %2072 = vmatprep.subr.mxu0 0.0
  %2073 = vmatpush1.xpose.msra.mxu0 0.0
  %2074 = vmatprep.mubr.f32.mxu0 0.0
  %2075 = vmatmul.mubr.f32.gmra.mrb[0].mxu0 %v2002
  %v2076 = vpop.f32.mrb[0].mxu0
  %v2077 = vadd.f32 %v996, %v2076
  %v2078 = vpop.f32.mrb[0].mxu0
  %2079 = vmatprep.mubr.f32.mxu0 0.0
  %2080 = vmatmul.mubr.f32.gmra.mrb[0].mxu0 %v2004
  %v2081 = vpop.f32.mrb[0].mxu0
  %v2082 = vadd.f32 %v998, %v2081
  %v2083 = vpop.f32.mrb[0].mxu0
  %2084 = vdwg.mxu0
  %v2085 = vsel %vm88, %v2077, -inf
  %2086 = vmax.xlane.f32.xlu0 %v2085
  %v2087 = vpop.xlane.xlu0 %2086
  %v2088 = vsel %vm88, %v2082, -inf
  %2089 = vmax.xlane.f32.xlu0 %v2088
  %v2090 = vpop.xlane.xlu0 %2089
  %v2091 = vsub.f32 %v2077, %v2087
  %v2092 = vsub.f32 %v2082, %v2090
  %v2093 = vmul.f32 %v2091, 1.442695
  %v2094 = vpow.pop %v2093
  %v2095 = vmul.f32 %v2092, 1.442695
  %v2096 = vpow.pop %v2095
  %v2097 = vsel %vm88, %v2094, 0.0
  %2098 = vadd.xlane.f32.xlu0 %v2097
  %v2099 = vpop.xlane.xlu0 %2098
  %v2100 = vsel %vm88, %v2096, 0.0
  %2101 = vadd.xlane.f32.xlu0 %v2100
  %v2102 = vpop.xlane.xlu0 %2101
  %v2103 = vrcp.pop %v2099
  %v2104 = vrcp.pop %v2102
  %v2105 = vmul.f32 %v2094, %v2103
  %v2106 = vmul.f32 %v2096, %v2104
  %2107 = vrot.lane.b32.xlu0 %v987, 88
  %v2108 = vpop.permute.xlu0 %2107
  %2109 = vrot.lane.b32.xlu0 %v992, 88
  %v2110 = vpop.permute.xlu0 %2109
  %v2114 = vsel %vm88, %v2105, 0
  %v2117 = vsel %vm88, %v2106, 0
  %2119 = vmatprep.subr.mxu0 0.0
  %2120 = vmatpush1.msra.mxu0 %v2108
  %2121 = vmatprep.subr.mxu0 0.0
  %2122 = vmatpush1.msra.mxu0 %v2110
  %2123 = vmatprep.subr.mxu0 0.0
  %2124 = vmatpush1.msra.mxu0 0.0
  %2125 = vmatprep.subr.mxu0 0.0
  %2126 = vmatpush1.msra.mxu0 0.0
  %2127 = vmatprep.subr.mxu0 0.0
  %2128 = vmatpush1.msra.mxu0 0.0
  %2129 = vmatprep.subr.mxu0 0.0
  %2130 = vmatpush1.msra.mxu0 0.0
  %2131 = vmatprep.subr.mxu0 0.0
  %2132 = vmatpush1.msra.mxu0 0.0
  %2133 = vmatprep.subr.mxu0 0.0
  %2134 = vmatpush1.msra.mxu0 0.0
  %2135 = vmatprep.subr.mxu0 0.0
  %2136 = vmatpush1.msra.mxu0 0.0
  %2137 = vmatprep.subr.mxu0 0.0
  %2138 = vmatpush1.msra.mxu0 0.0
  %2139 = vmatprep.subr.mxu0 0.0
  %2140 = vmatpush1.msra.mxu0 0.0
  %2141 = vmatprep.subr.mxu0 0.0
  %2142 = vmatpush1.msra.mxu0 0.0
  %2143 = vmatprep.subr.mxu0 0.0
  %2144 = vmatpush1.msra.mxu0 0.0
  %2145 = vmatprep.subr.mxu0 0.0
  %2146 = vmatpush1.msra.mxu0 0.0
  %2147 = vmatprep.subr.mxu0 0.0
  %2148 = vmatpush1.msra.mxu0 0.0
  %2149 = vmatprep.subr.mxu0 0.0
  %2150 = vmatpush1.msra.mxu0 0.0
  %2151 = vmatprep.subr.mxu0 0.0
  %2152 = vmatpush1.msra.mxu0 0.0
  %2153 = vmatprep.subr.mxu0 0.0
  %2154 = vmatpush1.msra.mxu0 0.0
  %2155 = vmatprep.subr.mxu0 0.0
  %2156 = vmatpush1.msra.mxu0 0.0
  %2157 = vmatprep.subr.mxu0 0.0
  %2158 = vmatpush1.msra.mxu0 0.0
  %2159 = vmatprep.subr.mxu0 0.0
  %2160 = vmatpush1.msra.mxu0 0.0
  %2161 = vmatprep.subr.mxu0 0.0
  %2162 = vmatpush1.msra.mxu0 0.0
  %2163 = vmatprep.subr.mxu0 0.0
  %2164 = vmatpush1.msra.mxu0 0.0
  %2165 = vmatprep.subr.mxu0 0.0
  %2166 = vmatpush1.msra.mxu0 0.0
  %2167 = vmatprep.subr.mxu0 0.0
  %2168 = vmatpush1.msra.mxu0 0.0
  %2169 = vmatprep.subr.mxu0 0.0
  %2170 = vmatpush1.msra.mxu0 0.0
  %2171 = vmatprep.subr.mxu0 0.0
  %2172 = vmatpush1.msra.mxu0 0.0
  %2173 = vmatprep.subr.mxu0 0.0
  %2174 = vmatpush1.msra.mxu0 0.0
  %2175 = vmatprep.subr.mxu0 0.0
  %2176 = vmatpush1.msra.mxu0 0.0
  %2177 = vmatprep.subr.mxu0 0.0
  %2178 = vmatpush1.msra.mxu0 0.0
  %2179 = vmatprep.subr.mxu0 0.0
  %2180 = vmatpush1.msra.mxu0 0.0
  %2181 = vmatprep.subr.mxu0 0.0
  %2182 = vmatpush1.msra.mxu0 0.0
  %2183 = vmatprep.mubr.f32.mxu0 0.0
  %2184 = vmatmul.mubr.f32.gmra.mrb[0].mxu0 %v2114
  %v2185 = vpop.f32.mrb[0].mxu0
  %v2186 = vadd.f32 0.0, %v2185
  %v2187 = vpop.f32.mrb[0].mxu0
  %2188 = vmatprep.mubr.f32.mxu0 0.0
  %2189 = vmatmul.mubr.f32.gmra.mrb[0].mxu0 %v2117
  %v2190 = vpop.f32.mrb[0].mxu0
  %v2191 = vadd.f32 0.0, %v2190
  %v2192 = vpop.f32.mrb[0].mxu0
  %2193 = vdwg.mxu0
  %2194 = vrot.lane.b32.xlu0 %v819, 80
  %v2195 = vpop.permute.xlu0 %2194
  %2196 = vrot.lane.b32.xlu0 %v824, 80
  %v2197 = vpop.permute.xlu0 %2196
  %2198 = vrot.lane.b32.xlu0 %v903, 80
  %v2199 = vpop.permute.xlu0 %2198
  %2200 = vrot.lane.b32.xlu0 %v908, 80
  %v2201 = vpop.permute.xlu0 %2200
  %v2202 = vsel %vm1001, %v2195, 0
  %v2204 = vsel %vm1001, %v2197, 0
  %v2206 = vsel %vm1001, %v2199, 0
  %v2208 = vsel %vm1001, %v2201, 0
  %2210 = vmatprep.subr.mxu0 0.0
  %2211 = vmatpush1.xpose.msra.mxu0 %v2206
  %2212 = vmatprep.subr.mxu0 0.0
  %2213 = vmatpush1.xpose.msra.mxu0 %v2208
  %2214 = vmatprep.subr.mxu0 0.0
  %2215 = vmatpush1.xpose.msra.mxu0 0.0
  %2216 = vmatprep.subr.mxu0 0.0
  %2217 = vmatpush1.xpose.msra.mxu0 0.0
  %2218 = vmatprep.subr.mxu0 0.0
  %2219 = vmatpush1.xpose.msra.mxu0 0.0
  %2220 = vmatprep.subr.mxu0 0.0
  %2221 = vmatpush1.xpose.msra.mxu0 0.0
  %2222 = vmatprep.subr.mxu0 0.0
  %2223 = vmatpush1.xpose.msra.mxu0 0.0
  %2224 = vmatprep.subr.mxu0 0.0
  %2225 = vmatpush1.xpose.msra.mxu0 0.0
  %2226 = vmatprep.subr.mxu0 0.0
  %2227 = vmatpush1.xpose.msra.mxu0 0.0
  %2228 = vmatprep.subr.mxu0 0.0
  %2229 = vmatpush1.xpose.msra.mxu0 0.0
  %2230 = vmatprep.subr.mxu0 0.0
  %2231 = vmatpush1.xpose.msra.mxu0 0.0
  %2232 = vmatprep.subr.mxu0 0.0
  %2233 = vmatpush1.xpose.msra.mxu0 0.0
  %2234 = vmatprep.subr.mxu0 0.0
  %2235 = vmatpush1.xpose.msra.mxu0 0.0
  %2236 = vmatprep.subr.mxu0 0.0
  %2237 = vmatpush1.xpose.msra.mxu0 0.0
  %2238 = vmatprep.subr.mxu0 0.0
  %2239 = vmatpush1.xpose.msra.mxu0 0.0
  %2240 = vmatprep.subr.mxu0 0.0
  %2241 = vmatpush1.xpose.msra.mxu0 0.0
  %2242 = vmatprep.subr.mxu0 0.0
  %2243 = vmatpush1.xpose.msra.mxu0 0.0
  %2244 = vmatprep.subr.mxu0 0.0
  %2245 = vmatpush1.xpose.msra.mxu0 0.0
  %2246 = vmatprep.subr.mxu0 0.0
  %2247 = vmatpush1.xpose.msra.mxu0 0.0
  %2248 = vmatprep.subr.mxu0 0.0
  %2249 = vmatpush1.xpose.msra.mxu0 0.0
  %2250 = vmatprep.subr.mxu0 0.0
  %2251 = vmatpush1.xpose.msra.mxu0 0.0
  %2252 = vmatprep.subr.mxu0 0.0
  %2253 = vmatpush1.xpose.msra.mxu0 0.0
  %2254 = vmatprep.subr.mxu0 0.0
  %2255 = vmatpush1.xpose.msra.mxu0 0.0
  %2256 = vmatprep.subr.mxu0 0.0
  %2257 = vmatpush1.xpose.msra.mxu0 0.0
  %2258 = vmatprep.subr.mxu0 0.0
  %2259 = vmatpush1.xpose.msra.mxu0 0.0
  %2260 = vmatprep.subr.mxu0 0.0
  %2261 = vmatpush1.xpose.msra.mxu0 0.0
  %2262 = vmatprep.subr.mxu0 0.0
  %2263 = vmatpush1.xpose.msra.mxu0 0.0
  %2264 = vmatprep.subr.mxu0 0.0
  %2265 = vmatpush1.xpose.msra.mxu0 0.0
  %2266 = vmatprep.subr.mxu0 0.0
  %2267 = vmatpush1.xpose.msra.mxu0 0.0
  %2268 = vmatprep.subr.mxu0 0.0
  %2269 = vmatpush1.xpose.msra.mxu0 0.0
  %2270 = vmatprep.subr.mxu0 0.0
  %2271 = vmatpush1.xpose.msra.mxu0 0.0
  %2272 = vmatprep.subr.mxu0 0.0
  %2273 = vmatpush1.xpose.msra.mxu0 0.0
  %2274 = vmatprep.mubr.f32.mxu0 0.0
  %2275 = vmatmul.mubr.f32.gmra.mrb[0].mxu0 %v2202
  %v2276 = vpop.f32.mrb[0].mxu0
  %v2277 = vadd.f32 %v996, %v2276
  %v2278 = vpop.f32.mrb[0].mxu0
  %2279 = vmatprep.mubr.f32.mxu0 0.0
  %2280 = vmatmul.mubr.f32.gmra.mrb[0].mxu0 %v2204
  %v2281 = vpop.f32.mrb[0].mxu0
  %v2282 = vadd.f32 %v998, %v2281
  %v2283 = vpop.f32.mrb[0].mxu0
  %2284 = vdwg.mxu0
  %v2285 = vsel %vm88, %v2277, -inf
  %2286 = vmax.xlane.f32.xlu0 %v2285
  %v2287 = vpop.xlane.xlu0 %2286
  %v2288 = vsel %vm88, %v2282, -inf
  %2289 = vmax.xlane.f32.xlu0 %v2288
  %v2290 = vpop.xlane.xlu0 %2289
  %v2291 = vsub.f32 %v2277, %v2287
  %v2292 = vsub.f32 %v2282, %v2290
  %v2293 = vmul.f32 %v2291, 1.442695
  %v2294 = vpow.pop %v2293
  %v2295 = vmul.f32 %v2292, 1.442695
  %v2296 = vpow.pop %v2295
  %v2297 = vsel %vm88, %v2294, 0.0
  %2298 = vadd.xlane.f32.xlu0 %v2297
  %v2299 = vpop.xlane.xlu0 %2298
  %v2300 = vsel %vm88, %v2296, 0.0
  %2301 = vadd.xlane.f32.xlu0 %v2300
  %v2302 = vpop.xlane.xlu0 %2301
  %v2303 = vrcp.pop %v2299
  %v2304 = vrcp.pop %v2302
  %v2305 = vmul.f32 %v2294, %v2303
  %v2306 = vmul.f32 %v2296, %v2304
  %2307 = vrot.lane.b32.xlu0 %v987, 80
  %v2308 = vpop.permute.xlu0 %2307
  %2309 = vrot.lane.b32.xlu0 %v992, 80
  %v2310 = vpop.permute.xlu0 %2309
  %v2314 = vsel %vm88, %v2305, 0
  %v2317 = vsel %vm88, %v2306, 0
  %2319 = vmatprep.subr.mxu0 0.0
  %2320 = vmatpush1.msra.mxu0 %v2308
  %2321 = vmatprep.subr.mxu0 0.0
  %2322 = vmatpush1.msra.mxu0 %v2310
  %2323 = vmatprep.subr.mxu0 0.0
  %2324 = vmatpush1.msra.mxu0 0.0
  %2325 = vmatprep.subr.mxu0 0.0
  %2326 = vmatpush1.msra.mxu0 0.0
  %2327 = vmatprep.subr.mxu0 0.0
  %2328 = vmatpush1.msra.mxu0 0.0
  %2329 = vmatprep.subr.mxu0 0.0
  %2330 = vmatpush1.msra.mxu0 0.0
  %2331 = vmatprep.subr.mxu0 0.0
  %2332 = vmatpush1.msra.mxu0 0.0
  %2333 = vmatprep.subr.mxu0 0.0
  %2334 = vmatpush1.msra.mxu0 0.0
  %2335 = vmatprep.subr.mxu0 0.0
  %2336 = vmatpush1.msra.mxu0 0.0
  %2337 = vmatprep.subr.mxu0 0.0
  %2338 = vmatpush1.msra.mxu0 0.0
  %2339 = vmatprep.subr.mxu0 0.0
  %2340 = vmatpush1.msra.mxu0 0.0
  %2341 = vmatprep.subr.mxu0 0.0
  %2342 = vmatpush1.msra.mxu0 0.0
  %2343 = vmatprep.subr.mxu0 0.0
  %2344 = vmatpush1.msra.mxu0 0.0
  %2345 = vmatprep.subr.mxu0 0.0
  %2346 = vmatpush1.msra.mxu0 0.0
  %2347 = vmatprep.subr.mxu0 0.0
  %2348 = vmatpush1.msra.mxu0 0.0
  %2349 = vmatprep.subr.mxu0 0.0
  %2350 = vmatpush1.msra.mxu0 0.0
  %2351 = vmatprep.subr.mxu0 0.0
  %2352 = vmatpush1.msra.mxu0 0.0
  %2353 = vmatprep.subr.mxu0 0.0
  %2354 = vmatpush1.msra.mxu0 0.0
  %2355 = vmatprep.subr.mxu0 0.0
  %2356 = vmatpush1.msra.mxu0 0.0
  %2357 = vmatprep.subr.mxu0 0.0
  %2358 = vmatpush1.msra.mxu0 0.0
  %2359 = vmatprep.subr.mxu0 0.0
  %2360 = vmatpush1.msra.mxu0 0.0
  %2361 = vmatprep.subr.mxu0 0.0
  %2362 = vmatpush1.msra.mxu0 0.0
  %2363 = vmatprep.subr.mxu0 0.0
  %2364 = vmatpush1.msra.mxu0 0.0
  %2365 = vmatprep.subr.mxu0 0.0
  %2366 = vmatpush1.msra.mxu0 0.0
  %2367 = vmatprep.subr.mxu0 0.0
  %2368 = vmatpush1.msra.mxu0 0.0
  %2369 = vmatprep.subr.mxu0 0.0
  %2370 = vmatpush1.msra.mxu0 0.0
  %2371 = vmatprep.subr.mxu0 0.0
  %2372 = vmatpush1.msra.mxu0 0.0
  %2373 = vmatprep.subr.mxu0 0.0
  %2374 = vmatpush1.msra.mxu0 0.0
  %2375 = vmatprep.subr.mxu0 0.0
  %2376 = vmatpush1.msra.mxu0 0.0
  %2377 = vmatprep.subr.mxu0 0.0
  %2378 = vmatpush1.msra.mxu0 0.0
  %2379 = vmatprep.subr.mxu0 0.0
  %2380 = vmatpush1.msra.mxu0 0.0
  %2381 = vmatprep.subr.mxu0 0.0
  %2382 = vmatpush1.msra.mxu0 0.0
  %2383 = vmatprep.mubr.f32.mxu0 0.0
  %2384 = vmatmul.mubr.f32.gmra.mrb[0].mxu0 %v2314
  %v2385 = vpop.f32.mrb[0].mxu0
  %v2386 = vadd.f32 0.0, %v2385
  %v2387 = vpop.f32.mrb[0].mxu0
  %2388 = vmatprep.mubr.f32.mxu0 0.0
  %2389 = vmatmul.mubr.f32.gmra.mrb[0].mxu0 %v2317
  %v2390 = vpop.f32.mrb[0].mxu0
  %v2391 = vadd.f32 0.0, %v2390
  %v2392 = vpop.f32.mrb[0].mxu0
  %2393 = vdwg.mxu0
  %2394 = vrot.lane.b32.xlu0 %v819, 72
  %v2395 = vpop.permute.xlu0 %2394
  %2396 = vrot.lane.b32.xlu0 %v824, 72
  %v2397 = vpop.permute.xlu0 %2396
  %2398 = vrot.lane.b32.xlu0 %v903, 72
  %v2399 = vpop.permute.xlu0 %2398
  %2400 = vrot.lane.b32.xlu0 %v908, 72
  %v2401 = vpop.permute.xlu0 %2400
  %v2402 = vsel %vm1001, %v2395, 0
  %v2404 = vsel %vm1001, %v2397, 0
  %v2406 = vsel %vm1001, %v2399, 0
  %v2408 = vsel %vm1001, %v2401, 0
  %2410 = vmatprep.subr.mxu0 0.0
  %2411 = vmatpush1.xpose.msra.mxu0 %v2406
  %2412 = vmatprep.subr.mxu0 0.0
  %2413 = vmatpush1.xpose.msra.mxu0 %v2408
  %2414 = vmatprep.subr.mxu0 0.0
  %2415 = vmatpush1.xpose.msra.mxu0 0.0
  %2416 = vmatprep.subr.mxu0 0.0
  %2417 = vmatpush1.xpose.msra.mxu0 0.0
  %2418 = vmatprep.subr.mxu0 0.0
  %2419 = vmatpush1.xpose.msra.mxu0 0.0
  %2420 = vmatprep.subr.mxu0 0.0
  %2421 = vmatpush1.xpose.msra.mxu0 0.0
  %2422 = vmatprep.subr.mxu0 0.0
  %2423 = vmatpush1.xpose.msra.mxu0 0.0
  %2424 = vmatprep.subr.mxu0 0.0
  %2425 = vmatpush1.xpose.msra.mxu0 0.0
  %2426 = vmatprep.subr.mxu0 0.0
  %2427 = vmatpush1.xpose.msra.mxu0 0.0
  %2428 = vmatprep.subr.mxu0 0.0
  %2429 = vmatpush1.xpose.msra.mxu0 0.0
  %2430 = vmatprep.subr.mxu0 0.0
  %2431 = vmatpush1.xpose.msra.mxu0 0.0
  %2432 = vmatprep.subr.mxu0 0.0
  %2433 = vmatpush1.xpose.msra.mxu0 0.0
  %2434 = vmatprep.subr.mxu0 0.0
  %2435 = vmatpush1.xpose.msra.mxu0 0.0
  %2436 = vmatprep.subr.mxu0 0.0
  %2437 = vmatpush1.xpose.msra.mxu0 0.0
  %2438 = vmatprep.subr.mxu0 0.0
  %2439 = vmatpush1.xpose.msra.mxu0 0.0
  %2440 = vmatprep.subr.mxu0 0.0
  %2441 = vmatpush1.xpose.msra.mxu0 0.0
  %2442 = vmatprep.subr.mxu0 0.0
  %2443 = vmatpush1.xpose.msra.mxu0 0.0
  %2444 = vmatprep.subr.mxu0 0.0
  %2445 = vmatpush1.xpose.msra.mxu0 0.0
  %2446 = vmatprep.subr.mxu0 0.0
  %2447 = vmatpush1.xpose.msra.mxu0 0.0
  %2448 = vmatprep.subr.mxu0 0.0
  %2449 = vmatpush1.xpose.msra.mxu0 0.0
  %2450 = vmatprep.subr.mxu0 0.0
  %2451 = vmatpush1.xpose.msra.mxu0 0.0
  %2452 = vmatprep.subr.mxu0 0.0
  %2453 = vmatpush1.xpose.msra.mxu0 0.0
  %2454 = vmatprep.subr.mxu0 0.0
  %2455 = vmatpush1.xpose.msra.mxu0 0.0
  %2456 = vmatprep.subr.mxu0 0.0
  %2457 = vmatpush1.xpose.msra.mxu0 0.0
  %2458 = vmatprep.subr.mxu0 0.0
  %2459 = vmatpush1.xpose.msra.mxu0 0.0
  %2460 = vmatprep.subr.mxu0 0.0
  %2461 = vmatpush1.xpose.msra.mxu0 0.0
  %2462 = vmatprep.subr.mxu0 0.0
  %2463 = vmatpush1.xpose.msra.mxu0 0.0
  %2464 = vmatprep.subr.mxu0 0.0
  %2465 = vmatpush1.xpose.msra.mxu0 0.0
  %2466 = vmatprep.subr.mxu0 0.0
  %2467 = vmatpush1.xpose.msra.mxu0 0.0
  %2468 = vmatprep.subr.mxu0 0.0
  %2469 = vmatpush1.xpose.msra.mxu0 0.0
  %2470 = vmatprep.subr.mxu0 0.0
  %2471 = vmatpush1.xpose.msra.mxu0 0.0
  %2472 = vmatprep.subr.mxu0 0.0
  %2473 = vmatpush1.xpose.msra.mxu0 0.0
  %2474 = vmatprep.mubr.f32.mxu0 0.0
  %2475 = vmatmul.mubr.f32.gmra.mrb[0].mxu0 %v2402
  %v2476 = vpop.f32.mrb[0].mxu0
  %v2477 = vadd.f32 %v996, %v2476
  %v2478 = vpop.f32.mrb[0].mxu0
  %2479 = vmatprep.mubr.f32.mxu0 0.0
  %2480 = vmatmul.mubr.f32.gmra.mrb[0].mxu0 %v2404
  %v2481 = vpop.f32.mrb[0].mxu0
  %v2482 = vadd.f32 %v998, %v2481
  %v2483 = vpop.f32.mrb[0].mxu0
  %2484 = vdwg.mxu0
  %v2485 = vsel %vm88, %v2477, -inf
  %2486 = vmax.xlane.f32.xlu0 %v2485
  %v2487 = vpop.xlane.xlu0 %2486
  %v2488 = vsel %vm88, %v2482, -inf
  %2489 = vmax.xlane.f32.xlu0 %v2488
  %v2490 = vpop.xlane.xlu0 %2489
  %v2491 = vsub.f32 %v2477, %v2487
  %v2492 = vsub.f32 %v2482, %v2490
  %v2493 = vmul.f32 %v2491, 1.442695
  %v2494 = vpow.pop %v2493
  %v2495 = vmul.f32 %v2492, 1.442695
  %v2496 = vpow.pop %v2495
  %v2497 = vsel %vm88, %v2494, 0.0
  %2498 = vadd.xlane.f32.xlu0 %v2497
  %v2499 = vpop.xlane.xlu0 %2498
  %v2500 = vsel %vm88, %v2496, 0.0
  %2501 = vadd.xlane.f32.xlu0 %v2500
  %v2502 = vpop.xlane.xlu0 %2501
  %v2503 = vrcp.pop %v2499
  %v2504 = vrcp.pop %v2502
  %v2505 = vmul.f32 %v2494, %v2503
  %v2506 = vmul.f32 %v2496, %v2504
  %2507 = vrot.lane.b32.xlu0 %v987, 72
  %v2508 = vpop.permute.xlu0 %2507
  %2509 = vrot.lane.b32.xlu0 %v992, 72
  %v2510 = vpop.permute.xlu0 %2509
  %v2514 = vsel %vm88, %v2505, 0
  %v2517 = vsel %vm88, %v2506, 0
  %2519 = vmatprep.subr.mxu0 0.0
  %2520 = vmatpush1.msra.mxu0 %v2508
  %2521 = vmatprep.subr.mxu0 0.0
  %2522 = vmatpush1.msra.mxu0 %v2510
  %2523 = vmatprep.subr.mxu0 0.0
  %2524 = vmatpush1.msra.mxu0 0.0
  %2525 = vmatprep.subr.mxu0 0.0
  %2526 = vmatpush1.msra.mxu0 0.0
  %2527 = vmatprep.subr.mxu0 0.0
  %2528 = vmatpush1.msra.mxu0 0.0
  %2529 = vmatprep.subr.mxu0 0.0
  %2530 = vmatpush1.msra.mxu0 0.0
  %2531 = vmatprep.subr.mxu0 0.0
  %2532 = vmatpush1.msra.mxu0 0.0
  %2533 = vmatprep.subr.mxu0 0.0
  %2534 = vmatpush1.msra.mxu0 0.0
  %2535 = vmatprep.subr.mxu0 0.0
  %2536 = vmatpush1.msra.mxu0 0.0
  %2537 = vmatprep.subr.mxu0 0.0
  %2538 = vmatpush1.msra.mxu0 0.0
  %2539 = vmatprep.subr.mxu0 0.0
  %2540 = vmatpush1.msra.mxu0 0.0
  %2541 = vmatprep.subr.mxu0 0.0
  %2542 = vmatpush1.msra.mxu0 0.0
  %2543 = vmatprep.subr.mxu0 0.0
  %2544 = vmatpush1.msra.mxu0 0.0
  %2545 = vmatprep.subr.mxu0 0.0
  %2546 = vmatpush1.msra.mxu0 0.0
  %2547 = vmatprep.subr.mxu0 0.0
  %2548 = vmatpush1.msra.mxu0 0.0
  %2549 = vmatprep.subr.mxu0 0.0
  %2550 = vmatpush1.msra.mxu0 0.0
  %2551 = vmatprep.subr.mxu0 0.0
  %2552 = vmatpush1.msra.mxu0 0.0
  %2553 = vmatprep.subr.mxu0 0.0
  %2554 = vmatpush1.msra.mxu0 0.0
  %2555 = vmatprep.subr.mxu0 0.0
  %2556 = vmatpush1.msra.mxu0 0.0
  %2557 = vmatprep.subr.mxu0 0.0
  %2558 = vmatpush1.msra.mxu0 0.0
  %2559 = vmatprep.subr.mxu0 0.0
  %2560 = vmatpush1.msra.mxu0 0.0
  %2561 = vmatprep.subr.mxu0 0.0
  %2562 = vmatpush1.msra.mxu0 0.0
  %2563 = vmatprep.subr.mxu0 0.0
  %2564 = vmatpush1.msra.mxu0 0.0
  %2565 = vmatprep.subr.mxu0 0.0
  %2566 = vmatpush1.msra.mxu0 0.0
  %2567 = vmatprep.subr.mxu0 0.0
  %2568 = vmatpush1.msra.mxu0 0.0
  %2569 = vmatprep.subr.mxu0 0.0
  %2570 = vmatpush1.msra.mxu0 0.0
  %2571 = vmatprep.subr.mxu0 0.0
  %2572 = vmatpush1.msra.mxu0 0.0
  %2573 = vmatprep.subr.mxu0 0.0
  %2574 = vmatpush1.msra.mxu0 0.0
  %2575 = vmatprep.subr.mxu0 0.0
  %2576 = vmatpush1.msra.mxu0 0.0
  %2577 = vmatprep.subr.mxu0 0.0
  %2578 = vmatpush1.msra.mxu0 0.0
  %2579 = vmatprep.subr.mxu0 0.0
  %2580 = vmatpush1.msra.mxu0 0.0
  %2581 = vmatprep.subr.mxu0 0.0
  %2582 = vmatpush1.msra.mxu0 0.0
  %2583 = vmatprep.mubr.f32.mxu0 0.0
  %2584 = vmatmul.mubr.f32.gmra.mrb[0].mxu0 %v2514
  %v2585 = vpop.f32.mrb[0].mxu0
  %v2586 = vadd.f32 0.0, %v2585
  %v2587 = vpop.f32.mrb[0].mxu0
  %2588 = vmatprep.mubr.f32.mxu0 0.0
  %2589 = vmatmul.mubr.f32.gmra.mrb[0].mxu0 %v2517
  %v2590 = vpop.f32.mrb[0].mxu0
  %v2591 = vadd.f32 0.0, %v2590
  %v2592 = vpop.f32.mrb[0].mxu0
  %2593 = vdwg.mxu0
  %2594 = vrot.lane.b32.xlu0 %v819, 64
  %v2595 = vpop.permute.xlu0 %2594
  %2596 = vrot.lane.b32.xlu0 %v824, 64
  %v2597 = vpop.permute.xlu0 %2596
  %2598 = vrot.lane.b32.xlu0 %v903, 64
  %v2599 = vpop.permute.xlu0 %2598
  %2600 = vrot.lane.b32.xlu0 %v908, 64
  %v2601 = vpop.permute.xlu0 %2600
  %v2602 = vsel %vm1001, %v2595, 0
  %v2604 = vsel %vm1001, %v2597, 0
  %v2606 = vsel %vm1001, %v2599, 0
  %v2608 = vsel %vm1001, %v2601, 0
  %2610 = vmatprep.subr.mxu0 0.0
  %2611 = vmatpush1.xpose.msra.mxu0 %v2606
  %2612 = vmatprep.subr.mxu0 0.0
  %2613 = vmatpush1.xpose.msra.mxu0 %v2608
  %2614 = vmatprep.subr.mxu0 0.0
  %2615 = vmatpush1.xpose.msra.mxu0 0.0
  %2616 = vmatprep.subr.mxu0 0.0
  %2617 = vmatpush1.xpose.msra.mxu0 0.0
  %2618 = vmatprep.subr.mxu0 0.0
  %2619 = vmatpush1.xpose.msra.mxu0 0.0
  %2620 = vmatprep.subr.mxu0 0.0
  %2621 = vmatpush1.xpose.msra.mxu0 0.0
  %2622 = vmatprep.subr.mxu0 0.0
  %2623 = vmatpush1.xpose.msra.mxu0 0.0
  %2624 = vmatprep.subr.mxu0 0.0
  %2625 = vmatpush1.xpose.msra.mxu0 0.0
  %2626 = vmatprep.subr.mxu0 0.0
  %2627 = vmatpush1.xpose.msra.mxu0 0.0
  %2628 = vmatprep.subr.mxu0 0.0
  %2629 = vmatpush1.xpose.msra.mxu0 0.0
  %2630 = vmatprep.subr.mxu0 0.0
  %2631 = vmatpush1.xpose.msra.mxu0 0.0
  %2632 = vmatprep.subr.mxu0 0.0
  %2633 = vmatpush1.xpose.msra.mxu0 0.0
  %2634 = vmatprep.subr.mxu0 0.0
  %2635 = vmatpush1.xpose.msra.mxu0 0.0
  %2636 = vmatprep.subr.mxu0 0.0
  %2637 = vmatpush1.xpose.msra.mxu0 0.0
  %2638 = vmatprep.subr.mxu0 0.0
  %2639 = vmatpush1.xpose.msra.mxu0 0.0
  %2640 = vmatprep.subr.mxu0 0.0
  %2641 = vmatpush1.xpose.msra.mxu0 0.0
  %2642 = vmatprep.subr.mxu0 0.0
  %2643 = vmatpush1.xpose.msra.mxu0 0.0
  %2644 = vmatprep.subr.mxu0 0.0
  %2645 = vmatpush1.xpose.msra.mxu0 0.0
  %2646 = vmatprep.subr.mxu0 0.0
  %2647 = vmatpush1.xpose.msra.mxu0 0.0
  %2648 = vmatprep.subr.mxu0 0.0
  %2649 = vmatpush1.xpose.msra.mxu0 0.0
  %2650 = vmatprep.subr.mxu0 0.0
  %2651 = vmatpush1.xpose.msra.mxu0 0.0
  %2652 = vmatprep.subr.mxu0 0.0
  %2653 = vmatpush1.xpose.msra.mxu0 0.0
  %2654 = vmatprep.subr.mxu0 0.0
  %2655 = vmatpush1.xpose.msra.mxu0 0.0
  %2656 = vmatprep.subr.mxu0 0.0
  %2657 = vmatpush1.xpose.msra.mxu0 0.0
  %2658 = vmatprep.subr.mxu0 0.0
  %2659 = vmatpush1.xpose.msra.mxu0 0.0
  %2660 = vmatprep.subr.mxu0 0.0
  %2661 = vmatpush1.xpose.msra.mxu0 0.0
  %2662 = vmatprep.subr.mxu0 0.0
  %2663 = vmatpush1.xpose.msra.mxu0 0.0
  %2664 = vmatprep.subr.mxu0 0.0
  %2665 = vmatpush1.xpose.msra.mxu0 0.0
  %2666 = vmatprep.subr.mxu0 0.0
  %2667 = vmatpush1.xpose.msra.mxu0 0.0
  %2668 = vmatprep.subr.mxu0 0.0
  %2669 = vmatpush1.xpose.msra.mxu0 0.0
  %2670 = vmatprep.subr.mxu0 0.0
  %2671 = vmatpush1.xpose.msra.mxu0 0.0
  %2672 = vmatprep.subr.mxu0 0.0
  %2673 = vmatpush1.xpose.msra.mxu0 0.0
  %2674 = vmatprep.mubr.f32.mxu0 0.0
  %2675 = vmatmul.mubr.f32.gmra.mrb[0].mxu0 %v2602
  %v2676 = vpop.f32.mrb[0].mxu0
  %v2677 = vadd.f32 %v996, %v2676
  %v2678 = vpop.f32.mrb[0].mxu0
  %2679 = vmatprep.mubr.f32.mxu0 0.0
  %2680 = vmatmul.mubr.f32.gmra.mrb[0].mxu0 %v2604
  %v2681 = vpop.f32.mrb[0].mxu0
  %v2682 = vadd.f32 %v998, %v2681
  %v2683 = vpop.f32.mrb[0].mxu0
  %2684 = vdwg.mxu0
  %v2685 = vsel %vm88, %v2677, -inf
  %2686 = vmax.xlane.f32.xlu0 %v2685
  %v2687 = vpop.xlane.xlu0 %2686
  %v2688 = vsel %vm88, %v2682, -inf
  %2689 = vmax.xlane.f32.xlu0 %v2688
  %v2690 = vpop.xlane.xlu0 %2689
  %v2691 = vsub.f32 %v2677, %v2687
  %v2692 = vsub.f32 %v2682, %v2690
  %v2693 = vmul.f32 %v2691, 1.442695
  %v2694 = vpow.pop %v2693
  %v2695 = vmul.f32 %v2692, 1.442695
  %v2696 = vpow.pop %v2695
  %v2697 = vsel %vm88, %v2694, 0.0
  %2698 = vadd.xlane.f32.xlu0 %v2697
  %v2699 = vpop.xlane.xlu0 %2698
  %v2700 = vsel %vm88, %v2696, 0.0
  %2701 = vadd.xlane.f32.xlu0 %v2700
  %v2702 = vpop.xlane.xlu0 %2701
  %v2703 = vrcp.pop %v2699
  %v2704 = vrcp.pop %v2702
  %v2705 = vmul.f32 %v2694, %v2703
  %v2706 = vmul.f32 %v2696, %v2704
  %2707 = vrot.lane.b32.xlu0 %v987, 64
  %v2708 = vpop.permute.xlu0 %2707
  %2709 = vrot.lane.b32.xlu0 %v992, 64
  %v2710 = vpop.permute.xlu0 %2709
  %v2714 = vsel %vm88, %v2705, 0
  %v2717 = vsel %vm88, %v2706, 0
  %2719 = vmatprep.subr.mxu0 0.0
  %2720 = vmatpush1.msra.mxu0 %v2708
  %2721 = vmatprep.subr.mxu0 0.0
  %2722 = vmatpush1.msra.mxu0 %v2710
  %2723 = vmatprep.subr.mxu0 0.0
  %2724 = vmatpush1.msra.mxu0 0.0
  %2725 = vmatprep.subr.mxu0 0.0
  %2726 = vmatpush1.msra.mxu0 0.0
  %2727 = vmatprep.subr.mxu0 0.0
  %2728 = vmatpush1.msra.mxu0 0.0
  %2729 = vmatprep.subr.mxu0 0.0
  %2730 = vmatpush1.msra.mxu0 0.0
  %2731 = vmatprep.subr.mxu0 0.0
  %2732 = vmatpush1.msra.mxu0 0.0
  %2733 = vmatprep.subr.mxu0 0.0
  %2734 = vmatpush1.msra.mxu0 0.0
  %2735 = vmatprep.subr.mxu0 0.0
  %2736 = vmatpush1.msra.mxu0 0.0
  %2737 = vmatprep.subr.mxu0 0.0
  %2738 = vmatpush1.msra.mxu0 0.0
  %2739 = vmatprep.subr.mxu0 0.0
  %2740 = vmatpush1.msra.mxu0 0.0
  %2741 = vmatprep.subr.mxu0 0.0
  %2742 = vmatpush1.msra.mxu0 0.0
  %2743 = vmatprep.subr.mxu0 0.0
  %2744 = vmatpush1.msra.mxu0 0.0
  %2745 = vmatprep.subr.mxu0 0.0
  %2746 = vmatpush1.msra.mxu0 0.0
  %2747 = vmatprep.subr.mxu0 0.0
  %2748 = vmatpush1.msra.mxu0 0.0
  %2749 = vmatprep.subr.mxu0 0.0
  %2750 = vmatpush1.msra.mxu0 0.0
  %2751 = vmatprep.subr.mxu0 0.0
  %2752 = vmatpush1.msra.mxu0 0.0
  %2753 = vmatprep.subr.mxu0 0.0
  %2754 = vmatpush1.msra.mxu0 0.0
  %2755 = vmatprep.subr.mxu0 0.0
  %2756 = vmatpush1.msra.mxu0 0.0
  %2757 = vmatprep.subr.mxu0 0.0
  %2758 = vmatpush1.msra.mxu0 0.0
  %2759 = vmatprep.subr.mxu0 0.0
  %2760 = vmatpush1.msra.mxu0 0.0
  %2761 = vmatprep.subr.mxu0 0.0
  %2762 = vmatpush1.msra.mxu0 0.0
  %2763 = vmatprep.subr.mxu0 0.0
  %2764 = vmatpush1.msra.mxu0 0.0
  %2765 = vmatprep.subr.mxu0 0.0
  %2766 = vmatpush1.msra.mxu0 0.0
  %2767 = vmatprep.subr.mxu0 0.0
  %2768 = vmatpush1.msra.mxu0 0.0
  %2769 = vmatprep.subr.mxu0 0.0
  %2770 = vmatpush1.msra.mxu0 0.0
  %2771 = vmatprep.subr.mxu0 0.0
  %2772 = vmatpush1.msra.mxu0 0.0
  %2773 = vmatprep.subr.mxu0 0.0
  %2774 = vmatpush1.msra.mxu0 0.0
  %2775 = vmatprep.subr.mxu0 0.0
  %2776 = vmatpush1.msra.mxu0 0.0
  %2777 = vmatprep.subr.mxu0 0.0
  %2778 = vmatpush1.msra.mxu0 0.0
  %2779 = vmatprep.subr.mxu0 0.0
  %2780 = vmatpush1.msra.mxu0 0.0
  %2781 = vmatprep.subr.mxu0 0.0
  %2782 = vmatpush1.msra.mxu0 0.0
  %2783 = vmatprep.mubr.f32.mxu0 0.0
  %2784 = vmatmul.mubr.f32.gmra.mrb[0].mxu0 %v2714
  %v2785 = vpop.f32.mrb[0].mxu0
  %v2786 = vadd.f32 0.0, %v2785
  %v2787 = vpop.f32.mrb[0].mxu0
  %2788 = vmatprep.mubr.f32.mxu0 0.0
  %2789 = vmatmul.mubr.f32.gmra.mrb[0].mxu0 %v2717
  %v2790 = vpop.f32.mrb[0].mxu0
  %v2791 = vadd.f32 0.0, %v2790
  %v2792 = vpop.f32.mrb[0].mxu0
  %2793 = vdwg.mxu0
  %2796 = vrot.lane.b32.xlu0 %v1386, 8
  %v2797 = vpop.permute.xlu0 %2796
  %2798 = vrot.lane.b32.xlu0 %v1391, 8
  %v2799 = vpop.permute.xlu0 %2798
  %2804 = vrot.lane.b32.xlu0 %v1586, 16
  %v2805 = vpop.permute.xlu0 %2804
  %2806 = vrot.lane.b32.xlu0 %v1591, 16
  %v2807 = vpop.permute.xlu0 %2806
  %2812 = vrot.lane.b32.xlu0 %v1786, 24
  %v2813 = vpop.permute.xlu0 %2812
  %2814 = vrot.lane.b32.xlu0 %v1791, 24
  %v2815 = vpop.permute.xlu0 %2814
  %2820 = vrot.lane.b32.xlu0 %v1986, 32
  %v2821 = vpop.permute.xlu0 %2820
  %2822 = vrot.lane.b32.xlu0 %v1991, 32
  %v2823 = vpop.permute.xlu0 %2822
  %2828 = vrot.lane.b32.xlu0 %v2186, 40
  %v2829 = vpop.permute.xlu0 %2828
  %2830 = vrot.lane.b32.xlu0 %v2191, 40
  %v2831 = vpop.permute.xlu0 %2830
  %2836 = vrot.lane.b32.xlu0 %v2386, 48
  %v2837 = vpop.permute.xlu0 %2836
  %2838 = vrot.lane.b32.xlu0 %v2391, 48
  %v2839 = vpop.permute.xlu0 %2838
  %2844 = vrot.lane.b32.xlu0 %v2586, 56
  %v2845 = vpop.permute.xlu0 %2844
  %2846 = vrot.lane.b32.xlu0 %v2591, 56
  %v2847 = vpop.permute.xlu0 %2846
  %2852 = vrot.lane.b32.xlu0 %v2786, 64
  %v2853 = vpop.permute.xlu0 %2852
  %2854 = vrot.lane.b32.xlu0 %v2791, 64
  %v2855 = vpop.permute.xlu0 %2854
  %v2858 = vsel %vm1001, %v1184, %v2797
  %v2859 = vsel %vm1001, %v1189, %v2799
  %v2860 = vsel %vm88, %v2858, %v2805
  %v2861 = vsel %vm88, %v2859, %v2807
  %v2862 = vsel %vm73, %v2860, %v2813
  %v2863 = vsel %vm73, %v2861, %v2815
  %v2864 = vsel %vm276, %v2862, %v2821
  %v2865 = vsel %vm276, %v2863, %v2823
  %v2866 = vsel %vm91, %v2864, %v2829
  %v2867 = vsel %vm91, %v2865, %v2831
  %v2868 = vsel %vm76, %v2866, %v2837
  %v2869 = vsel %vm76, %v2867, %v2839
  %vm2870 = vcmask 457728
  %v2871 = vsel %vm2870, %v2868, %v2845
  %v2872 = vsel %vm2870, %v2869, %v2847
  %v2873 = vsel %vm141, %v2871, %v2853
  %v2874 = vsel %vm141, %v2872, %v2855
  %v2875 = vld [vmem:[%s1 + $0x858] sm:$0xff]
  %v2876 = vld [vmem:[%s1 + $0x860] sm:$0xff]
  %v2877 = vld [vmem:[%s1 + $0x868] sm:$0xff]
  %v2878 = vld [vmem:[%s1 + $0x870] sm:$0xff]
  %v2879 = vld [vmem:[%s1 + $0x878] sm:$0xff]
  %v2880 = vld [vmem:[%s1 + $0x880] sm:$0xff]
  %v2881 = vld [vmem:[%s1 + $0x888] sm:$0xff]
  %v2882 = vld [vmem:[%s1 + $0x890] sm:$0xff]
  %v2883 = vld [vmem:[%s1 + $0x898] sm:$0xff]
  %v2885 = vsel %vm79, %v2873, 0
  %v2888 = vsel %vm79, %v2874, 0
  %2890 = vmatprep.subr.mxu0 0.0
  %2891 = vmatpush1.msra.mxu0 %v2875
  %2892 = vmatprep.subr.mxu0 0.0
  %2893 = vmatpush1.msra.mxu0 %v2876
  %2894 = vmatprep.subr.mxu0 0.0
  %2895 = vmatpush1.msra.mxu0 %v2877
  %2896 = vmatprep.subr.mxu0 0.0
  %2897 = vmatpush1.msra.mxu0 %v2878
  %2898 = vmatprep.subr.mxu0 0.0
  %2899 = vmatpush1.msra.mxu0 %v2879
  %2900 = vmatprep.subr.mxu0 0.0
  %2901 = vmatpush1.msra.mxu0 %v2880
  %2902 = vmatprep.subr.mxu0 0.0
  %2903 = vmatpush1.msra.mxu0 %v2881
  %2904 = vmatprep.subr.mxu0 0.0
  %2905 = vmatpush1.msra.mxu0 %v2882
  %2906 = vmatprep.subr.mxu0 0.0
  %2907 = vmatpush1.msra.mxu0 %v2883
  %2908 = vmatprep.subr.mxu0 0.0
  %2909 = vmatpush1.msra.mxu0 0.0
  %2910 = vmatprep.subr.mxu0 0.0
  %2911 = vmatpush1.msra.mxu0 0.0
  %2912 = vmatprep.subr.mxu0 0.0
  %2913 = vmatpush1.msra.mxu0 0.0
  %2914 = vmatprep.subr.mxu0 0.0
  %2915 = vmatpush1.msra.mxu0 0.0
  %2916 = vmatprep.subr.mxu0 0.0
  %2917 = vmatpush1.msra.mxu0 0.0
  %2918 = vmatprep.subr.mxu0 0.0
  %2919 = vmatpush1.msra.mxu0 0.0
  %2920 = vmatprep.subr.mxu0 0.0
  %2921 = vmatpush1.msra.mxu0 0.0
  %2922 = vmatprep.subr.mxu0 0.0
  %2923 = vmatpush1.msra.mxu0 0.0
  %2924 = vmatprep.subr.mxu0 0.0
  %2925 = vmatpush1.msra.mxu0 0.0
  %2926 = vmatprep.subr.mxu0 0.0
  %2927 = vmatpush1.msra.mxu0 0.0
  %2928 = vmatprep.subr.mxu0 0.0
  %2929 = vmatpush1.msra.mxu0 0.0
  %2930 = vmatprep.subr.mxu0 0.0
  %2931 = vmatpush1.msra.mxu0 0.0
  %2932 = vmatprep.subr.mxu0 0.0
  %2933 = vmatpush1.msra.mxu0 0.0
  %2934 = vmatprep.subr.mxu0 0.0
  %2935 = vmatpush1.msra.mxu0 0.0
  %2936 = vmatprep.subr.mxu0 0.0
  %2937 = vmatpush1.msra.mxu0 0.0
  %2938 = vmatprep.subr.mxu0 0.0
  %2939 = vmatpush1.msra.mxu0 0.0
  %2940 = vmatprep.subr.mxu0 0.0
  %2941 = vmatpush1.msra.mxu0 0.0
  %2942 = vmatprep.subr.mxu0 0.0
  %2943 = vmatpush1.msra.mxu0 0.0
  %2944 = vmatprep.subr.mxu0 0.0
  %2945 = vmatpush1.msra.mxu0 0.0
  %2946 = vmatprep.subr.mxu0 0.0
  %2947 = vmatpush1.msra.mxu0 0.0
  %2948 = vmatprep.subr.mxu0 0.0
  %2949 = vmatpush1.msra.mxu0 0.0
  %2950 = vmatprep.subr.mxu0 0.0
  %2951 = vmatpush1.msra.mxu0 0.0
  %2952 = vmatprep.subr.mxu0 0.0
  %2953 = vmatpush1.msra.mxu0 0.0
  %2954 = vmatprep.mubr.f32.mxu0 0.0
  %2955 = vmatmul.mubr.f32.gmra.mrb[0].mxu0 %v2885
  %v2956 = vpop.f32.mrb[0].mxu0
  %v2957 = vadd.f32 %v729, %v2956
  %v2958 = vpop.f32.mrb[0].mxu0
  %2959 = vmatprep.mubr.f32.mxu0 0.0
  %2960 = vmatmul.mubr.f32.gmra.mrb[0].mxu0 %v2888
  %v2961 = vpop.f32.mrb[0].mxu0
  %v2962 = vadd.f32 %v734, %v2961
  %v2963 = vpop.f32.mrb[0].mxu0
  %2964 = vdwg.mxu0
  %2967 = vrot.lane.b32.xlu0 %v2957, 72
  %v2968 = vpop.permute.xlu0 %2967
  %2969 = vrot.lane.b32.xlu0 %v2962, 72
  %v2970 = vpop.permute.xlu0 %2969
  %2973 = vrot.lane.b32.xlu0 %v2957, 16
  %v2974 = vpop.permute.xlu0 %2973
  %2975 = vrot.lane.b32.xlu0 %v2962, 16
  %v2976 = vpop.permute.xlu0 %2975
  %2979 = vrot.lane.b32.xlu0 %v2957, 88
  %v2980 = vpop.permute.xlu0 %2979
  %2981 = vrot.lane.b32.xlu0 %v2962, 88
  %v2982 = vpop.permute.xlu0 %2981
  %2985 = vrot.lane.b32.xlu0 %v2957, 32
  %v2986 = vpop.permute.xlu0 %2985
  %2987 = vrot.lane.b32.xlu0 %v2962, 32
  %v2988 = vpop.permute.xlu0 %2987
  %2991 = vrot.lane.b32.xlu0 %v2957, 104
  %v2992 = vpop.permute.xlu0 %2991
  %2993 = vrot.lane.b32.xlu0 %v2962, 104
  %v2994 = vpop.permute.xlu0 %2993
  %2997 = vrot.lane.b32.xlu0 %v2957, 48
  %v2998 = vpop.permute.xlu0 %2997
  %2999 = vrot.lane.b32.xlu0 %v2962, 48
  %v3000 = vpop.permute.xlu0 %2999
  %3003 = vrot.lane.b32.xlu0 %v2957, 120
  %v3004 = vpop.permute.xlu0 %3003
  %3005 = vrot.lane.b32.xlu0 %v2962, 120
  %v3006 = vpop.permute.xlu0 %3005
  %v3009 = vsel %vm79, %v2957, %v2968
  %v3010 = vsel %vm79, %v2962, %v2970
  %v3011 = vsel %vm88, %v2968, %v2974
  %v3012 = vsel %vm88, %v2970, %v2976
  %v3013 = vsel %vm273, %v3011, %v2980
  %v3014 = vsel %vm273, %v3012, %v2982
  %v3015 = vsel %vm276, %v2980, %v2986
  %v3016 = vsel %vm276, %v2982, %v2988
  %v3017 = vsel %vm279, %v3015, %v2992
  %v3018 = vsel %vm279, %v3016, %v2994
  %v3019 = vsel %vm76, %v2992, %v2998
  %v3020 = vsel %vm76, %v2994, %v3000
  %v3021 = vsel %vm85, %v3019, %v3004
  %v3022 = vsel %vm85, %v3020, %v3006
  %v3023 = vmul.f32 %v3009, %v321
  %v3024 = vmul.f32 %v3013, %v322
  %v3025 = vmul.f32 %v3017, %v323
  %v3026 = vmul.f32 %v3021, %v324
  %v3027 = vmul.f32 %v3004, %v325
  %v3028 = vmul.f32 %v3010, %v326
  %v3029 = vmul.f32 %v3014, %v327
  %v3030 = vmul.f32 %v3018, %v328
  %v3031 = vmul.f32 %v3022, %v329
  %v3032 = vmul.f32 %v3006, %v330
  %v3033 = vld [vmem:[%s1 + $0x300] sm:$0xff]
  %v3034 = vld [vmem:[%s1 + $0x308] sm:$0xff]
  %v3035 = vld [vmem:[%s1 + $0x310] sm:$0xff]
  %v3036 = vld [vmem:[%s1 + $0x318] sm:$0xff]
  %v3037 = vld [vmem:[%s1 + $0x320] sm:$0xff]
  %v3038 = vld [vmem:[%s1 + $0x328] sm:$0xff]
  %v3039 = vld [vmem:[%s1 + $0x330] sm:$0xff]
  %v3040 = vld [vmem:[%s1 + $0x338] sm:$0xff]
  %v3041 = vld [vmem:[%s1 + $0x340] sm:$0xff]
  %v3042 = vld [vmem:[%s1 + $0x348] sm:$0xff]
  %v3043 = vld [vmem:[%s1 + $0x350] sm:$0xff]
  %v3044 = vld [vmem:[%s1 + $0x358] sm:$0xff]
  %v3045 = vld [vmem:[%s1 + $0x360] sm:$0xff]
  %v3046 = vld [vmem:[%s1 + $0x368] sm:$0xff]
  %v3047 = vld [vmem:[%s1 + $0x370] sm:$0xff]
  %v3048 = vld [vmem:[%s1 + $0x378] sm:$0xff]
  %v3049 = vld [vmem:[%s1 + $0x380] sm:$0xff]
  %v3050 = vld [vmem:[%s1 + $0x388] sm:$0xff]
  %v3051 = vld [vmem:[%s1 + $0x390] sm:$0xff]
  %v3052 = vld [vmem:[%s1 + $0x398] sm:$0xff]
  %v3053 = vld [vmem:[%s1 + $0x3a0] sm:$0xff]
  %v3054 = vld [vmem:[%s1 + $0x3a8] sm:$0xff]
  %v3055 = vld [vmem:[%s1 + $0x3b0] sm:$0xff]
  %v3056 = vld [vmem:[%s1 + $0x3b8] sm:$0xff]
  %v3057 = vld [vmem:[%s1 + $0x3c0] sm:$0xff]
  %v3058 = vld [vmem:[%s1 + $0x3c8] sm:$0xff]
  %v3059 = vld [vmem:[%s1 + $0x3d0] sm:$0xff]
  %v3060 = vld [vmem:[%s1 + $0x3d8] sm:$0xff]
  %v3061 = vld [vmem:[%s1 + $0x3e0] sm:$0xff]
  %v3062 = vld [vmem:[%s1 + $0x3e8] sm:$0xff]
  %v3063 = vld [vmem:[%s1 + $0x3f0] sm:$0xff]
  %v3064 = vld [vmem:[%s1 + $0x3f8] sm:$0xff]
  %v3065 = vld [vmem:[%s1 + $0x400] sm:$0xff]
  %v3066 = vld [vmem:[%s1 + $0x408] sm:$0xff]
  %v3067 = vld [vmem:[%s1 + $0x410] sm:$0xff]
  %v3068 = vld [vmem:[%s1 + $0x418] sm:$0xff]
  %v3069 = vld [vmem:[%s1 + $0x420] sm:$0xff]
  %v3070 = vld [vmem:[%s1 + $0x428] sm:$0xff]
  %v3071 = vld [vmem:[%s1 + $0x430] sm:$0xff]
  %v3072 = vld [vmem:[%s1 + $0x438] sm:$0xff]
  %v3073 = vld [vmem:[%s1 + $0x440] sm:$0xff]
  %v3074 = vld [vmem:[%s1 + $0x448] sm:$0xff]
  %v3075 = vld [vmem:[%s1 + $0x450] sm:$0xff]
  %v3076 = vld [vmem:[%s1 + $0x458] sm:$0xff]
  %v3077 = vld [vmem:[%s1 + $0x460] sm:$0xff]
  %v3078 = vld [vmem:[%s1 + $0x468] sm:$0xff]
  %v3079 = vld [vmem:[%s1 + $0x470] sm:$0xff]
  %v3080 = vld [vmem:[%s1 + $0x478] sm:$0xff]
  %v3081 = vld [vmem:[%s1 + $0x480] sm:$0xff]
  %v3082 = vld [vmem:[%s1 + $0x488] sm:$0xff]
  %v3083 = vld [vmem:[%s1 + $0x490] sm:$0xff]
  %v3084 = vld [vmem:[%s1 + $0x498] sm:$0xff]
  %v3085 = vld [vmem:[%s1 + $0x4a0] sm:$0xff]
  %v3086 = vld [vmem:[%s1 + $0x4a8] sm:$0xff]
  %v3087 = vld [vmem:[%s1 + $0x4b0] sm:$0xff]
  %v3088 = vld [vmem:[%s1 + $0x4b8] sm:$0xff]
  %v3089 = vld [vmem:[%s1 + $0x4c0] sm:$0xff]
  %v3090 = vld [vmem:[%s1 + $0x4c8] sm:$0xff]
  %v3091 = vld [vmem:[%s1 + $0x4d0] sm:$0xff]
  %v3092 = vld [vmem:[%s1 + $0x4d8] sm:$0xff]
  %v3093 = vld [vmem:[%s1 + $0x4e0] sm:$0xff]
  %v3094 = vld [vmem:[%s1 + $0x4e8] sm:$0xff]
  %v3095 = vld [vmem:[%s1 + $0x4f0] sm:$0xff]
  %v3096 = vld [vmem:[%s1 + $0x4f8] sm:$0xff]
  %v3097 = vld [vmem:[%s1 + $0x500] sm:$0xff]
  %v3098 = vld [vmem:[%s1 + $0x508] sm:$0xff]
  %v3099 = vld [vmem:[%s1 + $0x510] sm:$0xff]
  %v3100 = vld [vmem:[%s1 + $0x518] sm:$0xff]
  %v3101 = vld [vmem:[%s1 + $0x520] sm:$0xff]
  %v3102 = vld [vmem:[%s1 + $0x528] sm:$0xff]
  %v3103 = vld [vmem:[%s1 + $0x530] sm:$0xff]
  %v3104 = vld [vmem:[%s1 + $0x538] sm:$0xff]
  %3107 = vrot.lane.b32.xlu0 %v12, 56
  %v3108 = vpop.permute.xlu0 %3107
  %3109 = vrot.lane.b32.xlu0 %v13, 56
  %v3110 = vpop.permute.xlu0 %3109
  %3111 = vrot.lane.b32.xlu0 %v21, 56
  %v3112 = vpop.permute.xlu0 %3111
  %3113 = vrot.lane.b32.xlu0 %v22, 56
  %v3114 = vpop.permute.xlu0 %3113
  %v3115 = vsel %vm2870, %v3108, %v3110
  %v3116 = vsel %vm2870, %v3112, %v3114
  %v3120 = vsel %vm141, %v3027, 0
  %v3123 = vsel %vm141, %v3032, 0
  %3125 = vmatprep.subr.mxu0 0.0
  %3126 = vmatpush1.msra.mxu0 %v3033
  %3127 = vmatprep.subr.mxu0 0.0
  %3128 = vmatpush1.msra.mxu0 %v3034
  %3129 = vmatprep.subr.mxu0 0.0
  %3130 = vmatpush1.msra.mxu0 %v3035
  %3131 = vmatprep.subr.mxu0 0.0
  %3132 = vmatpush1.msra.mxu0 %v3036
  %3133 = vmatprep.subr.mxu0 0.0
  %3134 = vmatpush1.msra.mxu0 %v3037
  %3135 = vmatprep.subr.mxu0 0.0
  %3136 = vmatpush1.msra.mxu0 %v3038
  %3137 = vmatprep.subr.mxu0 0.0
  %3138 = vmatpush1.msra.mxu0 %v3039
  %3139 = vmatprep.subr.mxu0 0.0
  %3140 = vmatpush1.msra.mxu0 %v3040
  %3141 = vmatprep.subr.mxu0 0.0
  %3142 = vmatpush1.msra.mxu0 %v3041
  %3143 = vmatprep.subr.mxu0 0.0
  %3144 = vmatpush1.msra.mxu0 %v3042
  %3145 = vmatprep.subr.mxu0 0.0
  %3146 = vmatpush1.msra.mxu0 %v3043
  %3147 = vmatprep.subr.mxu0 0.0
  %3148 = vmatpush1.msra.mxu0 %v3044
  %3149 = vmatprep.subr.mxu0 0.0
  %3150 = vmatpush1.msra.mxu0 %v3045
  %3151 = vmatprep.subr.mxu0 0.0
  %3152 = vmatpush1.msra.mxu0 %v3046
  %3153 = vmatprep.subr.mxu0 0.0
  %3154 = vmatpush1.msra.mxu0 %v3047
  %3155 = vmatprep.subr.mxu0 0.0
  %3156 = vmatpush1.msra.mxu0 %v3048
  %3157 = vmatprep.subr.mxu0 0.0
  %3158 = vmatpush1.msra.mxu0 %v3049
  %3159 = vmatprep.subr.mxu0 0.0
  %3160 = vmatpush1.msra.mxu0 %v3050
  %3161 = vmatprep.subr.mxu0 0.0
  %3162 = vmatpush1.msra.mxu0 %v3051
  %3163 = vmatprep.subr.mxu0 0.0
  %3164 = vmatpush1.msra.mxu0 %v3052
  %3165 = vmatprep.subr.mxu0 0.0
  %3166 = vmatpush1.msra.mxu0 %v3053
  %3167 = vmatprep.subr.mxu0 0.0
  %3168 = vmatpush1.msra.mxu0 %v3054
  %3169 = vmatprep.subr.mxu0 0.0
  %3170 = vmatpush1.msra.mxu0 %v3055
  %3171 = vmatprep.subr.mxu0 0.0
  %3172 = vmatpush1.msra.mxu0 %v3056
  %3173 = vmatprep.subr.mxu0 0.0
  %3174 = vmatpush1.msra.mxu0 %v3057
  %3175 = vmatprep.subr.mxu0 0.0
  %3176 = vmatpush1.msra.mxu0 %v3058
  %3177 = vmatprep.subr.mxu0 0.0
  %3178 = vmatpush1.msra.mxu0 %v3059
  %3179 = vmatprep.subr.mxu0 0.0
  %3180 = vmatpush1.msra.mxu0 %v3060
  %3181 = vmatprep.subr.mxu0 0.0
  %3182 = vmatpush1.msra.mxu0 %v3061
  %3183 = vmatprep.subr.mxu0 0.0
  %3184 = vmatpush1.msra.mxu0 %v3062
  %3185 = vmatprep.subr.mxu0 0.0
  %3186 = vmatpush1.msra.mxu0 %v3063
  %3187 = vmatprep.subr.mxu0 0.0
  %3188 = vmatpush1.msra.mxu0 %v3064
  %3189 = vmatprep.mubr.f32.mxu0 %v3024
  %3190 = vmatmul.mubr.f32.gmra.mrb[0].mxu0 %v3023
  %v3191 = vpop.f32.mrb[0].mxu0
  %v3192 = vadd.f32 %v3115, %v3191
  %v3193 = vpop.f32.mrb[0].mxu0
  %3194 = vmatprep.mubr.f32.mxu0 %v3029
  %3195 = vmatmul.mubr.f32.gmra.mrb[0].mxu0 %v3028
  %v3196 = vpop.f32.mrb[0].mxu0
  %v3197 = vadd.f32 %v3116, %v3196
  %v3198 = vpop.f32.mrb[0].mxu0
  %3199 = vdwg.mxu0
  %3200 = vmatprep.subr.mxu0 0.0
  %3201 = vmatpush1.msra.mxu0 %v3065
  %3202 = vmatprep.subr.mxu0 0.0
  %3203 = vmatpush1.msra.mxu0 %v3066
  %3204 = vmatprep.subr.mxu0 0.0
  %3205 = vmatpush1.msra.mxu0 %v3067
  %3206 = vmatprep.subr.mxu0 0.0
  %3207 = vmatpush1.msra.mxu0 %v3068
  %3208 = vmatprep.subr.mxu0 0.0
  %3209 = vmatpush1.msra.mxu0 %v3069
  %3210 = vmatprep.subr.mxu0 0.0
  %3211 = vmatpush1.msra.mxu0 %v3070
  %3212 = vmatprep.subr.mxu0 0.0
  %3213 = vmatpush1.msra.mxu0 %v3071
  %3214 = vmatprep.subr.mxu0 0.0
  %3215 = vmatpush1.msra.mxu0 %v3072
  %3216 = vmatprep.subr.mxu0 0.0
  %3217 = vmatpush1.msra.mxu0 %v3073
  %3218 = vmatprep.subr.mxu0 0.0
  %3219 = vmatpush1.msra.mxu0 %v3074
  %3220 = vmatprep.subr.mxu0 0.0
  %3221 = vmatpush1.msra.mxu0 %v3075
  %3222 = vmatprep.subr.mxu0 0.0
  %3223 = vmatpush1.msra.mxu0 %v3076
  %3224 = vmatprep.subr.mxu0 0.0
  %3225 = vmatpush1.msra.mxu0 %v3077
  %3226 = vmatprep.subr.mxu0 0.0
  %3227 = vmatpush1.msra.mxu0 %v3078
  %3228 = vmatprep.subr.mxu0 0.0
  %3229 = vmatpush1.msra.mxu0 %v3079
  %3230 = vmatprep.subr.mxu0 0.0
  %3231 = vmatpush1.msra.mxu0 %v3080
  %3232 = vmatprep.subr.mxu0 0.0
  %3233 = vmatpush1.msra.mxu0 %v3081
  %3234 = vmatprep.subr.mxu0 0.0
  %3235 = vmatpush1.msra.mxu0 %v3082
  %3236 = vmatprep.subr.mxu0 0.0
  %3237 = vmatpush1.msra.mxu0 %v3083
  %3238 = vmatprep.subr.mxu0 0.0
  %3239 = vmatpush1.msra.mxu0 %v3084
  %3240 = vmatprep.subr.mxu0 0.0
  %3241 = vmatpush1.msra.mxu0 %v3085
  %3242 = vmatprep.subr.mxu0 0.0
  %3243 = vmatpush1.msra.mxu0 %v3086
  %3244 = vmatprep.subr.mxu0 0.0
  %3245 = vmatpush1.msra.mxu0 %v3087
  %3246 = vmatprep.subr.mxu0 0.0
  %3247 = vmatpush1.msra.mxu0 %v3088
  %3248 = vmatprep.subr.mxu0 0.0
  %3249 = vmatpush1.msra.mxu0 %v3089
  %3250 = vmatprep.subr.mxu0 0.0
  %3251 = vmatpush1.msra.mxu0 %v3090
  %3252 = vmatprep.subr.mxu0 0.0
  %3253 = vmatpush1.msra.mxu0 %v3091
  %3254 = vmatprep.subr.mxu0 0.0
  %3255 = vmatpush1.msra.mxu0 %v3092
  %3256 = vmatprep.subr.mxu0 0.0
  %3257 = vmatpush1.msra.mxu0 %v3093
  %3258 = vmatprep.subr.mxu0 0.0
  %3259 = vmatpush1.msra.mxu0 %v3094
  %3260 = vmatprep.subr.mxu0 0.0
  %3261 = vmatpush1.msra.mxu0 %v3095
  %3262 = vmatprep.subr.mxu0 0.0
  %3263 = vmatpush1.msra.mxu0 %v3096
  %3264 = vmatprep.mubr.f32.mxu0 %v3026
  %3265 = vmatmul.mubr.f32.gmra.mrb[0].mxu0 %v3025
  %v3266 = vpop.f32.mrb[0].mxu0
  %v3267 = vadd.f32 %v3192, %v3266
  %v3268 = vpop.f32.mrb[0].mxu0
  %3269 = vmatprep.mubr.f32.mxu0 %v3031
  %3270 = vmatmul.mubr.f32.gmra.mrb[0].mxu0 %v3030
  %v3271 = vpop.f32.mrb[0].mxu0
  %v3272 = vadd.f32 %v3197, %v3271
  %v3273 = vpop.f32.mrb[0].mxu0
  %3274 = vdwg.mxu0
  %3275 = vmatprep.subr.mxu0 0.0
  %3276 = vmatpush1.msra.mxu0 %v3097
  %3277 = vmatprep.subr.mxu0 0.0
  %3278 = vmatpush1.msra.mxu0 %v3098
  %3279 = vmatprep.subr.mxu0 0.0
  %3280 = vmatpush1.msra.mxu0 %v3099
  %3281 = vmatprep.subr.mxu0 0.0
  %3282 = vmatpush1.msra.mxu0 %v3100
  %3283 = vmatprep.subr.mxu0 0.0
  %3284 = vmatpush1.msra.mxu0 %v3101
  %3285 = vmatprep.subr.mxu0 0.0
  %3286 = vmatpush1.msra.mxu0 %v3102
  %3287 = vmatprep.subr.mxu0 0.0
  %3288 = vmatpush1.msra.mxu0 %v3103
  %3289 = vmatprep.subr.mxu0 0.0
  %3290 = vmatpush1.msra.mxu0 %v3104
  %3291 = vmatprep.subr.mxu0 0.0
  %3292 = vmatpush1.msra.mxu0 0.0
  %3293 = vmatprep.subr.mxu0 0.0
  %3294 = vmatpush1.msra.mxu0 0.0
  %3295 = vmatprep.subr.mxu0 0.0
  %3296 = vmatpush1.msra.mxu0 0.0
  %3297 = vmatprep.subr.mxu0 0.0
  %3298 = vmatpush1.msra.mxu0 0.0
  %3299 = vmatprep.subr.mxu0 0.0
  %3300 = vmatpush1.msra.mxu0 0.0
  %3301 = vmatprep.subr.mxu0 0.0
  %3302 = vmatpush1.msra.mxu0 0.0
  %3303 = vmatprep.subr.mxu0 0.0
  %3304 = vmatpush1.msra.mxu0 0.0
  %3305 = vmatprep.subr.mxu0 0.0
  %3306 = vmatpush1.msra.mxu0 0.0
  %3307 = vmatprep.subr.mxu0 0.0
  %3308 = vmatpush1.msra.mxu0 0.0
  %3309 = vmatprep.subr.mxu0 0.0
  %3310 = vmatpush1.msra.mxu0 0.0
  %3311 = vmatprep.subr.mxu0 0.0
  %3312 = vmatpush1.msra.mxu0 0.0
  %3313 = vmatprep.subr.mxu0 0.0
  %3314 = vmatpush1.msra.mxu0 0.0
  %3315 = vmatprep.subr.mxu0 0.0
  %3316 = vmatpush1.msra.mxu0 0.0
  %3317 = vmatprep.subr.mxu0 0.0
  %3318 = vmatpush1.msra.mxu0 0.0
  %3319 = vmatprep.subr.mxu0 0.0
  %3320 = vmatpush1.msra.mxu0 0.0
  %3321 = vmatprep.subr.mxu0 0.0
  %3322 = vmatpush1.msra.mxu0 0.0
  %3323 = vmatprep.subr.mxu0 0.0
  %3324 = vmatpush1.msra.mxu0 0.0
  %3325 = vmatprep.subr.mxu0 0.0
  %3326 = vmatpush1.msra.mxu0 0.0
  %3327 = vmatprep.subr.mxu0 0.0
  %3328 = vmatpush1.msra.mxu0 0.0
  %3329 = vmatprep.subr.mxu0 0.0
  %3330 = vmatpush1.msra.mxu0 0.0
  %3331 = vmatprep.subr.mxu0 0.0
  %3332 = vmatpush1.msra.mxu0 0.0
  %3333 = vmatprep.subr.mxu0 0.0
  %3334 = vmatpush1.msra.mxu0 0.0
  %3335 = vmatprep.subr.mxu0 0.0
  %3336 = vmatpush1.msra.mxu0 0.0
  %3337 = vmatprep.subr.mxu0 0.0
  %3338 = vmatpush1.msra.mxu0 0.0
  %3339 = vmatprep.mubr.f32.mxu0 0.0
  %3340 = vmatmul.mubr.f32.gmra.mrb[0].mxu0 %v3120
  %v3341 = vpop.f32.mrb[0].mxu0
  %v3342 = vadd.f32 %v3267, %v3341
  %v3343 = vpop.f32.mrb[0].mxu0
  %3344 = vmatprep.mubr.f32.mxu0 0.0
  %3345 = vmatmul.mubr.f32.gmra.mrb[0].mxu0 %v3123
  %v3346 = vpop.f32.mrb[0].mxu0
  %v3347 = vadd.f32 %v3272, %v3346
  %v3348 = vpop.f32.mrb[0].mxu0
  %3349 = vdwg.mxu0
  %v3350 = vmax.f32 %v3342, 0.0
  %v3351 = vmax.f32 %v3347, 0.0
  %3354 = vrot.lane.b32.xlu0 %v3350, 72
  %v3355 = vpop.permute.xlu0 %3354
  %3356 = vrot.lane.b32.xlu0 %v3351, 72
  %v3357 = vpop.permute.xlu0 %3356
  %3360 = vrot.lane.b32.xlu0 %v3350, 16
  %v3361 = vpop.permute.xlu0 %3360
  %3362 = vrot.lane.b32.xlu0 %v3351, 16
  %v3363 = vpop.permute.xlu0 %3362
  %3366 = vrot.lane.b32.xlu0 %v3350, 88
  %v3367 = vpop.permute.xlu0 %3366
  %3368 = vrot.lane.b32.xlu0 %v3351, 88
  %v3369 = vpop.permute.xlu0 %3368
  %3372 = vrot.lane.b32.xlu0 %v3350, 32
  %v3373 = vpop.permute.xlu0 %3372
  %3374 = vrot.lane.b32.xlu0 %v3351, 32
  %v3375 = vpop.permute.xlu0 %3374
  %3378 = vrot.lane.b32.xlu0 %v3350, 104
  %v3379 = vpop.permute.xlu0 %3378
  %3380 = vrot.lane.b32.xlu0 %v3351, 104
  %v3381 = vpop.permute.xlu0 %3380
  %3384 = vrot.lane.b32.xlu0 %v3350, 48
  %v3385 = vpop.permute.xlu0 %3384
  %3386 = vrot.lane.b32.xlu0 %v3351, 48
  %v3387 = vpop.permute.xlu0 %3386
  %3390 = vrot.lane.b32.xlu0 %v3350, 120
  %v3391 = vpop.permute.xlu0 %3390
  %3392 = vrot.lane.b32.xlu0 %v3351, 120
  %v3393 = vpop.permute.xlu0 %3392
  %v3396 = vsel %vm79, %v3350, %v3355
  %v3397 = vsel %vm79, %v3351, %v3357
  %v3398 = vsel %vm88, %v3355, %v3361
  %v3399 = vsel %vm88, %v3357, %v3363
  %v3400 = vsel %vm273, %v3398, %v3367
  %v3401 = vsel %vm273, %v3399, %v3369
  %v3402 = vsel %vm276, %v3367, %v3373
  %v3403 = vsel %vm276, %v3369, %v3375
  %v3404 = vsel %vm279, %v3402, %v3379
  %v3405 = vsel %vm279, %v3403, %v3381
  %v3406 = vsel %vm76, %v3379, %v3385
  %v3407 = vsel %vm76, %v3381, %v3387
  %v3408 = vsel %vm85, %v3406, %v3391
  %v3409 = vsel %vm85, %v3407, %v3393
  %v3410 = vmul.f32 %v3396, %v321
  %v3411 = vmul.f32 %v3400, %v322
  %v3412 = vmul.f32 %v3404, %v323
  %v3413 = vmul.f32 %v3408, %v324
  %v3414 = vmul.f32 %v3391, %v325
  %v3415 = vmul.f32 %v3397, %v326
  %v3416 = vmul.f32 %v3401, %v327
  %v3417 = vmul.f32 %v3405, %v328
  %v3418 = vmul.f32 %v3409, %v329
  %v3419 = vmul.f32 %v3393, %v330
  %v3420 = vld [vmem:[%s1 + $0x540] sm:$0xff]
  %v3421 = vld [vmem:[%s1 + $0x548] sm:$0xff]
  %v3422 = vld [vmem:[%s1 + $0x550] sm:$0xff]
  %v3423 = vld [vmem:[%s1 + $0x558] sm:$0xff]
  %v3424 = vld [vmem:[%s1 + $0x560] sm:$0xff]
  %v3425 = vld [vmem:[%s1 + $0x568] sm:$0xff]
  %v3426 = vld [vmem:[%s1 + $0x570] sm:$0xff]
  %v3427 = vld [vmem:[%s1 + $0x578] sm:$0xff]
  %v3428 = vld [vmem:[%s1 + $0x580] sm:$0xff]
  %v3429 = vld [vmem:[%s1 + $0x588] sm:$0xff]
  %v3430 = vld [vmem:[%s1 + $0x590] sm:$0xff]
  %v3431 = vld [vmem:[%s1 + $0x598] sm:$0xff]
  %v3432 = vld [vmem:[%s1 + $0x5a0] sm:$0xff]
  %v3433 = vld [vmem:[%s1 + $0x5a8] sm:$0xff]
  %v3434 = vld [vmem:[%s1 + $0x5b0] sm:$0xff]
  %v3435 = vld [vmem:[%s1 + $0x5b8] sm:$0xff]
  %v3436 = vld [vmem:[%s1 + $0x5c0] sm:$0xff]
  %v3437 = vld [vmem:[%s1 + $0x5c8] sm:$0xff]
  %v3438 = vld [vmem:[%s1 + $0x5d0] sm:$0xff]
  %v3439 = vld [vmem:[%s1 + $0x5d8] sm:$0xff]
  %v3440 = vld [vmem:[%s1 + $0x5e0] sm:$0xff]
  %v3441 = vld [vmem:[%s1 + $0x5e8] sm:$0xff]
  %v3442 = vld [vmem:[%s1 + $0x5f0] sm:$0xff]
  %v3443 = vld [vmem:[%s1 + $0x5f8] sm:$0xff]
  %v3444 = vld [vmem:[%s1 + $0x600] sm:$0xff]
  %v3445 = vld [vmem:[%s1 + $0x608] sm:$0xff]
  %v3446 = vld [vmem:[%s1 + $0x610] sm:$0xff]
  %v3447 = vld [vmem:[%s1 + $0x618] sm:$0xff]
  %v3448 = vld [vmem:[%s1 + $0x620] sm:$0xff]
  %v3449 = vld [vmem:[%s1 + $0x628] sm:$0xff]
  %v3450 = vld [vmem:[%s1 + $0x630] sm:$0xff]
  %v3451 = vld [vmem:[%s1 + $0x638] sm:$0xff]
  %v3452 = vld [vmem:[%s1 + $0x640] sm:$0xff]
  %v3453 = vld [vmem:[%s1 + $0x648] sm:$0xff]
  %v3454 = vld [vmem:[%s1 + $0x650] sm:$0xff]
  %v3455 = vld [vmem:[%s1 + $0x658] sm:$0xff]
  %v3456 = vld [vmem:[%s1 + $0x660] sm:$0xff]
  %v3457 = vld [vmem:[%s1 + $0x668] sm:$0xff]
  %v3458 = vld [vmem:[%s1 + $0x670] sm:$0xff]
  %v3459 = vld [vmem:[%s1 + $0x678] sm:$0xff]
  %v3460 = vld [vmem:[%s1 + $0x680] sm:$0xff]
  %v3461 = vld [vmem:[%s1 + $0x688] sm:$0xff]
  %v3462 = vld [vmem:[%s1 + $0x690] sm:$0xff]
  %v3463 = vld [vmem:[%s1 + $0x698] sm:$0xff]
  %v3464 = vld [vmem:[%s1 + $0x6a0] sm:$0xff]
  %v3465 = vld [vmem:[%s1 + $0x6a8] sm:$0xff]
  %v3466 = vld [vmem:[%s1 + $0x6b0] sm:$0xff]
  %v3467 = vld [vmem:[%s1 + $0x6b8] sm:$0xff]
  %v3468 = vld [vmem:[%s1 + $0x6c0] sm:$0xff]
  %v3469 = vld [vmem:[%s1 + $0x6c8] sm:$0xff]
  %v3470 = vld [vmem:[%s1 + $0x6d0] sm:$0xff]
  %v3471 = vld [vmem:[%s1 + $0x6d8] sm:$0xff]
  %v3472 = vld [vmem:[%s1 + $0x6e0] sm:$0xff]
  %v3473 = vld [vmem:[%s1 + $0x6e8] sm:$0xff]
  %v3474 = vld [vmem:[%s1 + $0x6f0] sm:$0xff]
  %v3475 = vld [vmem:[%s1 + $0x6f8] sm:$0xff]
  %v3476 = vld [vmem:[%s1 + $0x700] sm:$0xff]
  %v3477 = vld [vmem:[%s1 + $0x708] sm:$0xff]
  %v3478 = vld [vmem:[%s1 + $0x710] sm:$0xff]
  %v3479 = vld [vmem:[%s1 + $0x718] sm:$0xff]
  %v3480 = vld [vmem:[%s1 + $0x720] sm:$0xff]
  %v3481 = vld [vmem:[%s1 + $0x728] sm:$0xff]
  %v3482 = vld [vmem:[%s1 + $0x730] sm:$0xff]
  %v3483 = vld [vmem:[%s1 + $0x738] sm:$0xff]
  %v3484 = vld [vmem:[%s1 + $0x740] sm:$0xff]
  %v3485 = vld [vmem:[%s1 + $0x748] sm:$0xff]
  %v3486 = vld [vmem:[%s1 + $0x750] sm:$0xff]
  %v3487 = vld [vmem:[%s1 + $0x758] sm:$0xff]
  %v3488 = vld [vmem:[%s1 + $0x760] sm:$0xff]
  %v3489 = vld [vmem:[%s1 + $0x768] sm:$0xff]
  %v3490 = vld [vmem:[%s1 + $0x770] sm:$0xff]
  %v3491 = vld [vmem:[%s1 + $0x778] sm:$0xff]
  %v3493 = vsel %vm141, %v3414, 0
  %v3496 = vsel %vm141, %v3419, 0
  %3498 = vmatprep.subr.mxu0 0.0
  %3499 = vmatpush1.msra.mxu0 %v3420
  %3500 = vmatprep.subr.mxu0 0.0
  %3501 = vmatpush1.msra.mxu0 %v3421
  %3502 = vmatprep.subr.mxu0 0.0
  %3503 = vmatpush1.msra.mxu0 %v3422
  %3504 = vmatprep.subr.mxu0 0.0
  %3505 = vmatpush1.msra.mxu0 %v3423
  %3506 = vmatprep.subr.mxu0 0.0
  %3507 = vmatpush1.msra.mxu0 %v3424
  %3508 = vmatprep.subr.mxu0 0.0
  %3509 = vmatpush1.msra.mxu0 %v3425
  %3510 = vmatprep.subr.mxu0 0.0
  %3511 = vmatpush1.msra.mxu0 %v3426
  %3512 = vmatprep.subr.mxu0 0.0
  %3513 = vmatpush1.msra.mxu0 %v3427
  %3514 = vmatprep.subr.mxu0 0.0
  %3515 = vmatpush1.msra.mxu0 %v3428
  %3516 = vmatprep.subr.mxu0 0.0
  %3517 = vmatpush1.msra.mxu0 %v3429
  %3518 = vmatprep.subr.mxu0 0.0
  %3519 = vmatpush1.msra.mxu0 %v3430
  %3520 = vmatprep.subr.mxu0 0.0
  %3521 = vmatpush1.msra.mxu0 %v3431
  %3522 = vmatprep.subr.mxu0 0.0
  %3523 = vmatpush1.msra.mxu0 %v3432
  %3524 = vmatprep.subr.mxu0 0.0
  %3525 = vmatpush1.msra.mxu0 %v3433
  %3526 = vmatprep.subr.mxu0 0.0
  %3527 = vmatpush1.msra.mxu0 %v3434
  %3528 = vmatprep.subr.mxu0 0.0
  %3529 = vmatpush1.msra.mxu0 %v3435
  %3530 = vmatprep.subr.mxu0 0.0
  %3531 = vmatpush1.msra.mxu0 %v3436
  %3532 = vmatprep.subr.mxu0 0.0
  %3533 = vmatpush1.msra.mxu0 %v3437
  %3534 = vmatprep.subr.mxu0 0.0
  %3535 = vmatpush1.msra.mxu0 %v3438
  %3536 = vmatprep.subr.mxu0 0.0
  %3537 = vmatpush1.msra.mxu0 %v3439
  %3538 = vmatprep.subr.mxu0 0.0
  %3539 = vmatpush1.msra.mxu0 %v3440
  %3540 = vmatprep.subr.mxu0 0.0
  %3541 = vmatpush1.msra.mxu0 %v3441
  %3542 = vmatprep.subr.mxu0 0.0
  %3543 = vmatpush1.msra.mxu0 %v3442
  %3544 = vmatprep.subr.mxu0 0.0
  %3545 = vmatpush1.msra.mxu0 %v3443
  %3546 = vmatprep.subr.mxu0 0.0
  %3547 = vmatpush1.msra.mxu0 %v3444
  %3548 = vmatprep.subr.mxu0 0.0
  %3549 = vmatpush1.msra.mxu0 %v3445
  %3550 = vmatprep.subr.mxu0 0.0
  %3551 = vmatpush1.msra.mxu0 %v3446
  %3552 = vmatprep.subr.mxu0 0.0
  %3553 = vmatpush1.msra.mxu0 %v3447
  %3554 = vmatprep.subr.mxu0 0.0
  %3555 = vmatpush1.msra.mxu0 %v3448
  %3556 = vmatprep.subr.mxu0 0.0
  %3557 = vmatpush1.msra.mxu0 %v3449
  %3558 = vmatprep.subr.mxu0 0.0
  %3559 = vmatpush1.msra.mxu0 %v3450
  %3560 = vmatprep.subr.mxu0 0.0
  %3561 = vmatpush1.msra.mxu0 %v3451
  %3562 = vmatprep.mubr.f32.mxu0 %v3411
  %3563 = vmatmul.mubr.f32.gmra.mrb[0].mxu0 %v3410
  %v3564 = vpop.f32.mrb[0].mxu0
  %v3565 = vadd.f32 0.0, %v3564
  %v3566 = vpop.f32.mrb[0].mxu0
  %3567 = vmatprep.mubr.f32.mxu0 %v3416
  %3568 = vmatmul.mubr.f32.gmra.mrb[0].mxu0 %v3415
  %v3569 = vpop.f32.mrb[0].mxu0
  %v3570 = vadd.f32 0.0, %v3569
  %v3571 = vpop.f32.mrb[0].mxu0
  %3572 = vdwg.mxu0
  %3573 = vmatprep.subr.mxu0 0.0
  %3574 = vmatpush1.msra.mxu0 %v3452
  %3575 = vmatprep.subr.mxu0 0.0
  %3576 = vmatpush1.msra.mxu0 %v3453
  %3577 = vmatprep.subr.mxu0 0.0
  %3578 = vmatpush1.msra.mxu0 %v3454
  %3579 = vmatprep.subr.mxu0 0.0
  %3580 = vmatpush1.msra.mxu0 %v3455
  %3581 = vmatprep.subr.mxu0 0.0
  %3582 = vmatpush1.msra.mxu0 %v3456
  %3583 = vmatprep.subr.mxu0 0.0
  %3584 = vmatpush1.msra.mxu0 %v3457
  %3585 = vmatprep.subr.mxu0 0.0
  %3586 = vmatpush1.msra.mxu0 %v3458
  %3587 = vmatprep.subr.mxu0 0.0
  %3588 = vmatpush1.msra.mxu0 %v3459
  %3589 = vmatprep.subr.mxu0 0.0
  %3590 = vmatpush1.msra.mxu0 %v3460
  %3591 = vmatprep.subr.mxu0 0.0
  %3592 = vmatpush1.msra.mxu0 %v3461
  %3593 = vmatprep.subr.mxu0 0.0
  %3594 = vmatpush1.msra.mxu0 %v3462
  %3595 = vmatprep.subr.mxu0 0.0
  %3596 = vmatpush1.msra.mxu0 %v3463
  %3597 = vmatprep.subr.mxu0 0.0
  %3598 = vmatpush1.msra.mxu0 %v3464
  %3599 = vmatprep.subr.mxu0 0.0
  %3600 = vmatpush1.msra.mxu0 %v3465
  %3601 = vmatprep.subr.mxu0 0.0
  %3602 = vmatpush1.msra.mxu0 %v3466
  %3603 = vmatprep.subr.mxu0 0.0
  %3604 = vmatpush1.msra.mxu0 %v3467
  %3605 = vmatprep.subr.mxu0 0.0
  %3606 = vmatpush1.msra.mxu0 %v3468
  %3607 = vmatprep.subr.mxu0 0.0
  %3608 = vmatpush1.msra.mxu0 %v3469
  %3609 = vmatprep.subr.mxu0 0.0
  %3610 = vmatpush1.msra.mxu0 %v3470
  %3611 = vmatprep.subr.mxu0 0.0
  %3612 = vmatpush1.msra.mxu0 %v3471
  %3613 = vmatprep.subr.mxu0 0.0
  %3614 = vmatpush1.msra.mxu0 %v3472
  %3615 = vmatprep.subr.mxu0 0.0
  %3616 = vmatpush1.msra.mxu0 %v3473
  %3617 = vmatprep.subr.mxu0 0.0
  %3618 = vmatpush1.msra.mxu0 %v3474
  %3619 = vmatprep.subr.mxu0 0.0
  %3620 = vmatpush1.msra.mxu0 %v3475
  %3621 = vmatprep.subr.mxu0 0.0
  %3622 = vmatpush1.msra.mxu0 %v3476
  %3623 = vmatprep.subr.mxu0 0.0
  %3624 = vmatpush1.msra.mxu0 %v3477
  %3625 = vmatprep.subr.mxu0 0.0
  %3626 = vmatpush1.msra.mxu0 %v3478
  %3627 = vmatprep.subr.mxu0 0.0
  %3628 = vmatpush1.msra.mxu0 %v3479
  %3629 = vmatprep.subr.mxu0 0.0
  %3630 = vmatpush1.msra.mxu0 %v3480
  %3631 = vmatprep.subr.mxu0 0.0
  %3632 = vmatpush1.msra.mxu0 %v3481
  %3633 = vmatprep.subr.mxu0 0.0
  %3634 = vmatpush1.msra.mxu0 %v3482
  %3635 = vmatprep.subr.mxu0 0.0
  %3636 = vmatpush1.msra.mxu0 %v3483
  %3637 = vmatprep.mubr.f32.mxu0 %v3413
  %3638 = vmatmul.mubr.f32.gmra.mrb[0].mxu0 %v3412
  %v3639 = vpop.f32.mrb[0].mxu0
  %v3640 = vadd.f32 %v3565, %v3639
  %v3641 = vpop.f32.mrb[0].mxu0
  %3642 = vmatprep.mubr.f32.mxu0 %v3418
  %3643 = vmatmul.mubr.f32.gmra.mrb[0].mxu0 %v3417
  %v3644 = vpop.f32.mrb[0].mxu0
  %v3645 = vadd.f32 %v3570, %v3644
  %v3646 = vpop.f32.mrb[0].mxu0
  %3647 = vdwg.mxu0
  %3648 = vmatprep.subr.mxu0 0.0
  %3649 = vmatpush1.msra.mxu0 %v3484
  %3650 = vmatprep.subr.mxu0 0.0
  %3651 = vmatpush1.msra.mxu0 %v3485
  %3652 = vmatprep.subr.mxu0 0.0
  %3653 = vmatpush1.msra.mxu0 %v3486
  %3654 = vmatprep.subr.mxu0 0.0
  %3655 = vmatpush1.msra.mxu0 %v3487
  %3656 = vmatprep.subr.mxu0 0.0
  %3657 = vmatpush1.msra.mxu0 %v3488
  %3658 = vmatprep.subr.mxu0 0.0
  %3659 = vmatpush1.msra.mxu0 %v3489
  %3660 = vmatprep.subr.mxu0 0.0
  %3661 = vmatpush1.msra.mxu0 %v3490
  %3662 = vmatprep.subr.mxu0 0.0
  %3663 = vmatpush1.msra.mxu0 %v3491
  %3664 = vmatprep.subr.mxu0 0.0
  %3665 = vmatpush1.msra.mxu0 0.0
  %3666 = vmatprep.subr.mxu0 0.0
  %3667 = vmatpush1.msra.mxu0 0.0
  %3668 = vmatprep.subr.mxu0 0.0
  %3669 = vmatpush1.msra.mxu0 0.0
  %3670 = vmatprep.subr.mxu0 0.0
  %3671 = vmatpush1.msra.mxu0 0.0
  %3672 = vmatprep.subr.mxu0 0.0
  %3673 = vmatpush1.msra.mxu0 0.0
  %3674 = vmatprep.subr.mxu0 0.0
  %3675 = vmatpush1.msra.mxu0 0.0
  %3676 = vmatprep.subr.mxu0 0.0
  %3677 = vmatpush1.msra.mxu0 0.0
  %3678 = vmatprep.subr.mxu0 0.0
  %3679 = vmatpush1.msra.mxu0 0.0
  %3680 = vmatprep.subr.mxu0 0.0
  %3681 = vmatpush1.msra.mxu0 0.0
  %3682 = vmatprep.subr.mxu0 0.0
  %3683 = vmatpush1.msra.mxu0 0.0
  %3684 = vmatprep.subr.mxu0 0.0
  %3685 = vmatpush1.msra.mxu0 0.0
  %3686 = vmatprep.subr.mxu0 0.0
  %3687 = vmatpush1.msra.mxu0 0.0
  %3688 = vmatprep.subr.mxu0 0.0
  %3689 = vmatpush1.msra.mxu0 0.0
  %3690 = vmatprep.subr.mxu0 0.0
  %3691 = vmatpush1.msra.mxu0 0.0
  %3692 = vmatprep.subr.mxu0 0.0
  %3693 = vmatpush1.msra.mxu0 0.0
  %3694 = vmatprep.subr.mxu0 0.0
  %3695 = vmatpush1.msra.mxu0 0.0
  %3696 = vmatprep.subr.mxu0 0.0
  %3697 = vmatpush1.msra.mxu0 0.0
  %3698 = vmatprep.subr.mxu0 0.0
  %3699 = vmatpush1.msra.mxu0 0.0
  %3700 = vmatprep.subr.mxu0 0.0
  %3701 = vmatpush1.msra.mxu0 0.0
  %3702 = vmatprep.subr.mxu0 0.0
  %3703 = vmatpush1.msra.mxu0 0.0
  %3704 = vmatprep.subr.mxu0 0.0
  %3705 = vmatpush1.msra.mxu0 0.0
  %3706 = vmatprep.subr.mxu0 0.0
  %3707 = vmatpush1.msra.mxu0 0.0
  %3708 = vmatprep.subr.mxu0 0.0
  %3709 = vmatpush1.msra.mxu0 0.0
  %3710 = vmatprep.subr.mxu0 0.0
  %3711 = vmatpush1.msra.mxu0 0.0
  %3712 = vmatprep.mubr.f32.mxu0 0.0
  %3713 = vmatmul.mubr.f32.gmra.mrb[0].mxu0 %v3493
  %v3714 = vpop.f32.mrb[0].mxu0
  %v3715 = vadd.f32 %v3640, %v3714
  %v3716 = vpop.f32.mrb[0].mxu0
  %3717 = vmatprep.mubr.f32.mxu0 0.0
  %3718 = vmatmul.mubr.f32.gmra.mrb[0].mxu0 %v3496
  %v3719 = vpop.f32.mrb[0].mxu0
  %v3720 = vadd.f32 %v3645, %v3719
  %v3721 = vpop.f32.mrb[0].mxu0
  %3722 = vdwg.mxu0
  %3723 = vrot.lane.b32.xlu0 %v13, 112
  %v3724 = vpop.permute.xlu0 %3723
  %3725 = vrot.lane.b32.xlu0 %v22, 112
  %v3726 = vpop.permute.xlu0 %3725
  %v3729 = vadd.f32 %v3715, %v3724
  %v3730 = vadd.f32 %v3720, %v3726
  %vm3731 = vcmp.ne.f32.partialorder %v3729, %v3729
  %vm3732 = vcmp.ne.f32.partialorder %v3730, %v3730
  %v3733 = vsel %vm3731, 0.0, %v3729
  %v3734 = vsel %vm3732, 0.0, %v3730
  %3735 = vrot.lane.b32.xlu0 %v19, 115
  %v3736 = vpop.permute.xlu0 %3735
  %3737 = vrot.lane.b32.xlu0 %v28, 115
  %v3738 = vpop.permute.xlu0 %3737
  %v3741 = vmul.f32 %v13, %v3736
  %v3742 = vmul.f32 %v22, %v3738
  %3745 = vrot.lane.b32.xlu0 %v3741, 100
  %v3746 = vpop.permute.xlu0 %3745
  %3747 = vrot.lane.b32.xlu0 %v3742, 100
  %v3748 = vpop.permute.xlu0 %3747
  %v3751 = vadd.f32 %v3733, %v3746
  %v3752 = vadd.f32 %v3734, %v3748
  %v3753 = vmul.f32 %v19, %v19
  %v3754 = vmul.f32 %v28, %v28
  %3757 = vrot.lane.b32.xlu0 %v3753, 87
  %v3758 = vpop.permute.xlu0 %3757
  %3759 = vrot.lane.b32.xlu0 %v3754, 87
  %v3760 = vpop.permute.xlu0 %3759
  %vm3763 = vcmask 97280
  %v3764 = vsel %vm3763, %v3758, 0.0
  %3765 = vadd.xlane.f32.xlu0 %v3764
  %v3766 = vpop.xlane.xlu0 %3765
  %v3767 = vsel %vm3763, %v3760, 0.0
  %3768 = vadd.xlane.f32.xlu0 %v3767
  %v3769 = vpop.xlane.xlu0 %3768
  %v3770 = vadd.f32 %v3766, 22.054525
  %v3771 = vadd.f32 %v3769, 22.054525
  %v3772 = vmul.f32 %v3770, -0.5
  %v3773 = vmul.f32 %v3771, -0.5
  %v3774 = vmul.f32 %v13, 0.5
  %v3775 = vmul.f32 %v22, 0.5
  %v3776 = vsub.f32 %v3772, %v3774
  %v3777 = vsub.f32 %v3773, %v3775
  %v3778 = vadd.f32 %v3774, 17.027262
  %v3779 = vadd.f32 %v3775, 17.027262
  %v3780 = vtanh.pop %v3751
  %v3781 = vtanh.pop %v3752
  %v3782 = vmul.f32 %v3780, 1.442695
  %v3783 = vpow.pop %v3782
  %v3784 = vmul.f32 %v3781, 1.442695
  %v3785 = vpow.pop %v3784
  %vm3786 = vcmask 31744
  %v3787 = vsel %vm3786, %v3783, 0.0
  %3788 = vadd.xlane.f32.xlu0 %v3787
  %v3789 = vpop.xlane.xlu0 %3788
  %v3790 = vsel %vm3786, %v3785, 0.0
  %3791 = vadd.xlane.f32.xlu0 %v3790
  %v3792 = vpop.xlane.xlu0 %3791
  %v3793 = vrcp.pop %v3789
  %v3794 = vrcp.pop %v3792
  %v3795 = vmul.f32 %v3783, %v3793
  %v3796 = vmul.f32 %v3785, %v3794
  %v3797 = vxor.u32 %v3751, 2147483648
  %v3798 = vxor.u32 %v3752, 2147483648
  %v3799 = vmul.f32 %v3797, 1.442695
  %v3800 = vpow.pop %v3799
  %v3801 = vmul.f32 %v3798, 1.442695
  %v3802 = vpow.pop %v3801
  %v3803 = vadd.f32 %v3800, 1.0
  %v3804 = vadd.f32 %v3802, 1.0
  %v3805 = vrcp.pop %v3803
  %v3806 = vmul.f32 1.0, %v3805
  %v3807 = vrcp.pop %v3804
  %v3808 = vmul.f32 1.0, %v3807
  %3811 = vrot.lane.b32.xlu0 %v3776, 100
  %v3812 = vpop.permute.xlu0 %3811
  %3813 = vrot.lane.b32.xlu0 %v3777, 100
  %v3814 = vpop.permute.xlu0 %3813
  %3819 = vrot.lane.b32.xlu0 %v3778, 101
  %v3820 = vpop.permute.xlu0 %3819
  %3821 = vrot.lane.b32.xlu0 %v3779, 101
  %v3822 = vpop.permute.xlu0 %3821
  %v3825 = vsel %vm3786, %v3795, %v3806
  %v3826 = vsel %vm3786, %v3796, %v3808
  %v3827 = vsel %vm1001, %v3825, %v3780
  %v3828 = vsel %vm1001, %v3826, %v3781
  %v3829 = vsel %vm3763, %v3827, %v3812
  %v3830 = vsel %vm3763, %v3828, %v3814
  %vm3831 = vcmask 105472
  %v3832 = vsel %vm3831, %v3829, %v3820
  %v3833 = vsel %vm3831, %v3830, %v3822
  %vm3834 = vcmask 113664
  %3835 = vst.msk [vmem:[%s2] sm:$0xff] %vm3834, %v3832
  %3836 = vst.msk [vmem:[%s2 + $0x8] sm:$0xff] %vm3834, %v3833
  // Predicated region
  $region10: #{actor_forward.1} parent=0 // pred_check
    _
  $region11: #{actor_forward.1} parent=0 // pred_check_branch
    %3838 = sbr.rel (0) target = $region13
  $region12: #{actor_forward.1} parent=0 // pred_region
    _
  $region13: #{actor_forward.1} parent=0 // pred_fallthru
    _
  // Predicated region
  $region14: #{actor_forward.1} parent=0 // pred_check
    _
  $region15: #{actor_forward.1} parent=0 // pred_check_branch
    %3840 = sbr.rel (0) target = $region17
  $region16: #{actor_forward.1} parent=0 // pred_region
    _
  $region17: #{actor_forward.1} parent=0 // pred_fallthru
    _

</llo_original>
